<compile_context>
chip_gen: v5e
topology: v5e:2x2
jax: 0.10.0
libtpu: 0.0.40
codegen_flags: <defaults>
</compile_context>

<pallas_src>
import functools

import jax
import jax.numpy as jnp
import numpy as np
from jax import lax
from jax.experimental import pallas as pl
from jax.experimental.pallas import tpu as pltpu

NEG_SLOPE = 0.01      # nn.LeakyReLU() default negative_slope
_MASK_NEG = -1e30     # masked-score fill; exp underflows to exactly 0


def gat_kernel(h_ref, adj_ref, a_ref, out_ref, fh_scr, alpha_scr, *, block_rows):
    N = adj_ref.shape[0]
    Hp = h_ref.shape[1]                     # lane-padded hidden dim (mult. of 128)
    Tb = block_rows
    num_blocks = N // Tb

    h = h_ref[...]                          # [N, Hp]  (already = W(feats)+bW)

    # ---- per-head attention params: own block, no dynamic gather -------------
    ap = a_ref[0]                           # [3, Hp]: rows = a_src | a_dst | bias
    a_src = ap[0:1, :]
    a_dst = ap[1:2, :]
    ba = ap[2:3, 0:1]                       # [1, 1]

    s_src = jnp.sum(h * a_src, axis=1, keepdims=True) + ba          # [N, 1]
    s_dst_row = jnp.sum(h * a_dst, axis=1, keepdims=True).T         # [1, N]

    # ---- dense masked scores + row softmax -----------------------------------
    mask = adj_ref[...] != 0
    e = s_src + s_dst_row                                            # [N, N]
    e = jnp.where(e >= 0.0, e, NEG_SLOPE * e)                        # LeakyReLU
    e_m = jnp.where(mask, e, _MASK_NEG)
    m = jnp.max(e_m, axis=1, keepdims=True)                          # [N, 1]
    p = jnp.exp(jnp.where(mask, e - m, _MASK_NEG))                   # masked -> 0
    denom = jnp.sum(p, axis=1, keepdims=True)
    denom = jnp.where(denom > 0.0, denom, 1.0)                       # isolated rows
    alpha_scr[...] = p * pl.reciprocal(denom, approx=True)           # EUP, not VALU

    # ---- blocked forward substitution over row blocks ------------------------
    fh_scr[...] = h                         # rows >= current block still hold h

    lrows = lax.broadcasted_iota(jnp.int32, (Tb, Tb), 0)
    lcols = lax.broadcasted_iota(jnp.int32, (Tb, Tb), 1)
    strict_lower_f = (lrows > lcols).astype(jnp.float32)             # [Tb, Tb]

    n_neumann = 0 if Tb <= 1 else int(np.ceil(np.log2(Tb)))

    def block_body(b, carry):
        r0 = pl.multiple_of(b * Tb, Tb)
        row_h = fh_scr[pl.ds(r0, Tb), :]    # original h rows of this block

        def col_body(c, acc):
            c0 = pl.multiple_of(c * Tb, Tb)
            a_blk = alpha_scr[pl.ds(r0, Tb), pl.ds(c0, Tb)]          # [Tb, Tb]
            # On the diagonal block keep only diag+upper columns; the
            # strictly-lower part is handled by the Neumann substitution below.
            is_diag = (c == b).astype(jnp.float32)
            a_blk = a_blk * (1.0 - is_diag * strict_lower_f)
            return acc + jnp.dot(a_blk.astype(jnp.bfloat16),
                                 fh_scr[pl.ds(c0, Tb), :].astype(jnp.bfloat16),
                                 preferred_element_type=jnp.float32)

        base = row_h + lax.fori_loop(0, num_blocks, col_body,
                                     jnp.zeros((Tb, Hp), jnp.float32))

        # x = base + L x with L strictly lower (nilpotent):
        #   x = (I+L)(I+L^2)(I+L^4)... base  -- log2(Tb) full-width MXU matmuls.
        L = (alpha_scr[pl.ds(r0, Tb), pl.ds(r0, Tb)]
             * strict_lower_f).astype(jnp.bfloat16)
        x = base
        for i in range(n_neumann):
            x = x + jnp.dot(L, x.astype(jnp.bfloat16),
                            preferred_element_type=jnp.float32)
            if i + 1 < n_neumann:
                L = jnp.dot(L, L,
                            preferred_element_type=jnp.float32).astype(jnp.bfloat16)

        fh_scr[pl.ds(r0, Tb), :] = x
        return carry

    lax.fori_loop(0, num_blocks, block_body, 0)

    # Lane-dense store: Hp is a multiple of 128 (unmasked vst).
    out_ref[0, :, :] = fh_scr[...]


def _vmem_limit_bytes(N, Hp):
    f32 = 4
    scratch = f32 * N * N + f32 * N * Hp                         # alpha + fh
    blocks = 2 * (f32 * N * Hp + N * N + f32 * 3 * Hp + f32 * N * Hp)
    temps = 8 * f32 * N * N                                      # softmax temps
    need = scratch + blocks + temps + (4 << 20)
    # Cap below v7x's 64 MiB physical VMEM (v5e/v6e have 128 MiB).
    return int(min(max(need, 16 << 20), 56 << 20))


def gat_forward(feats, adj, W_t, bW, A, bA, num_heads, mean=False, block_rows=None):
    """feats [N,F]; adj [N,N] (nonzero == directed edge src->dst); W_t [F,H]
    (= torch W.weight.T); bW [H]; A [heads, 2H] (= torch attn[k].weight row);
    bA [heads]."""
    N, F = feats.shape
    H = W_t.shape[1]
    assert A.shape == (num_heads, 2 * H) and bA.shape == (num_heads,)

    # Hoisted, head-independent: h = W(feats) + bW, computed once by XLA.
    h = jnp.dot(jnp.asarray(feats, jnp.float32),
                jnp.asarray(W_t, jnp.float32)) + jnp.asarray(bW, jnp.float32)[None, :]

    # Lane-pad the hidden dim (zeros stay zero through the aggregation).
    Hp = ((H + 127) // 128) * 128
    if Hp != H:
        h = jnp.pad(h, ((0, 0), (0, Hp - H)))

    if block_rows is None:
        block_rows = min(N, 256)            # MXU-native; 128 also good on v5e
    assert N % block_rows == 0, "TODO(synk): pad N to a multiple of block_rows"
    assert block_rows == N or block_rows % 128 == 0, \
        "block_rows must be lane-aligned (multiple of 128) unless it spans all rows"

    adj_i8 = (jnp.asarray(adj) != 0).astype(jnp.int8)       # 4x less DMA than f32

    A32 = jnp.asarray(A, jnp.float32)
    a_src = jnp.pad(A32[:, :H], ((0, 0), (0, Hp - H)))
    a_dst = jnp.pad(A32[:, H:], ((0, 0), (0, Hp - H)))
    b_row = jnp.zeros((num_heads, Hp), jnp.float32).at[:, 0].set(
        jnp.asarray(bA, jnp.float32))
    a_ext = jnp.stack([a_src, a_dst, b_row], axis=1)        # [heads, 3, Hp]

    out = pl.pallas_call(
        functools.partial(gat_kernel, block_rows=block_rows),
        out_shape=jax.ShapeDtypeStruct((num_heads, N, Hp), jnp.float32),
        grid=(num_heads,),
        in_specs=[
            pl.BlockSpec((N, Hp), lambda k: (0, 0)),            # h (constant block)
            pl.BlockSpec((N, N), lambda k: (0, 0)),             # adj (constant block)
            pl.BlockSpec((1, 3, Hp), lambda k: (k, 0, 0)),      # per-head attn params
        ],
        out_specs=pl.BlockSpec((1, N, Hp), lambda k: (k, 0, 0)),
        scratch_shapes=[
            pltpu.VMEM((N, Hp), jnp.float32),   # per-head feature state (fwd subst.)
            pltpu.VMEM((N, N), jnp.float32),    # per-head attention matrix (f32)
        ],
        compiler_params=pltpu.CompilerParams(
            dimension_semantics=("parallel",),              # heads -> TCs
            vmem_limit_bytes=_vmem_limit_bytes(N, Hp)),
    )(h, adj_i8, a_ext)

    out = out[:, :, :H]                     # drop lane padding
    if mean:                                # torch.mean(torch.stack(feat_heads), 0)
        return out.mean(axis=0)
    # torch.hstack(feat_heads): [N, num_heads*H] with head-major column blocks.
    return jnp.transpose(out, (1, 0, 2)).reshape(N, num_heads * H)


def gat_reference(feats, adj, W_t, bW, A, bA, num_heads):
    """Pure-numpy re-implementation of the PyTorch forward (edge-list form)."""
    feats = np.asarray(feats, np.float64)
    h = feats @ np.asarray(W_t, np.float64) + np.asarray(bW, np.float64)   # [N,H]
    indices = np.argwhere(np.asarray(adj) != 0)                            # [E,2]
    A = np.asarray(A, np.float64)
    bA = np.asarray(bA, np.float64)
    neighbours = np.concatenate([h[indices[:, 0]], h[indices[:, 1]]], axis=1)
    feat_heads = [h.copy() for _ in range(num_heads)]
    attns = []
    for k in range(num_heads):
        s = neighbours @ A[k] + bA[k]
        attns.append(np.where(s >= 0, s, NEG_SLOPE * s))
    for idx in np.unique(indices[:, 0]):
        el = np.nonzero(indices[:, 0] == idx)[0]
        for k in range(num_heads):
            sc = attns[k][el]
            ex = np.exp(sc - sc.max())
            wts = ex / ex.sum()
            dsts = indices[el, 1]
            feat_heads[k][idx] = feat_heads[k][idx] + \
                (wts[:, None] * feat_heads[k][dsts]).sum(axis=0)
    return np.concatenate(feat_heads, axis=1).astype(np.float32)


if __name__ == "__main__":
    N, F, H, HEADS = 256, 32, 16, 2
    key = jax.random.PRNGKey(0)
    k1, k2, k3, k4, k5, k6 = jax.random.split(key, 6)

    feats = jax.random.normal(k1, (N, F), jnp.float32)
    adj = (jax.random.uniform(k2, (N, N)) < 0.3).astype(jnp.float32)

    # Deterministic nn.Linear-style init (uniform in +/- 1/sqrt(fan_in)).
    bW_bound = 1.0 / np.sqrt(F)
    W_t = jax.random.uniform(k3, (F, H), jnp.float32, -bW_bound, bW_bound)
    bW = jax.random.uniform(k4, (H,), jnp.float32, -bW_bound, bW_bound)
    bA_bound = 1.0 / np.sqrt(2 * H)
    A = jax.random.uniform(k5, (HEADS, 2 * H), jnp.float32, -bA_bound, bA_bound)
    bA = jax.random.uniform(k6, (HEADS,), jnp.float32, -bA_bound, bA_bound)

    # block_rows=128: 2 row blocks -> exercises both the cross-block fori path
    # and the log2(Tb)=7-step Neumann substitution.
    out = gat_forward(feats, adj, W_t, bW, A, bA, HEADS, mean=False, block_rows=128)
    out = jax.block_until_ready(out)

    ref = gat_reference(np.asarray(feats), np.asarray(adj), np.asarray(W_t),
                        np.asarray(bW), np.asarray(A), np.asarray(bA), HEADS)
    # Tolerance vs the f64 reference: single-pass bf16 MXU operands (f32
    # accumulate) + approx EUP reciprocal, per perf guidance.
    np.testing.assert_allclose(np.asarray(out), ref, rtol=5e-2, atol=5e-2)
    print("KERNEL_OK")
</pallas_src>

<mosaic_0001>
module attributes {stable_mosaic.version = 11 : i64} {
  func.func @gat_kernel(%arg0: i32, %arg1: memref<256x128xf32, #tpu.memory_space<vmem>>, %arg2: memref<256x256xi8, #tpu.memory_space<vmem>>, %arg3: memref<1x3x128xf32, #tpu.memory_space<vmem>>, %arg4: memref<1x256x128xf32, #tpu.memory_space<vmem>>, %arg5: memref<256x128xf32, #tpu.memory_space<vmem>>, %arg6: memref<256x256xf32, #tpu.memory_space<vmem>>) attributes {dimension_semantics = [#tpu.dimension_semantics<parallel>], iteration_bounds = array<i64: 2>, scalar_prefetch = 0 : i64, scratch_operands = 2 : i64, tpu.core_type = #tpu.core_type<tc>, window_params = [{pipeline_mode = #tpu.pipeline_mode<synchronous>, transform_indices = @transform_0, window_bounds = array<i64: 256, 128>}, {pipeline_mode = #tpu.pipeline_mode<synchronous>, transform_indices = @transform_1, window_bounds = array<i64: 256, 256>}, {transform_indices = @transform_2, window_bounds = array<i64: 1, 3, 128>}, {transform_indices = @transform_3, window_bounds = array<i64: 1, 256, 128>}]} {
    %c0 = arith.constant 0 : index
    %c0_0 = arith.constant 0 : index
    %0 = vector.load %arg1[%c0, %c0_0] : memref<256x128xf32, #tpu.memory_space<vmem>>, vector<256x128xf32>
    %c0_1 = arith.constant 0 : index
    %c0_2 = arith.constant 0 : index
    %c0_3 = arith.constant 0 : index
    %1 = vector.load %arg3[%c0_1, %c0_2, %c0_3] : memref<1x3x128xf32, #tpu.memory_space<vmem>>, vector<1x3x128xf32>
    %2 = vector.shape_cast %1 : vector<1x3x128xf32> to vector<3x128xf32>
    %3 = vector.extract_strided_slice %2 {offsets = [0, 0], sizes = [1, 128], strides = [1, 1]} : vector<3x128xf32> to vector<1x128xf32>
    %4 = vector.extract_strided_slice %2 {offsets = [1, 0], sizes = [1, 128], strides = [1, 1]} : vector<3x128xf32> to vector<1x128xf32>
    %5 = vector.extract_strided_slice %2 {offsets = [2, 0], sizes = [1, 1], strides = [1, 1]} : vector<3x128xf32> to vector<1x1xf32>
    %6 = vector.broadcast %3 : vector<1x128xf32> to vector<256x128xf32>
    %7 = arith.mulf %0, %6 : vector<256x128xf32>
    %cst = arith.constant dense<0.000000e+00> : vector<256xf32>
    %8 = vector.multi_reduction <add>, %7, %cst [1] : vector<256x128xf32> to vector<256xf32>
    %9 = vector.shape_cast %8 : vector<256xf32> to vector<256x1xf32>
    %10 = vector.broadcast %5 : vector<1x1xf32> to vector<256x1xf32>
    %11 = arith.addf %9, %10 : vector<256x1xf32>
    %12 = vector.broadcast %4 : vector<1x128xf32> to vector<256x128xf32>
    %13 = arith.mulf %0, %12 : vector<256x128xf32>
    %cst_4 = arith.constant dense<0.000000e+00> : vector<256xf32>
    %14 = vector.multi_reduction <add>, %13, %cst_4 [1] : vector<256x128xf32> to vector<256xf32>
    %15 = vector.shape_cast %14 : vector<256xf32> to vector<256x1xf32>
    %16 = tpu.transpose %15, [1, 0] : vector<256x1xf32> -> vector<1x256xf32>
    %c0_5 = arith.constant 0 : index
    %c0_6 = arith.constant 0 : index
    %17 = vector.load %arg2[%c0_5, %c0_6] : memref<256x256xi8, #tpu.memory_space<vmem>>, vector<256x256xi8>
    %c0_i8 = arith.constant 0 : i8
    %18 = vector.broadcast %c0_i8 : i8 to vector<256x256xi8>
    %19 = arith.cmpi ne, %17, %18 : vector<256x256xi8>
    %20 = vector.broadcast %11 : vector<256x1xf32> to vector<256x256xf32>
    %21 = vector.broadcast %16 : vector<1x256xf32> to vector<256x256xf32>
    %22 = arith.addf %20, %21 : vector<256x256xf32>
    %cst_7 = arith.constant 0.000000e+00 : f32
    %23 = vector.broadcast %cst_7 : f32 to vector<256x256xf32>
    %24 = arith.cmpf oge, %22, %23 : vector<256x256xf32>
    %cst_8 = arith.constant 0.00999999977 : f32
    %25 = vector.broadcast %cst_8 : f32 to vector<256x256xf32>
    %26 = arith.mulf %25, %22 : vector<256x256xf32>
    %27 = arith.select %24, %22, %26 : vector<256x256xi1>, vector<256x256xf32>
    %cst_9 = arith.constant -1.000000e+30 : f32
    %28 = vector.broadcast %cst_9 : f32 to vector<256x256xf32>
    %29 = arith.select %19, %27, %28 : vector<256x256xi1>, vector<256x256xf32>
    %cst_10 = arith.constant dense<0xFF800000> : vector<256xf32>
    %30 = vector.multi_reduction <maximumf>, %29, %cst_10 [1] : vector<256x256xf32> to vector<256xf32>
    %31 = vector.shape_cast %30 : vector<256xf32> to vector<256x1xf32>
    %32 = vector.broadcast %31 : vector<256x1xf32> to vector<256x256xf32>
    %33 = arith.subf %27, %32 : vector<256x256xf32>
    %cst_11 = arith.constant -1.000000e+30 : f32
    %34 = vector.broadcast %cst_11 : f32 to vector<256x256xf32>
    %35 = arith.select %19, %33, %34 : vector<256x256xi1>, vector<256x256xf32>
    %36 = math.exp %35 : vector<256x256xf32>
    %cst_12 = arith.constant dense<0.000000e+00> : vector<256xf32>
    %37 = vector.multi_reduction <add>, %36, %cst_12 [1] : vector<256x256xf32> to vector<256xf32>
    %38 = vector.shape_cast %37 : vector<256xf32> to vector<256x1xf32>
    %cst_13 = arith.constant 0.000000e+00 : f32
    %39 = vector.broadcast %cst_13 : f32 to vector<256x1xf32>
    %40 = arith.cmpf ogt, %38, %39 : vector<256x1xf32>
    %cst_14 = arith.constant 1.000000e+00 : f32
    %41 = vector.broadcast %cst_14 : f32 to vector<256x1xf32>
    %42 = arith.select %40, %38, %41 : vector<256x1xi1>, vector<256x1xf32>
    %43 = tpu.reciprocal %42 {approx = true} : vector<256x1xf32> -> vector<256x1xf32>
    %44 = vector.broadcast %43 : vector<256x1xf32> to vector<256x256xf32>
    %45 = arith.mulf %36, %44 : vector<256x256xf32>
    %c0_15 = arith.constant 0 : index
    %c0_16 = arith.constant 0 : index
    %46 = vector.load %arg6[%c0_15, %c0_16] : memref<256x256xf32, #tpu.memory_space<vmem>>, vector<256x256xf32>
    tpu.vector_store %arg6[%c0_15, %c0_16], %45 {strides = array<i32>} : memref<256x256xf32, #tpu.memory_space<vmem>>, vector<256x256xf32>,
    %c0_17 = arith.constant 0 : index
    %c0_18 = arith.constant 0 : index
    %47 = vector.load %arg5[%c0_17, %c0_18] : memref<256x128xf32, #tpu.memory_space<vmem>>, vector<256x128xf32>
    tpu.vector_store %arg5[%c0_17, %c0_18], %0 {strides = array<i32>} : memref<256x128xf32, #tpu.memory_space<vmem>>, vector<256x128xf32>,
    %48 = tpu.iota {dimensions = array<i32: 0>} : vector<128x128xi32>
    %49 = tpu.iota {dimensions = array<i32: 1>} : vector<128x128xi32>
    %50 = arith.cmpi sgt, %48, %49 : vector<128x128xi32>
    %51 = arith.extui %50 : vector<128x128xi1> to vector<128x128xi32>
    %52 = arith.sitofp %51 : vector<128x128xi32> to vector<128x128xf32>
    %c0_i32 = arith.constant 0 : i32
    %c2_i32 = arith.constant 2 : i32
    %53 = arith.addi %c0_i32, %c2_i32 : i32
    %c1_i32 = arith.constant 1 : i32
    scf.for %arg7 = %c0_i32 to %53 step %c1_i32  : i32 {
      %c128_i32 = arith.constant 128 : i32
      %58 = arith.muli %arg7, %c128_i32 : i32
      %59 = tpu.assume_multiple %58, 128 : i32
      %60 = arith.index_cast %59 : i32 to index
      %c0_25 = arith.constant 0 : index
      %61 = vector.load %arg5[%60, %c0_25] : memref<256x128xf32, #tpu.memory_space<vmem>>, vector<128x128xf32>
      %cst_26 = arith.constant 0.000000e+00 : f32
      %62 = vector.broadcast %cst_26 : f32 to vector<128x128xf32>
      %c0_i32_27 = arith.constant 0 : i32
      %c2_i32_28 = arith.constant 2 : i32
      %63 = arith.addi %c0_i32_27, %c2_i32_28 : i32
      %c1_i32_29 = arith.constant 1 : i32
      %64 = scf.for %arg8 = %c0_i32_27 to %63 step %c1_i32_29 iter_args(%arg9 = %62) -> (vector<128x128xf32>)  : i32 {
        %c128_i32_45 = arith.constant 128 : i32
        %106 = arith.muli %arg8, %c128_i32_45 : i32
        %107 = tpu.assume_multiple %106, 128 : i32
        %108 = arith.index_cast %59 : i32 to index
        %109 = arith.index_cast %107 : i32 to index
        %110 = vector.load %arg6[%108, %109] : memref<256x256xf32, #tpu.memory_space<vmem>>, vector<128x128xf32>
        %111 = arith.cmpi eq, %arg8, %arg7 : i32
        %112 = arith.extui %111 : i1 to i32
        %113 = arith.sitofp %112 : i32 to f32
        %114 = vector.broadcast %113 : f32 to vector<128x128xf32>
        %115 = arith.mulf %114, %52 : vector<128x128xf32>
        %cst_46 = arith.constant 1.000000e+00 : f32
        %116 = vector.broadcast %cst_46 : f32 to vector<128x128xf32>
        %117 = arith.subf %116, %115 : vector<128x128xf32>
        %118 = arith.mulf %110, %117 : vector<128x128xf32>
        %119 = arith.truncf %118 : vector<128x128xf32> to vector<128x128xbf16>
        %120 = arith.index_cast %107 : i32 to index
        %c0_47 = arith.constant 0 : index
        %121 = vector.load %arg5[%120, %c0_47] : memref<256x128xf32, #tpu.memory_space<vmem>>, vector<128x128xf32>
        %122 = arith.truncf %121 : vector<128x128xf32> to vector<128x128xbf16>
        %cst_48 = arith.constant dense<0.000000e+00> : vector<128x128xf32>
        %123 = tpu.matmul %119, %122, %cst_48 {dimension_numbers = #tpu.dot_dimension_numbers<[1], [0], [0], [1], [0, 0, 1, 1], [], []>} : vector<128x128xbf16>, vector<128x128xbf16>, vector<128x128xf32> -> vector<128x128xf32>
        %124 = arith.addf %arg9, %123 : vector<128x128xf32>
        scf.yield %124 : vector<128x128xf32>
      }
      %c2_i32_30 = arith.constant 2 : i32
      %65 = arith.addf %61, %64 : vector<128x128xf32>
      %66 = arith.index_cast %59 : i32 to index
      %67 = arith.index_cast %59 : i32 to index
      %68 = vector.load %arg6[%66, %67] : memref<256x256xf32, #tpu.memory_space<vmem>>, vector<128x128xf32>
      %69 = arith.mulf %68, %52 : vector<128x128xf32>
      %70 = arith.truncf %69 : vector<128x128xf32> to vector<128x128xbf16>
      %71 = arith.truncf %65 : vector<128x128xf32> to vector<128x128xbf16>
      %cst_31 = arith.constant dense<0.000000e+00> : vector<128x128xf32>
      %72 = tpu.matmul %70, %71, %cst_31 {dimension_numbers = #tpu.dot_dimension_numbers<[1], [0], [0], [1], [0, 0, 1, 1], [], []>} : vector<128x128xbf16>, vector<128x128xbf16>, vector<128x128xf32> -> vector<128x128xf32>
      %73 = arith.addf %65, %72 : vector<128x128xf32>
      %cst_32 = arith.constant dense<0.000000e+00> : vector<128x128xf32>
      %74 = tpu.matmul %70, %70, %cst_32 {dimension_numbers = #tpu.dot_dimension_numbers<[1], [0], [0], [1], [0, 0, 1, 1], [], []>} : vector<128x128xbf16>, vector<128x128xbf16>, vector<128x128xf32> -> vector<128x128xf32>
      %75 = arith.truncf %74 : vector<128x128xf32> to vector<128x128xbf16>
      %76 = arith.truncf %73 : vector<128x128xf32> to vector<128x128xbf16>
      %cst_33 = arith.constant dense<0.000000e+00> : vector<128x128xf32>
      %77 = tpu.matmul %75, %76, %cst_33 {dimension_numbers = #tpu.dot_dimension_numbers<[1], [0], [0], [1], [0, 0, 1, 1], [], []>} : vector<128x128xbf16>, vector<128x128xbf16>, vector<128x128xf32> -> vector<128x128xf32>
      %78 = arith.addf %73, %77 : vector<128x128xf32>
      %cst_34 = arith.constant dense<0.000000e+00> : vector<128x128xf32>
      %79 = tpu.matmul %75, %75, %cst_34 {dimension_numbers = #tpu.dot_dimension_numbers<[1], [0], [0], [1], [0, 0, 1, 1], [], []>} : vector<128x128xbf16>, vector<128x128xbf16>, vector<128x128xf32> -> vector<128x128xf32>
      %80 = arith.truncf %79 : vector<128x128xf32> to vector<128x128xbf16>
      %81 = arith.truncf %78 : vector<128x128xf32> to vector<128x128xbf16>
      %cst_35 = arith.constant dense<0.000000e+00> : vector<128x128xf32>
      %82 = tpu.matmul %80, %81, %cst_35 {dimension_numbers = #tpu.dot_dimension_numbers<[1], [0], [0], [1], [0, 0, 1, 1], [], []>} : vector<128x128xbf16>, vector<128x128xbf16>, vector<128x128xf32> -> vector<128x128xf32>
      %83 = arith.addf %78, %82 : vector<128x128xf32>
      %cst_36 = arith.constant dense<0.000000e+00> : vector<128x128xf32>
      %84 = tpu.matmul %80, %80, %cst_36 {dimension_numbers = #tpu.dot_dimension_numbers<[1], [0], [0], [1], [0, 0, 1, 1], [], []>} : vector<128x128xbf16>, vector<128x128xbf16>, vector<128x128xf32> -> vector<128x128xf32>
      %85 = arith.truncf %84 : vector<128x128xf32> to vector<128x128xbf16>
      %86 = arith.truncf %83 : vector<128x128xf32> to vector<128x128xbf16>
      %cst_37 = arith.constant dense<0.000000e+00> : vector<128x128xf32>
      %87 = tpu.matmul %85, %86, %cst_37 {dimension_numbers = #tpu.dot_dimension_numbers<[1], [0], [0], [1], [0, 0, 1, 1], [], []>} : vector<128x128xbf16>, vector<128x128xbf16>, vector<128x128xf32> -> vector<128x128xf32>
      %88 = arith.addf %83, %87 : vector<128x128xf32>
      %cst_38 = arith.constant dense<0.000000e+00> : vector<128x128xf32>
      %89 = tpu.matmul %85, %85, %cst_38 {dimension_numbers = #tpu.dot_dimension_numbers<[1], [0], [0], [1], [0, 0, 1, 1], [], []>} : vector<128x128xbf16>, vector<128x128xbf16>, vector<128x128xf32> -> vector<128x128xf32>
      %90 = arith.truncf %89 : vector<128x128xf32> to vector<128x128xbf16>
      %91 = arith.truncf %88 : vector<128x128xf32> to vector<128x128xbf16>
      %cst_39 = arith.constant dense<0.000000e+00> : vector<128x128xf32>
      %92 = tpu.matmul %90, %91, %cst_39 {dimension_numbers = #tpu.dot_dimension_numbers<[1], [0], [0], [1], [0, 0, 1, 1], [], []>} : vector<128x128xbf16>, vector<128x128xbf16>, vector<128x128xf32> -> vector<128x128xf32>
      %93 = arith.addf %88, %92 : vector<128x128xf32>
      %cst_40 = arith.constant dense<0.000000e+00> : vector<128x128xf32>
      %94 = tpu.matmul %90, %90, %cst_40 {dimension_numbers = #tpu.dot_dimension_numbers<[1], [0], [0], [1], [0, 0, 1, 1], [], []>} : vector<128x128xbf16>, vector<128x128xbf16>, vector<128x128xf32> -> vector<128x128xf32>
      %95 = arith.truncf %94 : vector<128x128xf32> to vector<128x128xbf16>
      %96 = arith.truncf %93 : vector<128x128xf32> to vector<128x128xbf16>
      %cst_41 = arith.constant dense<0.000000e+00> : vector<128x128xf32>
      %97 = tpu.matmul %95, %96, %cst_41 {dimension_numbers = #tpu.dot_dimension_numbers<[1], [0], [0], [1], [0, 0, 1, 1], [], []>} : vector<128x128xbf16>, vector<128x128xbf16>, vector<128x128xf32> -> vector<128x128xf32>
      %98 = arith.addf %93, %97 : vector<128x128xf32>
      %cst_42 = arith.constant dense<0.000000e+00> : vector<128x128xf32>
      %99 = tpu.matmul %95, %95, %cst_42 {dimension_numbers = #tpu.dot_dimension_numbers<[1], [0], [0], [1], [0, 0, 1, 1], [], []>} : vector<128x128xbf16>, vector<128x128xbf16>, vector<128x128xf32> -> vector<128x128xf32>
      %100 = arith.truncf %99 : vector<128x128xf32> to vector<128x128xbf16>
      %101 = arith.truncf %98 : vector<128x128xf32> to vector<128x128xbf16>
      %cst_43 = arith.constant dense<0.000000e+00> : vector<128x128xf32>
      %102 = tpu.matmul %100, %101, %cst_43 {dimension_numbers = #tpu.dot_dimension_numbers<[1], [0], [0], [1], [0, 0, 1, 1], [], []>} : vector<128x128xbf16>, vector<128x128xbf16>, vector<128x128xf32> -> vector<128x128xf32>
      %103 = arith.addf %98, %102 : vector<128x128xf32>
      %104 = arith.index_cast %59 : i32 to index
      %c0_44 = arith.constant 0 : index
      %105 = vector.load %arg5[%104, %c0_44] : memref<256x128xf32, #tpu.memory_space<vmem>>, vector<128x128xf32>
      tpu.vector_store %arg5[%104, %c0_44], %103 {strides = array<i32>} : memref<256x128xf32, #tpu.memory_space<vmem>>, vector<128x128xf32>,
    }
    %c2_i32_19 = arith.constant 2 : i32
    %c0_20 = arith.constant 0 : index
    %c0_21 = arith.constant 0 : index
    %54 = vector.load %arg5[%c0_20, %c0_21] : memref<256x128xf32, #tpu.memory_space<vmem>>, vector<256x128xf32>
    %c0_22 = arith.constant 0 : index
    %c0_23 = arith.constant 0 : index
    %c0_24 = arith.constant 0 : index
    %55 = vector.load %arg4[%c0_22, %c0_23, %c0_24] : memref<1x256x128xf32, #tpu.memory_space<vmem>>, vector<1x256x128xf32>
    %56 = vector.shape_cast %55 : vector<1x256x128xf32> to vector<256x128xf32>
    %57 = vector.shape_cast %54 : vector<256x128xf32> to vector<1x256x128xf32>
    tpu.vector_store %arg4[%c0_22, %c0_23, %c0_24], %57 {strides = array<i32>} : memref<1x256x128xf32, #tpu.memory_space<vmem>>, vector<1x256x128xf32>,
    return
  }
  func.func @transform_0(%arg0: i32) -> (i32, i32) {
    %c0_i32 = arith.constant 0 : i32
    %c0_i32_0 = arith.constant 0 : i32
    %c0_i32_1 = arith.constant 0 : i32
    return %c0_i32, %c0_i32_0 : i32, i32
  }
  func.func @transform_1(%arg0: i32) -> (i32, i32) {
    %c0_i32 = arith.constant 0 : i32
    %c0_i32_0 = arith.constant 0 : i32
    %c0_i32_1 = arith.constant 0 : i32
    return %c0_i32, %c0_i32_0 : i32, i32
  }
  func.func @transform_2(%arg0: i32) -> (i32, i32, i32) {
    %c0_i32 = arith.constant 0 : i32
    %c0_i32_0 = arith.constant 0 : i32
    %c0_i32_1 = arith.constant 0 : i32
    return %arg0, %c0_i32, %c0_i32_0 : i32, i32, i32
  }
  func.func @transform_3(%arg0: i32) -> (i32, i32, i32) {
    %c0_i32 = arith.constant 0 : i32
    %c0_i32_0 = arith.constant 0 : i32
    %c0_i32_1 = arith.constant 0 : i32
    return %arg0, %c0_i32, %c0_i32_0 : i32, i32, i32
  }
}

</mosaic_0001>

<llo_original>
// kernel: tpu_custom_call.1
$region0: #{tpu_custom_call.1}
  #allocation0 [shape = 'u32[]', space=smem, size = 0x4, offset = 0x4, fixed_abs, tag = 'smem constant byte address 0x4 - core index']
  #allocation1 [shape = 'u32[72,128]{1,0:T(1,128)}', space=vmem, size = 0x9000, scoped, tag = 'internal scratch']
  #allocation2 [shape = 'f32[256,128]{1,0:T(8,128)}', space=vmem, size = 0x20000, scoped, tag = 'scratch operand']
  #allocation3 [shape = 'f32[256,256]{1,0:T(8,128)}', space=vmem, size = 0x40000, scoped, tag = 'scratch operand']
  %s0 = inlined_call_operand.hbm [shape: f32[256,128], index: 0, kind: input, shape index: {}]
  %s1 = inlined_call_operand.hbm [shape: s8[256,256], index: 1, kind: input, shape index: {}]
  %s2 = inlined_call_operand.vmem [shape: f32[2,3,128], index: 2, kind: input, shape index: {}]
  %s3 = inlined_call_operand.hbm [shape: f32[2,256,128], index: 3, kind: output, shape index: {}]
  %s4 = sld [smem:[#allocation0]]
  $region67: #{tpu_custom_call.1} parent=0
    _
  %s6 = ssub.s32 1, %s4
  %s7 = scalar_select 0, %s6, %s4
  $region1: #{tpu_custom_call.1} parent=0
    #allocation4 [shape = 'u8[131072]{0}', space=vmem, size = 0x20000, scoped, tag = 'input window, operand 0, single buffered']
    #allocation5 [shape = 's32[2]{0}', space=sflag, size = 0x8, scoped, tag = 'scoped memory for tpu_custom_call.1']
    #allocation6 [shape = 's32[2]{0}', space=sflag, size = 0x8, scoped, tag = 'scoped memory for tpu_custom_call.1']
    #allocation7 [shape = 'u8[65536]{0}', space=vmem, size = 0x10000, scoped, tag = 'input window, operand 1, single buffered']
    #allocation8 [shape = 's32[1]{0}', space=sflag, size = 0x4, scoped, tag = 'scoped memory for tpu_custom_call.1']
    #allocation9 [shape = 'u8[262144]{0}', space=vmem, size = 0x40000, scoped, tag = 'output window, operand 0']
    %8 = vsyncpa [#allocation5], 0
    %9 = vsyncpa [#allocation8], 0
    %10 = vsyncpa [#allocation6], 0
    %s11 = scalar_lea.sflag [#allocation6], 1
    %12 = vsyncpa %s11, 0
    loop: start=0, step=1, limit=4
    $region2: #{tpu_custom_call.1} parent=1 // loop_pre_header
      _
    $region3: #{tpu_custom_call.1} parent=1 // loop_header
      %s14 = sphi 0, %s18
      %p15 = scmp.ge.s32.totalorder %s14, 4
      %s22 = sphi 0, %s22
      %s24 = sphi 0, %s22
      %s25 = sphi 0, %s24
      %s39 = sphi 0, %s25
      %s43 = sphi 0, %s43
      %s45 = sphi 0, %s43
      %s46 = sphi 0, %s45
      %s60 = sphi 0, %s46
      %s66 = sphi 0, %s68
      %s69 = sphi 0, %s66
      %s70 = sphi 0, %s69
      %s86 = sphi 0, %s70
      %s92 = sphi 0, %s94
      %s95 = sphi 0, %s92
      %s96 = sphi 0, %s95
      %s112 = sphi 0, %s96
    $region4: #{tpu_custom_call.1} parent=1 // loop_header_branch
      %17 = sbr.rel (%p15) target = $region8
    $region5: #{tpu_custom_call.1} parent=1 // loop_body
      %s19 = ssub.s32 %s14, 1
      %s20 = ssub.s32 %s14, 2
      %s21 = sadd.s32 %s14, 1
      %s23 = sadd.s32 %s22, 1
      %p26 = scmp.eq.s32.totalorder %s14, 1
      %p27 = scmp.ne.s32.totalorder %s22, %s24
      %p28 = scmp.eq.s32.totalorder %s14, 0
      %p29 = por %p27, %p28
      %p30 = scmp.ne.s32.totalorder %s22, %s24
      %p31 = scmp.eq.s32.totalorder %s19, 1
      %p32 = por %p30, %p31
      %p33 = scmp.ne.s32.totalorder %s24, %s25
      %p34 = scmp.eq.s32.totalorder %s19, 0
      %p35 = por %p33, %p34
      %p36 = scmp.ne.s32.totalorder %s24, %s25
      %p37 = scmp.eq.s32.totalorder %s20, 1
      %p38 = por %p36, %p37
      %p40 = scmp.ne.s32.totalorder %s25, %s39
      %p41 = scmp.eq.s32.totalorder %s20, 0
      %p42 = por %p40, %p41
      %s44 = sadd.s32 %s43, 1
      %p47 = scmp.eq.s32.totalorder %s14, 1
      %p48 = scmp.ne.s32.totalorder %s43, %s45
      %p49 = scmp.eq.s32.totalorder %s14, 0
      %p50 = por %p48, %p49
      %p51 = scmp.ne.s32.totalorder %s43, %s45
      %p52 = scmp.eq.s32.totalorder %s19, 1
      %p53 = por %p51, %p52
      %p54 = scmp.ne.s32.totalorder %s45, %s46
      %p55 = scmp.eq.s32.totalorder %s19, 0
      %p56 = por %p54, %p55
      %p57 = scmp.ne.s32.totalorder %s45, %s46
      %p58 = scmp.eq.s32.totalorder %s20, 1
      %p59 = por %p57, %p58
      %p61 = scmp.ne.s32.totalorder %s46, %s60
      %p62 = scmp.eq.s32.totalorder %s20, 0
      %p63 = por %p61, %p62
      %s64 = ssub.s32 %s14, %s21
      %p65 = scmp.eq.s32.totalorder %s64, 0
      %s67 = sadd.s32 %s66, 1
      %s68 = scalar_select %p65, %s66, %s67
      %p71 = pneg %p65
      %p72 = scmp.eq.s32.totalorder %s14, 1
      %p73 = por %p71, %p72
      %p74 = scmp.ne.s32.totalorder %s66, %s69
      %p75 = scmp.eq.s32.totalorder %s14, 0
      %p76 = por %p74, %p75
      %p77 = scmp.ne.s32.totalorder %s66, %s69
      %p78 = scmp.eq.s32.totalorder %s19, 1
      %p79 = por %p77, %p78
      %p80 = scmp.ne.s32.totalorder %s69, %s70
      %p81 = scmp.eq.s32.totalorder %s19, 0
      %p82 = por %p80, %p81
      %p83 = scmp.ne.s32.totalorder %s69, %s70
      %p84 = scmp.eq.s32.totalorder %s20, 1
      %p85 = por %p83, %p84
      %p87 = scmp.ne.s32.totalorder %s70, %s86
      %p88 = scmp.eq.s32.totalorder %s20, 0
      %p89 = por %p87, %p88
      %s90 = ssub.s32 %s14, %s21
      %p91 = scmp.eq.s32.totalorder %s90, 0
      %s93 = sadd.s32 %s92, 1
      %s94 = scalar_select %p91, %s92, %s93
      %p97 = pneg %p91
      %p98 = scmp.eq.s32.totalorder %s14, 1
      %p99 = por %p97, %p98
      %p100 = scmp.ne.s32.totalorder %s92, %s95
      %p101 = scmp.eq.s32.totalorder %s14, 0
      %p102 = por %p100, %p101
      %p103 = scmp.ne.s32.totalorder %s92, %s95
      %p104 = scmp.eq.s32.totalorder %s19, 1
      %p105 = por %p103, %p104
      %p106 = scmp.ne.s32.totalorder %s95, %s96
      %p107 = scmp.eq.s32.totalorder %s19, 0
      %p108 = por %p106, %p107
      %p109 = scmp.ne.s32.totalorder %s95, %s96
      %p110 = scmp.eq.s32.totalorder %s20, 1
      %p111 = por %p109, %p110
      %p113 = scmp.ne.s32.totalorder %s96, %s112
      %p114 = scmp.eq.s32.totalorder %s20, 0
      %p115 = por %p113, %p114
      %p116 = scmp.le.s32.totalorder 1, %s14
      %p117 = scmp.lt.s32.totalorder %s14, 3
      %p118 = pnand %p116, %p117
      %p119 = pneg %p118
      // Predicated region
      $region9: #{tpu_custom_call.1} parent=5 // pred_check
        _
      $region10: #{tpu_custom_call.1} parent=5 // pred_check_branch
        %121 = sbr.rel (%p118) target = $region12
      $region11: #{tpu_custom_call.1} parent=5 // pred_region
        %s122 = ssub.s32 %s14, 1
        // Predicated region
        $region13: #{tpu_custom_call.1} parent=11 // pred_check
          %p123 = pneg %p35
        $region14: #{tpu_custom_call.1} parent=11 // pred_check_branch
          %125 = sbr.rel (%p123) target = $region16
        $region15: #{tpu_custom_call.1} parent=11 // pred_region
          %127 = vsyncadd [#allocation5], 0
          %s128 = sshll.u32 %s0, 4
          %s129 = int_to_ptr.hbm [resolvable:$true] %s128
          %s130 = sshll.u32 [#allocation4], 4
          %s131 = int_to_ptr.vmem [resolvable:$true] %s130
          %136 = dma.hbm_to_vmem [thread:$0]  %s129, 4096, %s131, [#allocation5], 128, 128, 8
        $region16: #{tpu_custom_call.1} parent=11 // pred_fallthru
          _
        // Predicated region
        $region17: #{tpu_custom_call.1} parent=11 // pred_check
          %p137 = pneg %p56
        $region18: #{tpu_custom_call.1} parent=11 // pred_check_branch
          %139 = sbr.rel (%p137) target = $region20
        $region19: #{tpu_custom_call.1} parent=11 // pred_region
          %141 = vsyncadd [#allocation8], 0
          %s142 = sshll.u32 %s1, 4
          %s143 = int_to_ptr.hbm [resolvable:$true] %s142
          %s144 = sshll.u32 [#allocation7], 4
          %s145 = int_to_ptr.vmem [resolvable:$true] %s144
          %150 = dma.hbm_to_vmem [thread:$0]  %s143, 2048, %s145, [#allocation8], 256, 256, 16
        $region20: #{tpu_custom_call.1} parent=11 // pred_fallthru
          _
      $region12: #{tpu_custom_call.1} parent=5 // pred_fallthru
        _
      %p151 = scmp.lt.s32.totalorder %s14, 2
      // Predicated region
      $region21: #{tpu_custom_call.1} parent=5 // pred_check
        %p152 = pneg %p151
      $region22: #{tpu_custom_call.1} parent=5 // pred_check_branch
        %154 = sbr.rel (%p152) target = $region24
      $region23: #{tpu_custom_call.1} parent=5 // pred_region
        // Predicated region
        $region25: #{tpu_custom_call.1} parent=23 // pred_check
          %p155 = pneg %p76
        $region26: #{tpu_custom_call.1} parent=23 // pred_check_branch
          %157 = sbr.rel (%p155) target = $region28
        $region27: #{tpu_custom_call.1} parent=23 // pred_region
          %p158 = scmp.lt.s32.totalorder %s14, 1
          %s159 = scalar_select %p158, %s14, 1
          %s160 = smul.addr %s159, 4
          %s161 = scalar_lea.vmem %s2, %s160
        $region28: #{tpu_custom_call.1} parent=23 // pred_fallthru
          _
      $region24: #{tpu_custom_call.1} parent=5 // pred_fallthru
        _
      %p162 = scmp.le.s32.totalorder 1, %s14
      %p163 = scmp.lt.s32.totalorder %s14, 3
      %p164 = pnand %p162, %p163
      %p165 = pneg %p164
      // Predicated region
      $region29: #{tpu_custom_call.1} parent=5 // pred_check
        _
      $region30: #{tpu_custom_call.1} parent=5 // pred_check_branch
        %167 = sbr.rel (%p164) target = $region32
      $region31: #{tpu_custom_call.1} parent=5 // pred_region
        %s168 = ssub.s32 %s14, 1
        // Predicated region
        $region33: #{tpu_custom_call.1} parent=31 // pred_check
          %p169 = pneg %p35
        $region34: #{tpu_custom_call.1} parent=31 // pred_check_branch
          %171 = sbr.rel (%p169) target = $region36
        $region35: #{tpu_custom_call.1} parent=31 // pred_region
          %173 = dma.done [#allocation5], 4096
        $region36: #{tpu_custom_call.1} parent=31 // pred_fallthru
          _
        // Predicated region
        $region37: #{tpu_custom_call.1} parent=31 // pred_check
          %p174 = pneg %p56
        $region38: #{tpu_custom_call.1} parent=31 // pred_check_branch
          %176 = sbr.rel (%p174) target = $region40
        $region39: #{tpu_custom_call.1} parent=31 // pred_region
          %178 = dma.done [#allocation8], 2048
        $region40: #{tpu_custom_call.1} parent=31 // pred_fallthru
          _
        %p179 = pneg %p35
        %p180 = pneg %p32
        %p181 = pneg %p56
        %p182 = pneg %p53
        %p183 = scmp.lt.s32.totalorder %s19, 1
        %s184 = scalar_select %p183, %s19, 1
        %s185 = smul.addr %s184, 4
        %s186 = scalar_lea.vmem %s2, %s185
        %p187 = pneg %p82
        %p188 = pneg %p79
        %p189 = pneg %p108
        %p190 = pneg %p105
        %s191 = sand.u32 %s95, 1
        %s192 = scalar_lea.sflag [#allocation6], %s191
        %s193 = sand.u32 %s95, 1
        %s194 = smul.addr %s193, 256
        %s195 = scalar_lea.vmem [#allocation9], %s194
        %p196 = scmp.lt.s32.totalorder %s19, 1
        %s197 = scalar_select %p196, %s19, 1
        %s198 = smul.addr %s197, 4
        %s199 = scalar_lea.vmem %s2, %s198
        %v202 = vld [vmem:[#allocation4] sm:$0xff]
        %v203 = vld [vmem:[#allocation4 + $0x8] sm:$0xff]
        %v204 = vld [vmem:[#allocation4 + $0x10] sm:$0xff]
        %v205 = vld [vmem:[#allocation4 + $0x18] sm:$0xff]
        %v206 = vld [vmem:[#allocation4 + $0x20] sm:$0xff]
        %v207 = vld [vmem:[#allocation4 + $0x28] sm:$0xff]
        %v208 = vld [vmem:[#allocation4 + $0x30] sm:$0xff]
        %v209 = vld [vmem:[#allocation4 + $0x38] sm:$0xff]
        %v210 = vld [vmem:[#allocation4 + $0x40] sm:$0xff]
        %v211 = vld [vmem:[#allocation4 + $0x48] sm:$0xff]
        %v212 = vld [vmem:[#allocation4 + $0x50] sm:$0xff]
        %v213 = vld [vmem:[#allocation4 + $0x58] sm:$0xff]
        %v214 = vld [vmem:[#allocation4 + $0x60] sm:$0xff]
        %v215 = vld [vmem:[#allocation4 + $0x68] sm:$0xff]
        %v216 = vld [vmem:[#allocation4 + $0x70] sm:$0xff]
        %v217 = vld [vmem:[#allocation4 + $0x78] sm:$0xff]
        %v218 = vld [vmem:[#allocation4 + $0x80] sm:$0xff]
        %v219 = vld [vmem:[#allocation4 + $0x88] sm:$0xff]
        %v220 = vld [vmem:[#allocation4 + $0x90] sm:$0xff]
        %v221 = vld [vmem:[#allocation4 + $0x98] sm:$0xff]
        %v222 = vld [vmem:[#allocation4 + $0xa0] sm:$0xff]
        %v223 = vld [vmem:[#allocation4 + $0xa8] sm:$0xff]
        %v224 = vld [vmem:[#allocation4 + $0xb0] sm:$0xff]
        %v225 = vld [vmem:[#allocation4 + $0xb8] sm:$0xff]
        %v226 = vld [vmem:[#allocation4 + $0xc0] sm:$0xff]
        %v227 = vld [vmem:[#allocation4 + $0xc8] sm:$0xff]
        %v228 = vld [vmem:[#allocation4 + $0xd0] sm:$0xff]
        %v229 = vld [vmem:[#allocation4 + $0xd8] sm:$0xff]
        %v230 = vld [vmem:[#allocation4 + $0xe0] sm:$0xff]
        %v231 = vld [vmem:[#allocation4 + $0xe8] sm:$0xff]
        %v232 = vld [vmem:[#allocation4 + $0xf0] sm:$0xff]
        %v233 = vld [vmem:[#allocation4 + $0xf8] sm:$0xff]
        %v234 = vld [vmem:[%s199] sm:$0x7]
        %v235 = vperm.slane %v234, 0
        %v236 = vmul.f32 %v202, %v235
        %v237 = vmul.f32 %v203, %v235
        %v238 = vmul.f32 %v204, %v235
        %v239 = vmul.f32 %v205, %v235
        %v240 = vmul.f32 %v206, %v235
        %v241 = vmul.f32 %v207, %v235
        %v242 = vmul.f32 %v208, %v235
        %v243 = vmul.f32 %v209, %v235
        %v244 = vmul.f32 %v210, %v235
        %v245 = vmul.f32 %v211, %v235
        %v246 = vmul.f32 %v212, %v235
        %v247 = vmul.f32 %v213, %v235
        %v248 = vmul.f32 %v214, %v235
        %v249 = vmul.f32 %v215, %v235
        %v250 = vmul.f32 %v216, %v235
        %v251 = vmul.f32 %v217, %v235
        %v252 = vmul.f32 %v218, %v235
        %v253 = vmul.f32 %v219, %v235
        %v254 = vmul.f32 %v220, %v235
        %v255 = vmul.f32 %v221, %v235
        %v256 = vmul.f32 %v222, %v235
        %v257 = vmul.f32 %v223, %v235
        %v258 = vmul.f32 %v224, %v235
        %v259 = vmul.f32 %v225, %v235
        %v260 = vmul.f32 %v226, %v235
        %v261 = vmul.f32 %v227, %v235
        %v262 = vmul.f32 %v228, %v235
        %v263 = vmul.f32 %v229, %v235
        %v264 = vmul.f32 %v230, %v235
        %v265 = vmul.f32 %v231, %v235
        %v266 = vmul.f32 %v232, %v235
        %v267 = vmul.f32 %v233, %v235
        %268 = vadd.xlane.f32.xlu0 %v236
        %v269 = vpop.xlane.xlu0 %268
        %270 = vadd.xlane.f32.xlu0 %v237
        %v271 = vpop.xlane.xlu0 %270
        %272 = vadd.xlane.f32.xlu0 %v238
        %v273 = vpop.xlane.xlu0 %272
        %274 = vadd.xlane.f32.xlu0 %v239
        %v275 = vpop.xlane.xlu0 %274
        %276 = vadd.xlane.f32.xlu0 %v240
        %v277 = vpop.xlane.xlu0 %276
        %278 = vadd.xlane.f32.xlu0 %v241
        %v279 = vpop.xlane.xlu0 %278
        %280 = vadd.xlane.f32.xlu0 %v242
        %v281 = vpop.xlane.xlu0 %280
        %282 = vadd.xlane.f32.xlu0 %v243
        %v283 = vpop.xlane.xlu0 %282
        %284 = vadd.xlane.f32.xlu0 %v244
        %v285 = vpop.xlane.xlu0 %284
        %286 = vadd.xlane.f32.xlu0 %v245
        %v287 = vpop.xlane.xlu0 %286
        %288 = vadd.xlane.f32.xlu0 %v246
        %v289 = vpop.xlane.xlu0 %288
        %290 = vadd.xlane.f32.xlu0 %v247
        %v291 = vpop.xlane.xlu0 %290
        %292 = vadd.xlane.f32.xlu0 %v248
        %v293 = vpop.xlane.xlu0 %292
        %294 = vadd.xlane.f32.xlu0 %v249
        %v295 = vpop.xlane.xlu0 %294
        %296 = vadd.xlane.f32.xlu0 %v250
        %v297 = vpop.xlane.xlu0 %296
        %298 = vadd.xlane.f32.xlu0 %v251
        %v299 = vpop.xlane.xlu0 %298
        %300 = vadd.xlane.f32.xlu0 %v252
        %v301 = vpop.xlane.xlu0 %300
        %302 = vadd.xlane.f32.xlu0 %v253
        %v303 = vpop.xlane.xlu0 %302
        %304 = vadd.xlane.f32.xlu0 %v254
        %v305 = vpop.xlane.xlu0 %304
        %306 = vadd.xlane.f32.xlu0 %v255
        %v307 = vpop.xlane.xlu0 %306
        %308 = vadd.xlane.f32.xlu0 %v256
        %v309 = vpop.xlane.xlu0 %308
        %310 = vadd.xlane.f32.xlu0 %v257
        %v311 = vpop.xlane.xlu0 %310
        %312 = vadd.xlane.f32.xlu0 %v258
        %v313 = vpop.xlane.xlu0 %312
        %314 = vadd.xlane.f32.xlu0 %v259
        %v315 = vpop.xlane.xlu0 %314
        %316 = vadd.xlane.f32.xlu0 %v260
        %v317 = vpop.xlane.xlu0 %316
        %318 = vadd.xlane.f32.xlu0 %v261
        %v319 = vpop.xlane.xlu0 %318
        %320 = vadd.xlane.f32.xlu0 %v262
        %v321 = vpop.xlane.xlu0 %320
        %322 = vadd.xlane.f32.xlu0 %v263
        %v323 = vpop.xlane.xlu0 %322
        %324 = vadd.xlane.f32.xlu0 %v264
        %v325 = vpop.xlane.xlu0 %324
        %326 = vadd.xlane.f32.xlu0 %v265
        %v327 = vpop.xlane.xlu0 %326
        %328 = vadd.xlane.f32.xlu0 %v266
        %v329 = vpop.xlane.xlu0 %328
        %330 = vadd.xlane.f32.xlu0 %v267
        %v331 = vpop.xlane.xlu0 %330
        %v332 = vperm.slane %v234, 2
        %v333 = vadd.f32 %v269, %v332
        %v334 = vadd.f32 %v271, %v332
        %v335 = vadd.f32 %v273, %v332
        %v336 = vadd.f32 %v275, %v332
        %v337 = vadd.f32 %v277, %v332
        %v338 = vadd.f32 %v279, %v332
        %v339 = vadd.f32 %v281, %v332
        %v340 = vadd.f32 %v283, %v332
        %v341 = vadd.f32 %v285, %v332
        %v342 = vadd.f32 %v287, %v332
        %v343 = vadd.f32 %v289, %v332
        %v344 = vadd.f32 %v291, %v332
        %v345 = vadd.f32 %v293, %v332
        %v346 = vadd.f32 %v295, %v332
        %v347 = vadd.f32 %v297, %v332
        %v348 = vadd.f32 %v299, %v332
        %v349 = vadd.f32 %v301, %v332
        %v350 = vadd.f32 %v303, %v332
        %v351 = vadd.f32 %v305, %v332
        %v352 = vadd.f32 %v307, %v332
        %v353 = vadd.f32 %v309, %v332
        %v354 = vadd.f32 %v311, %v332
        %v355 = vadd.f32 %v313, %v332
        %v356 = vadd.f32 %v315, %v332
        %v357 = vadd.f32 %v317, %v332
        %v358 = vadd.f32 %v319, %v332
        %v359 = vadd.f32 %v321, %v332
        %v360 = vadd.f32 %v323, %v332
        %v361 = vadd.f32 %v325, %v332
        %v362 = vadd.f32 %v327, %v332
        %v363 = vadd.f32 %v329, %v332
        %v364 = vadd.f32 %v331, %v332
        %v365 = vperm.slane %v234, 1
        %v366 = vmul.f32 %v202, %v365
        %v367 = vmul.f32 %v203, %v365
        %v368 = vmul.f32 %v204, %v365
        %v369 = vmul.f32 %v205, %v365
        %v370 = vmul.f32 %v206, %v365
        %v371 = vmul.f32 %v207, %v365
        %v372 = vmul.f32 %v208, %v365
        %v373 = vmul.f32 %v209, %v365
        %v374 = vmul.f32 %v210, %v365
        %v375 = vmul.f32 %v211, %v365
        %v376 = vmul.f32 %v212, %v365
        %v377 = vmul.f32 %v213, %v365
        %v378 = vmul.f32 %v214, %v365
        %v379 = vmul.f32 %v215, %v365
        %v380 = vmul.f32 %v216, %v365
        %v381 = vmul.f32 %v217, %v365
        %v382 = vmul.f32 %v218, %v365
        %v383 = vmul.f32 %v219, %v365
        %v384 = vmul.f32 %v220, %v365
        %v385 = vmul.f32 %v221, %v365
        %v386 = vmul.f32 %v222, %v365
        %v387 = vmul.f32 %v223, %v365
        %v388 = vmul.f32 %v224, %v365
        %v389 = vmul.f32 %v225, %v365
        %v390 = vmul.f32 %v226, %v365
        %v391 = vmul.f32 %v227, %v365
        %v392 = vmul.f32 %v228, %v365
        %v393 = vmul.f32 %v229, %v365
        %v394 = vmul.f32 %v230, %v365
        %v395 = vmul.f32 %v231, %v365
        %v396 = vmul.f32 %v232, %v365
        %v397 = vmul.f32 %v233, %v365
        %398 = vadd.xlane.f32.xlu0 %v366
        %v399 = vpop.xlane.xlu0 %398
        %400 = vadd.xlane.f32.xlu0 %v367
        %v401 = vpop.xlane.xlu0 %400
        %402 = vadd.xlane.f32.xlu0 %v368
        %v403 = vpop.xlane.xlu0 %402
        %404 = vadd.xlane.f32.xlu0 %v369
        %v405 = vpop.xlane.xlu0 %404
        %406 = vadd.xlane.f32.xlu0 %v370
        %v407 = vpop.xlane.xlu0 %406
        %408 = vadd.xlane.f32.xlu0 %v371
        %v409 = vpop.xlane.xlu0 %408
        %410 = vadd.xlane.f32.xlu0 %v372
        %v411 = vpop.xlane.xlu0 %410
        %412 = vadd.xlane.f32.xlu0 %v373
        %v413 = vpop.xlane.xlu0 %412
        %414 = vadd.xlane.f32.xlu0 %v374
        %v415 = vpop.xlane.xlu0 %414
        %416 = vadd.xlane.f32.xlu0 %v375
        %v417 = vpop.xlane.xlu0 %416
        %418 = vadd.xlane.f32.xlu0 %v376
        %v419 = vpop.xlane.xlu0 %418
        %420 = vadd.xlane.f32.xlu0 %v377
        %v421 = vpop.xlane.xlu0 %420
        %422 = vadd.xlane.f32.xlu0 %v378
        %v423 = vpop.xlane.xlu0 %422
        %424 = vadd.xlane.f32.xlu0 %v379
        %v425 = vpop.xlane.xlu0 %424
        %426 = vadd.xlane.f32.xlu0 %v380
        %v427 = vpop.xlane.xlu0 %426
        %428 = vadd.xlane.f32.xlu0 %v381
        %v429 = vpop.xlane.xlu0 %428
        %430 = vadd.xlane.f32.xlu0 %v382
        %v431 = vpop.xlane.xlu0 %430
        %432 = vadd.xlane.f32.xlu0 %v383
        %v433 = vpop.xlane.xlu0 %432
        %434 = vadd.xlane.f32.xlu0 %v384
        %v435 = vpop.xlane.xlu0 %434
        %436 = vadd.xlane.f32.xlu0 %v385
        %v437 = vpop.xlane.xlu0 %436
        %438 = vadd.xlane.f32.xlu0 %v386
        %v439 = vpop.xlane.xlu0 %438
        %440 = vadd.xlane.f32.xlu0 %v387
        %v441 = vpop.xlane.xlu0 %440
        %442 = vadd.xlane.f32.xlu0 %v388
        %v443 = vpop.xlane.xlu0 %442
        %444 = vadd.xlane.f32.xlu0 %v389
        %v445 = vpop.xlane.xlu0 %444
        %446 = vadd.xlane.f32.xlu0 %v390
        %v447 = vpop.xlane.xlu0 %446
        %448 = vadd.xlane.f32.xlu0 %v391
        %v449 = vpop.xlane.xlu0 %448
        %450 = vadd.xlane.f32.xlu0 %v392
        %v451 = vpop.xlane.xlu0 %450
        %452 = vadd.xlane.f32.xlu0 %v393
        %v453 = vpop.xlane.xlu0 %452
        %454 = vadd.xlane.f32.xlu0 %v394
        %v455 = vpop.xlane.xlu0 %454
        %456 = vadd.xlane.f32.xlu0 %v395
        %v457 = vpop.xlane.xlu0 %456
        %458 = vadd.xlane.f32.xlu0 %v396
        %v459 = vpop.xlane.xlu0 %458
        %460 = vadd.xlane.f32.xlu0 %v397
        %v461 = vpop.xlane.xlu0 %460
        %462 = vxpose.xlu0.b32.start [1/16] %v399, 128
        %463 = vxpose.xlu0.b32.cont [2/16] %v401, 128
        %464 = vxpose.xlu0.b32.cont [3/16] %v403, 128
        %465 = vxpose.xlu0.b32.cont [4/16] %v405, 128
        %466 = vxpose.xlu0.b32.cont [5/16] %v407, 128
        %467 = vxpose.xlu0.b32.cont [6/16] %v409, 128
        %468 = vxpose.xlu0.b32.cont [7/16] %v411, 128
        %469 = vxpose.xlu0.b32.cont [8/16] %v413, 128
        %470 = vxpose.xlu0.b32.cont [9/16] %v415, 128
        %471 = vxpose.xlu0.b32.cont [10/16] %v417, 128
        %472 = vxpose.xlu0.b32.cont [11/16] %v419, 128
        %473 = vxpose.xlu0.b32.cont [12/16] %v421, 128
        %474 = vxpose.xlu0.b32.cont [13/16] %v423, 128
        %475 = vxpose.xlu0.b32.cont [14/16] %v425, 128
        %476 = vxpose.xlu0.b32.cont [15/16] %v427, 128
        %477 = vxpose.xlu0.b32.end [16/16] %v429, 128
        %v478 = vpop.trf.xlu0
        %v479 = vpop.trf.xlu0
        %v480 = vpop.trf.xlu0
        %v481 = vpop.trf.xlu0
        %v482 = vpop.trf.xlu0
        %v483 = vpop.trf.xlu0
        %v484 = vpop.trf.xlu0
        %v485 = vpop.trf.xlu0
        %v486 = vpop.trf.xlu0
        %v487 = vpop.trf.xlu0
        %v488 = vpop.trf.xlu0
        %v489 = vpop.trf.xlu0
        %v490 = vpop.trf.xlu0
        %v491 = vpop.trf.xlu0
        %v492 = vpop.trf.xlu0
        %v493 = vpop.trf.xlu0
        %494 = vxpose.xlu0.b32.start [1/16] %v431, 128
        %495 = vxpose.xlu0.b32.cont [2/16] %v433, 128
        %496 = vxpose.xlu0.b32.cont [3/16] %v435, 128
        %497 = vxpose.xlu0.b32.cont [4/16] %v437, 128
        %498 = vxpose.xlu0.b32.cont [5/16] %v439, 128
        %499 = vxpose.xlu0.b32.cont [6/16] %v441, 128
        %500 = vxpose.xlu0.b32.cont [7/16] %v443, 128
        %501 = vxpose.xlu0.b32.cont [8/16] %v445, 128
        %502 = vxpose.xlu0.b32.cont [9/16] %v447, 128
        %503 = vxpose.xlu0.b32.cont [10/16] %v449, 128
        %504 = vxpose.xlu0.b32.cont [11/16] %v451, 128
        %505 = vxpose.xlu0.b32.cont [12/16] %v453, 128
        %506 = vxpose.xlu0.b32.cont [13/16] %v455, 128
        %507 = vxpose.xlu0.b32.cont [14/16] %v457, 128
        %508 = vxpose.xlu0.b32.cont [15/16] %v459, 128
        %509 = vxpose.xlu0.b32.end [16/16] %v461, 128
        %v510 = vpop.trf.xlu0
        %v511 = vpop.trf.xlu0
        %v512 = vpop.trf.xlu0
        %v513 = vpop.trf.xlu0
        %v514 = vpop.trf.xlu0
        %v515 = vpop.trf.xlu0
        %v516 = vpop.trf.xlu0
        %v517 = vpop.trf.xlu0
        %v518 = vpop.trf.xlu0
        %v519 = vpop.trf.xlu0
        %v520 = vpop.trf.xlu0
        %v521 = vpop.trf.xlu0
        %v522 = vpop.trf.xlu0
        %v523 = vpop.trf.xlu0
        %v524 = vpop.trf.xlu0
        %v525 = vpop.trf.xlu0
        %v526 = vld [vmem:[#allocation7] sm:$0xff]
        %v527 = vld [vmem:[#allocation7 + $0x8] sm:$0xff]
        %v528 = vld [vmem:[#allocation7 + $0x10] sm:$0xff]
        %v529 = vld [vmem:[#allocation7 + $0x18] sm:$0xff]
        %v530 = vld [vmem:[#allocation7 + $0x20] sm:$0xff]
        %v531 = vld [vmem:[#allocation7 + $0x28] sm:$0xff]
        %v532 = vld [vmem:[#allocation7 + $0x30] sm:$0xff]
        %v533 = vld [vmem:[#allocation7 + $0x38] sm:$0xff]
        %v534 = vld [vmem:[#allocation7 + $0x40] sm:$0xff]
        %v535 = vld [vmem:[#allocation7 + $0x48] sm:$0xff]
        %v536 = vld [vmem:[#allocation7 + $0x50] sm:$0xff]
        %v537 = vld [vmem:[#allocation7 + $0x58] sm:$0xff]
        %v538 = vld [vmem:[#allocation7 + $0x60] sm:$0xff]
        %v539 = vld [vmem:[#allocation7 + $0x68] sm:$0xff]
        %v540 = vld [vmem:[#allocation7 + $0x70] sm:$0xff]
        %v541 = vld [vmem:[#allocation7 + $0x78] sm:$0xff]
        %vm542 = vnez %v526
        %vm543 = vnez %v527
        %vm544 = vnez %v528
        %vm545 = vnez %v529
        %vm546 = vnez %v530
        %vm547 = vnez %v531
        %vm548 = vnez %v532
        %vm549 = vnez %v533
        %vm550 = vnez %v534
        %vm551 = vnez %v535
        %vm552 = vnez %v536
        %vm553 = vnez %v537
        %vm554 = vnez %v538
        %vm555 = vnez %v539
        %vm556 = vnez %v540
        %vm557 = vnez %v541
        %559 = vset.pattern.permute.xlu0 0
        %560 = vperm.xlu0 %559, %v333
        %v561 = vpop.permute.xlu0 %560
        %564 = vset.pattern.permute.xlu0 0
        %565 = vperm.xlu0 %564, %v334
        %v566 = vpop.permute.xlu0 %565
        %569 = vset.pattern.permute.xlu0 0
        %570 = vperm.xlu0 %569, %v335
        %v571 = vpop.permute.xlu0 %570
        %574 = vset.pattern.permute.xlu0 0
        %575 = vperm.xlu0 %574, %v336
        %v576 = vpop.permute.xlu0 %575
        %579 = vset.pattern.permute.xlu0 0
        %580 = vperm.xlu0 %579, %v337
        %v581 = vpop.permute.xlu0 %580
        %584 = vset.pattern.permute.xlu0 0
        %585 = vperm.xlu0 %584, %v338
        %v586 = vpop.permute.xlu0 %585
        %589 = vset.pattern.permute.xlu0 0
        %590 = vperm.xlu0 %589, %v339
        %v591 = vpop.permute.xlu0 %590
        %594 = vset.pattern.permute.xlu0 0
        %595 = vperm.xlu0 %594, %v340
        %v596 = vpop.permute.xlu0 %595
        %599 = vset.pattern.permute.xlu0 0
        %600 = vperm.xlu0 %599, %v341
        %v601 = vpop.permute.xlu0 %600
        %604 = vset.pattern.permute.xlu0 0
        %605 = vperm.xlu0 %604, %v342
        %v606 = vpop.permute.xlu0 %605
        %609 = vset.pattern.permute.xlu0 0
        %610 = vperm.xlu0 %609, %v343
        %v611 = vpop.permute.xlu0 %610
        %614 = vset.pattern.permute.xlu0 0
        %615 = vperm.xlu0 %614, %v344
        %v616 = vpop.permute.xlu0 %615
        %619 = vset.pattern.permute.xlu0 0
        %620 = vperm.xlu0 %619, %v345
        %v621 = vpop.permute.xlu0 %620
        %624 = vset.pattern.permute.xlu0 0
        %625 = vperm.xlu0 %624, %v346
        %v626 = vpop.permute.xlu0 %625
        %629 = vset.pattern.permute.xlu0 0
        %630 = vperm.xlu0 %629, %v347
        %v631 = vpop.permute.xlu0 %630
        %634 = vset.pattern.permute.xlu0 0
        %635 = vperm.xlu0 %634, %v348
        %v636 = vpop.permute.xlu0 %635
        %639 = vset.pattern.permute.xlu0 0
        %640 = vperm.xlu0 %639, %v349
        %v641 = vpop.permute.xlu0 %640
        %644 = vset.pattern.permute.xlu0 0
        %645 = vperm.xlu0 %644, %v350
        %v646 = vpop.permute.xlu0 %645
        %649 = vset.pattern.permute.xlu0 0
        %650 = vperm.xlu0 %649, %v351
        %v651 = vpop.permute.xlu0 %650
        %654 = vset.pattern.permute.xlu0 0
        %655 = vperm.xlu0 %654, %v352
        %v656 = vpop.permute.xlu0 %655
        %659 = vset.pattern.permute.xlu0 0
        %660 = vperm.xlu0 %659, %v353
        %v661 = vpop.permute.xlu0 %660
        %664 = vset.pattern.permute.xlu0 0
        %665 = vperm.xlu0 %664, %v354
        %v666 = vpop.permute.xlu0 %665
        %669 = vset.pattern.permute.xlu0 0
        %670 = vperm.xlu0 %669, %v355
        %v671 = vpop.permute.xlu0 %670
        %674 = vset.pattern.permute.xlu0 0
        %675 = vperm.xlu0 %674, %v356
        %v676 = vpop.permute.xlu0 %675
        %679 = vset.pattern.permute.xlu0 0
        %680 = vperm.xlu0 %679, %v357
        %v681 = vpop.permute.xlu0 %680
        %684 = vset.pattern.permute.xlu0 0
        %685 = vperm.xlu0 %684, %v358
        %v686 = vpop.permute.xlu0 %685
        %689 = vset.pattern.permute.xlu0 0
        %690 = vperm.xlu0 %689, %v359
        %v691 = vpop.permute.xlu0 %690
        %694 = vset.pattern.permute.xlu0 0
        %695 = vperm.xlu0 %694, %v360
        %v696 = vpop.permute.xlu0 %695
        %699 = vset.pattern.permute.xlu0 0
        %700 = vperm.xlu0 %699, %v361
        %v701 = vpop.permute.xlu0 %700
        %704 = vset.pattern.permute.xlu0 0
        %705 = vperm.xlu0 %704, %v362
        %v706 = vpop.permute.xlu0 %705
        %709 = vset.pattern.permute.xlu0 0
        %710 = vperm.xlu0 %709, %v363
        %v711 = vpop.permute.xlu0 %710
        %714 = vset.pattern.permute.xlu0 0
        %715 = vperm.xlu0 %714, %v364
        %v716 = vpop.permute.xlu0 %715
        %v718 = vperm.slane %v478, 0
        %v719 = vperm.slane %v510, 0
        %v720 = vadd.f32 %v561, %v718
        %v721 = vadd.f32 %v561, %v719
        %v722 = vadd.f32 %v566, %v718
        %v723 = vadd.f32 %v566, %v719
        %v724 = vadd.f32 %v571, %v718
        %v725 = vadd.f32 %v571, %v719
        %v726 = vadd.f32 %v576, %v718
        %v727 = vadd.f32 %v576, %v719
        %v728 = vadd.f32 %v581, %v718
        %v729 = vadd.f32 %v581, %v719
        %v730 = vadd.f32 %v586, %v718
        %v731 = vadd.f32 %v586, %v719
        %v732 = vadd.f32 %v591, %v718
        %v733 = vadd.f32 %v591, %v719
        %v734 = vadd.f32 %v596, %v718
        %v735 = vadd.f32 %v596, %v719
        %v736 = vadd.f32 %v601, %v718
        %v737 = vadd.f32 %v601, %v719
        %v738 = vadd.f32 %v606, %v718
        %v739 = vadd.f32 %v606, %v719
        %v740 = vadd.f32 %v611, %v718
        %v741 = vadd.f32 %v611, %v719
        %v742 = vadd.f32 %v616, %v718
        %v743 = vadd.f32 %v616, %v719
        %v744 = vadd.f32 %v621, %v718
        %v745 = vadd.f32 %v621, %v719
        %v746 = vadd.f32 %v626, %v718
        %v747 = vadd.f32 %v626, %v719
        %v748 = vadd.f32 %v631, %v718
        %v749 = vadd.f32 %v631, %v719
        %v750 = vadd.f32 %v636, %v718
        %v751 = vadd.f32 %v636, %v719
        %v752 = vadd.f32 %v641, %v718
        %v753 = vadd.f32 %v641, %v719
        %v754 = vadd.f32 %v646, %v718
        %v755 = vadd.f32 %v646, %v719
        %v756 = vadd.f32 %v651, %v718
        %v757 = vadd.f32 %v651, %v719
        %v758 = vadd.f32 %v656, %v718
        %v759 = vadd.f32 %v656, %v719
        %v760 = vadd.f32 %v661, %v718
        %v761 = vadd.f32 %v661, %v719
        %v762 = vadd.f32 %v666, %v718
        %v763 = vadd.f32 %v666, %v719
        %v764 = vadd.f32 %v671, %v718
        %v765 = vadd.f32 %v671, %v719
        %v766 = vadd.f32 %v676, %v718
        %v767 = vadd.f32 %v676, %v719
        %v768 = vadd.f32 %v681, %v718
        %v769 = vadd.f32 %v681, %v719
        %v770 = vadd.f32 %v686, %v718
        %v771 = vadd.f32 %v686, %v719
        %v772 = vadd.f32 %v691, %v718
        %v773 = vadd.f32 %v691, %v719
        %v774 = vadd.f32 %v696, %v718
        %v775 = vadd.f32 %v696, %v719
        %v776 = vadd.f32 %v701, %v718
        %v777 = vadd.f32 %v701, %v719
        %v778 = vadd.f32 %v706, %v718
        %v779 = vadd.f32 %v706, %v719
        %v780 = vadd.f32 %v711, %v718
        %v781 = vadd.f32 %v711, %v719
        %v782 = vadd.f32 %v716, %v718
        %v783 = vadd.f32 %v716, %v719
        %vm784 = vcmp.ge.f32.partialorder %v720, 0.0
        %vm785 = vcmp.ge.f32.partialorder %v721, 0.0
        %vm786 = vcmp.ge.f32.partialorder %v722, 0.0
        %vm787 = vcmp.ge.f32.partialorder %v723, 0.0
        %vm788 = vcmp.ge.f32.partialorder %v724, 0.0
        %vm789 = vcmp.ge.f32.partialorder %v725, 0.0
        %vm790 = vcmp.ge.f32.partialorder %v726, 0.0
        %vm791 = vcmp.ge.f32.partialorder %v727, 0.0
        %vm792 = vcmp.ge.f32.partialorder %v728, 0.0
        %vm793 = vcmp.ge.f32.partialorder %v729, 0.0
        %vm794 = vcmp.ge.f32.partialorder %v730, 0.0
        %vm795 = vcmp.ge.f32.partialorder %v731, 0.0
        %vm796 = vcmp.ge.f32.partialorder %v732, 0.0
        %vm797 = vcmp.ge.f32.partialorder %v733, 0.0
        %vm798 = vcmp.ge.f32.partialorder %v734, 0.0
        %vm799 = vcmp.ge.f32.partialorder %v735, 0.0
        %vm800 = vcmp.ge.f32.partialorder %v736, 0.0
        %vm801 = vcmp.ge.f32.partialorder %v737, 0.0
        %vm802 = vcmp.ge.f32.partialorder %v738, 0.0
        %vm803 = vcmp.ge.f32.partialorder %v739, 0.0
        %vm804 = vcmp.ge.f32.partialorder %v740, 0.0
        %vm805 = vcmp.ge.f32.partialorder %v741, 0.0
        %vm806 = vcmp.ge.f32.partialorder %v742, 0.0
        %vm807 = vcmp.ge.f32.partialorder %v743, 0.0
        %vm808 = vcmp.ge.f32.partialorder %v744, 0.0
        %vm809 = vcmp.ge.f32.partialorder %v745, 0.0
        %vm810 = vcmp.ge.f32.partialorder %v746, 0.0
        %vm811 = vcmp.ge.f32.partialorder %v747, 0.0
        %vm812 = vcmp.ge.f32.partialorder %v748, 0.0
        %vm813 = vcmp.ge.f32.partialorder %v749, 0.0
        %vm814 = vcmp.ge.f32.partialorder %v750, 0.0
        %vm815 = vcmp.ge.f32.partialorder %v751, 0.0
        %vm816 = vcmp.ge.f32.partialorder %v752, 0.0
        %vm817 = vcmp.ge.f32.partialorder %v753, 0.0
        %vm818 = vcmp.ge.f32.partialorder %v754, 0.0
        %vm819 = vcmp.ge.f32.partialorder %v755, 0.0
        %vm820 = vcmp.ge.f32.partialorder %v756, 0.0
        %vm821 = vcmp.ge.f32.partialorder %v757, 0.0
        %vm822 = vcmp.ge.f32.partialorder %v758, 0.0
        %vm823 = vcmp.ge.f32.partialorder %v759, 0.0
        %vm824 = vcmp.ge.f32.partialorder %v760, 0.0
        %vm825 = vcmp.ge.f32.partialorder %v761, 0.0
        %vm826 = vcmp.ge.f32.partialorder %v762, 0.0
        %vm827 = vcmp.ge.f32.partialorder %v763, 0.0
        %vm828 = vcmp.ge.f32.partialorder %v764, 0.0
        %vm829 = vcmp.ge.f32.partialorder %v765, 0.0
        %vm830 = vcmp.ge.f32.partialorder %v766, 0.0
        %vm831 = vcmp.ge.f32.partialorder %v767, 0.0
        %vm832 = vcmp.ge.f32.partialorder %v768, 0.0
        %vm833 = vcmp.ge.f32.partialorder %v769, 0.0
        %vm834 = vcmp.ge.f32.partialorder %v770, 0.0
        %vm835 = vcmp.ge.f32.partialorder %v771, 0.0
        %vm836 = vcmp.ge.f32.partialorder %v772, 0.0
        %vm837 = vcmp.ge.f32.partialorder %v773, 0.0
        %vm838 = vcmp.ge.f32.partialorder %v774, 0.0
        %vm839 = vcmp.ge.f32.partialorder %v775, 0.0
        %vm840 = vcmp.ge.f32.partialorder %v776, 0.0
        %vm841 = vcmp.ge.f32.partialorder %v777, 0.0
        %vm842 = vcmp.ge.f32.partialorder %v778, 0.0
        %vm843 = vcmp.ge.f32.partialorder %v779, 0.0
        %vm844 = vcmp.ge.f32.partialorder %v780, 0.0
        %vm845 = vcmp.ge.f32.partialorder %v781, 0.0
        %vm846 = vcmp.ge.f32.partialorder %v782, 0.0
        %vm847 = vcmp.ge.f32.partialorder %v783, 0.0
        %v848 = vmul.f32 %v720, 0.01
        %v849 = vmul.f32 %v721, 0.01
        %v850 = vmul.f32 %v722, 0.01
        %v851 = vmul.f32 %v723, 0.01
        %v852 = vmul.f32 %v724, 0.01
        %v853 = vmul.f32 %v725, 0.01
        %v854 = vmul.f32 %v726, 0.01
        %v855 = vmul.f32 %v727, 0.01
        %v856 = vmul.f32 %v728, 0.01
        %v857 = vmul.f32 %v729, 0.01
        %v858 = vmul.f32 %v730, 0.01
        %v859 = vmul.f32 %v731, 0.01
        %v860 = vmul.f32 %v732, 0.01
        %v861 = vmul.f32 %v733, 0.01
        %v862 = vmul.f32 %v734, 0.01
        %v863 = vmul.f32 %v735, 0.01
        %v864 = vmul.f32 %v736, 0.01
        %v865 = vmul.f32 %v737, 0.01
        %v866 = vmul.f32 %v738, 0.01
        %v867 = vmul.f32 %v739, 0.01
        %v868 = vmul.f32 %v740, 0.01
        %v869 = vmul.f32 %v741, 0.01
        %v870 = vmul.f32 %v742, 0.01
        %v871 = vmul.f32 %v743, 0.01
        %v872 = vmul.f32 %v744, 0.01
        %v873 = vmul.f32 %v745, 0.01
        %v874 = vmul.f32 %v746, 0.01
        %v875 = vmul.f32 %v747, 0.01
        %v876 = vmul.f32 %v748, 0.01
        %v877 = vmul.f32 %v749, 0.01
        %v878 = vmul.f32 %v750, 0.01
        %v879 = vmul.f32 %v751, 0.01
        %v880 = vmul.f32 %v752, 0.01
        %v881 = vmul.f32 %v753, 0.01
        %v882 = vmul.f32 %v754, 0.01
        %v883 = vmul.f32 %v755, 0.01
        %v884 = vmul.f32 %v756, 0.01
        %v885 = vmul.f32 %v757, 0.01
        %v886 = vmul.f32 %v758, 0.01
        %v887 = vmul.f32 %v759, 0.01
        %v888 = vmul.f32 %v760, 0.01
        %v889 = vmul.f32 %v761, 0.01
        %v890 = vmul.f32 %v762, 0.01
        %v891 = vmul.f32 %v763, 0.01
        %v892 = vmul.f32 %v764, 0.01
        %v893 = vmul.f32 %v765, 0.01
        %v894 = vmul.f32 %v766, 0.01
        %v895 = vmul.f32 %v767, 0.01
        %v896 = vmul.f32 %v768, 0.01
        %v897 = vmul.f32 %v769, 0.01
        %v898 = vmul.f32 %v770, 0.01
        %v899 = vmul.f32 %v771, 0.01
        %v900 = vmul.f32 %v772, 0.01
        %v901 = vmul.f32 %v773, 0.01
        %v902 = vmul.f32 %v774, 0.01
        %v903 = vmul.f32 %v775, 0.01
        %v904 = vmul.f32 %v776, 0.01
        %v905 = vmul.f32 %v777, 0.01
        %v906 = vmul.f32 %v778, 0.01
        %v907 = vmul.f32 %v779, 0.01
        %v908 = vmul.f32 %v780, 0.01
        %v909 = vmul.f32 %v781, 0.01
        %v910 = vmul.f32 %v782, 0.01
        %v911 = vmul.f32 %v783, 0.01
        %v912 = vsel %vm784, %v720, %v848
        %v913 = vsel %vm785, %v721, %v849
        %v914 = vsel %vm786, %v722, %v850
        %v915 = vsel %vm787, %v723, %v851
        %v916 = vsel %vm788, %v724, %v852
        %v917 = vsel %vm789, %v725, %v853
        %v918 = vsel %vm790, %v726, %v854
        %v919 = vsel %vm791, %v727, %v855
        %v920 = vsel %vm792, %v728, %v856
        %v921 = vsel %vm793, %v729, %v857
        %v922 = vsel %vm794, %v730, %v858
        %v923 = vsel %vm795, %v731, %v859
        %v924 = vsel %vm796, %v732, %v860
        %v925 = vsel %vm797, %v733, %v861
        %v926 = vsel %vm798, %v734, %v862
        %v927 = vsel %vm799, %v735, %v863
        %v928 = vsel %vm800, %v736, %v864
        %v929 = vsel %vm801, %v737, %v865
        %v930 = vsel %vm802, %v738, %v866
        %v931 = vsel %vm803, %v739, %v867
        %v932 = vsel %vm804, %v740, %v868
        %v933 = vsel %vm805, %v741, %v869
        %v934 = vsel %vm806, %v742, %v870
        %v935 = vsel %vm807, %v743, %v871
        %v936 = vsel %vm808, %v744, %v872
        %v937 = vsel %vm809, %v745, %v873
        %v938 = vsel %vm810, %v746, %v874
        %v939 = vsel %vm811, %v747, %v875
        %v940 = vsel %vm812, %v748, %v876
        %v941 = vsel %vm813, %v749, %v877
        %v942 = vsel %vm814, %v750, %v878
        %v943 = vsel %vm815, %v751, %v879
        %v944 = vsel %vm816, %v752, %v880
        %v945 = vsel %vm817, %v753, %v881
        %v946 = vsel %vm818, %v754, %v882
        %v947 = vsel %vm819, %v755, %v883
        %v948 = vsel %vm820, %v756, %v884
        %v949 = vsel %vm821, %v757, %v885
        %v950 = vsel %vm822, %v758, %v886
        %v951 = vsel %vm823, %v759, %v887
        %v952 = vsel %vm824, %v760, %v888
        %v953 = vsel %vm825, %v761, %v889
        %v954 = vsel %vm826, %v762, %v890
        %v955 = vsel %vm827, %v763, %v891
        %v956 = vsel %vm828, %v764, %v892
        %v957 = vsel %vm829, %v765, %v893
        %v958 = vsel %vm830, %v766, %v894
        %v959 = vsel %vm831, %v767, %v895
        %v960 = vsel %vm832, %v768, %v896
        %v961 = vsel %vm833, %v769, %v897
        %v962 = vsel %vm834, %v770, %v898
        %v963 = vsel %vm835, %v771, %v899
        %v964 = vsel %vm836, %v772, %v900
        %v965 = vsel %vm837, %v773, %v901
        %v966 = vsel %vm838, %v774, %v902
        %v967 = vsel %vm839, %v775, %v903
        %v968 = vsel %vm840, %v776, %v904
        %v969 = vsel %vm841, %v777, %v905
        %v970 = vsel %vm842, %v778, %v906
        %v971 = vsel %vm843, %v779, %v907
        %v972 = vsel %vm844, %v780, %v908
        %v973 = vsel %vm845, %v781, %v909
        %v974 = vsel %vm846, %v782, %v910
        %v975 = vsel %vm847, %v783, %v911
        %v976 = vsel %vm542, 16843009, 0
        %v977 = vsel %vm543, 16843009, 0
        %v978 = vsel %vm544, 16843009, 0
        %v979 = vsel %vm545, 16843009, 0
        %v980 = vsel %vm546, 16843009, 0
        %v981 = vsel %vm547, 16843009, 0
        %v982 = vsel %vm548, 16843009, 0
        %v983 = vsel %vm549, 16843009, 0
        %v984 = vsel %vm550, 16843009, 0
        %v985 = vsel %vm551, 16843009, 0
        %v986 = vsel %vm552, 16843009, 0
        %v987 = vsel %vm553, 16843009, 0
        %v988 = vsel %vm554, 16843009, 0
        %v989 = vsel %vm555, 16843009, 0
        %v990 = vsel %vm556, 16843009, 0
        %v991 = vsel %vm557, 16843009, 0
        %v992 = vunpack.c.0.s8 %v976
        %v993 = vunpack.c.0.s8 %v977
        %v994 = vunpack.c.1.s8 %v976
        %v995 = vunpack.c.1.s8 %v977
        %v996 = vunpack.c.2.s8 %v976
        %v997 = vunpack.c.2.s8 %v977
        %v998 = vunpack.c.3.s8 %v976
        %v999 = vunpack.c.3.s8 %v977
        %v1000 = vunpack.c.0.s8 %v978
        %v1001 = vunpack.c.0.s8 %v979
        %v1002 = vunpack.c.1.s8 %v978
        %v1003 = vunpack.c.1.s8 %v979
        %v1004 = vunpack.c.2.s8 %v978
        %v1005 = vunpack.c.2.s8 %v979
        %v1006 = vunpack.c.3.s8 %v978
        %v1007 = vunpack.c.3.s8 %v979
        %v1008 = vunpack.c.0.s8 %v980
        %v1009 = vunpack.c.0.s8 %v981
        %v1010 = vunpack.c.1.s8 %v980
        %v1011 = vunpack.c.1.s8 %v981
        %v1012 = vunpack.c.2.s8 %v980
        %v1013 = vunpack.c.2.s8 %v981
        %v1014 = vunpack.c.3.s8 %v980
        %v1015 = vunpack.c.3.s8 %v981
        %v1016 = vunpack.c.0.s8 %v982
        %v1017 = vunpack.c.0.s8 %v983
        %v1018 = vunpack.c.1.s8 %v982
        %v1019 = vunpack.c.1.s8 %v983
        %v1020 = vunpack.c.2.s8 %v982
        %v1021 = vunpack.c.2.s8 %v983
        %v1022 = vunpack.c.3.s8 %v982
        %v1023 = vunpack.c.3.s8 %v983
        %v1024 = vunpack.c.0.s8 %v984
        %v1025 = vunpack.c.0.s8 %v985
        %v1026 = vunpack.c.1.s8 %v984
        %v1027 = vunpack.c.1.s8 %v985
        %v1028 = vunpack.c.2.s8 %v984
        %v1029 = vunpack.c.2.s8 %v985
        %v1030 = vunpack.c.3.s8 %v984
        %v1031 = vunpack.c.3.s8 %v985
        %v1032 = vunpack.c.0.s8 %v986
        %v1033 = vunpack.c.0.s8 %v987
        %v1034 = vunpack.c.1.s8 %v986
        %v1035 = vunpack.c.1.s8 %v987
        %v1036 = vunpack.c.2.s8 %v986
        %v1037 = vunpack.c.2.s8 %v987
        %v1038 = vunpack.c.3.s8 %v986
        %v1039 = vunpack.c.3.s8 %v987
        %v1040 = vunpack.c.0.s8 %v988
        %v1041 = vunpack.c.0.s8 %v989
        %v1042 = vunpack.c.1.s8 %v988
        %v1043 = vunpack.c.1.s8 %v989
        %v1044 = vunpack.c.2.s8 %v988
        %v1045 = vunpack.c.2.s8 %v989
        %v1046 = vunpack.c.3.s8 %v988
        %v1047 = vunpack.c.3.s8 %v989
        %v1048 = vunpack.c.0.s8 %v990
        %v1049 = vunpack.c.0.s8 %v991
        %v1050 = vunpack.c.1.s8 %v990
        %v1051 = vunpack.c.1.s8 %v991
        %v1052 = vunpack.c.2.s8 %v990
        %v1053 = vunpack.c.2.s8 %v991
        %v1054 = vunpack.c.3.s8 %v990
        %v1055 = vunpack.c.3.s8 %v991
        %v1056 = vpack.c.b16 %v993, %v992
        %v1057 = vpack.c.b8 %v1056, %v1056
        %v1058 = vpack.c.b16 %v995, %v994
        %v1059 = vpack.c.b8 %v1058, %v1058
        %v1060 = vpack.c.b16 %v997, %v996
        %v1061 = vpack.c.b8 %v1060, %v1060
        %v1062 = vpack.c.b16 %v999, %v998
        %v1063 = vpack.c.b8 %v1062, %v1062
        %v1064 = vpack.c.b16 %v1001, %v1000
        %v1065 = vpack.c.b8 %v1064, %v1064
        %v1066 = vpack.c.b16 %v1003, %v1002
        %v1067 = vpack.c.b8 %v1066, %v1066
        %v1068 = vpack.c.b16 %v1005, %v1004
        %v1069 = vpack.c.b8 %v1068, %v1068
        %v1070 = vpack.c.b16 %v1007, %v1006
        %v1071 = vpack.c.b8 %v1070, %v1070
        %v1072 = vpack.c.b16 %v1009, %v1008
        %v1073 = vpack.c.b8 %v1072, %v1072
        %v1074 = vpack.c.b16 %v1011, %v1010
        %v1075 = vpack.c.b8 %v1074, %v1074
        %v1076 = vpack.c.b16 %v1013, %v1012
        %v1077 = vpack.c.b8 %v1076, %v1076
        %v1078 = vpack.c.b16 %v1015, %v1014
        %v1079 = vpack.c.b8 %v1078, %v1078
        %v1080 = vpack.c.b16 %v1017, %v1016
        %v1081 = vpack.c.b8 %v1080, %v1080
        %v1082 = vpack.c.b16 %v1019, %v1018
        %v1083 = vpack.c.b8 %v1082, %v1082
        %v1084 = vpack.c.b16 %v1021, %v1020
        %v1085 = vpack.c.b8 %v1084, %v1084
        %v1086 = vpack.c.b16 %v1023, %v1022
        %v1087 = vpack.c.b8 %v1086, %v1086
        %v1088 = vpack.c.b16 %v1025, %v1024
        %v1089 = vpack.c.b8 %v1088, %v1088
        %v1090 = vpack.c.b16 %v1027, %v1026
        %v1091 = vpack.c.b8 %v1090, %v1090
        %v1092 = vpack.c.b16 %v1029, %v1028
        %v1093 = vpack.c.b8 %v1092, %v1092
        %v1094 = vpack.c.b16 %v1031, %v1030
        %v1095 = vpack.c.b8 %v1094, %v1094
        %v1096 = vpack.c.b16 %v1033, %v1032
        %v1097 = vpack.c.b8 %v1096, %v1096
        %v1098 = vpack.c.b16 %v1035, %v1034
        %v1099 = vpack.c.b8 %v1098, %v1098
        %v1100 = vpack.c.b16 %v1037, %v1036
        %v1101 = vpack.c.b8 %v1100, %v1100
        %v1102 = vpack.c.b16 %v1039, %v1038
        %v1103 = vpack.c.b8 %v1102, %v1102
        %v1104 = vpack.c.b16 %v1041, %v1040
        %v1105 = vpack.c.b8 %v1104, %v1104
        %v1106 = vpack.c.b16 %v1043, %v1042
        %v1107 = vpack.c.b8 %v1106, %v1106
        %v1108 = vpack.c.b16 %v1045, %v1044
        %v1109 = vpack.c.b8 %v1108, %v1108
        %v1110 = vpack.c.b16 %v1047, %v1046
        %v1111 = vpack.c.b8 %v1110, %v1110
        %v1112 = vpack.c.b16 %v1049, %v1048
        %v1113 = vpack.c.b8 %v1112, %v1112
        %v1114 = vpack.c.b16 %v1051, %v1050
        %v1115 = vpack.c.b8 %v1114, %v1114
        %v1116 = vpack.c.b16 %v1053, %v1052
        %v1117 = vpack.c.b8 %v1116, %v1116
        %v1118 = vpack.c.b16 %v1055, %v1054
        %v1119 = vpack.c.b8 %v1118, %v1118
        %vm1120 = vnez %v1057
        %vm1121 = vnez %v1059
        %vm1122 = vnez %v1061
        %vm1123 = vnez %v1063
        %vm1124 = vnez %v1065
        %vm1125 = vnez %v1067
        %vm1126 = vnez %v1069
        %vm1127 = vnez %v1071
        %vm1128 = vnez %v1073
        %vm1129 = vnez %v1075
        %vm1130 = vnez %v1077
        %vm1131 = vnez %v1079
        %vm1132 = vnez %v1081
        %vm1133 = vnez %v1083
        %vm1134 = vnez %v1085
        %vm1135 = vnez %v1087
        %vm1136 = vnez %v1089
        %vm1137 = vnez %v1091
        %vm1138 = vnez %v1093
        %vm1139 = vnez %v1095
        %vm1140 = vnez %v1097
        %vm1141 = vnez %v1099
        %vm1142 = vnez %v1101
        %vm1143 = vnez %v1103
        %vm1144 = vnez %v1105
        %vm1145 = vnez %v1107
        %vm1146 = vnez %v1109
        %vm1147 = vnez %v1111
        %vm1148 = vnez %v1113
        %vm1149 = vnez %v1115
        %vm1150 = vnez %v1117
        %vm1151 = vnez %v1119
        %v1152 = vsel %vm1120, 16843009, 0
        %v1153 = vsel %vm1121, 16843009, 0
        %v1154 = vsel %vm1122, 16843009, 0
        %v1155 = vsel %vm1123, 16843009, 0
        %v1156 = vsel %vm1124, 16843009, 0
        %v1157 = vsel %vm1125, 16843009, 0
        %v1158 = vsel %vm1126, 16843009, 0
        %v1159 = vsel %vm1127, 16843009, 0
        %v1160 = vsel %vm1128, 16843009, 0
        %v1161 = vsel %vm1129, 16843009, 0
        %v1162 = vsel %vm1130, 16843009, 0
        %v1163 = vsel %vm1131, 16843009, 0
        %v1164 = vsel %vm1132, 16843009, 0
        %v1165 = vsel %vm1133, 16843009, 0
        %v1166 = vsel %vm1134, 16843009, 0
        %v1167 = vsel %vm1135, 16843009, 0
        %v1168 = vsel %vm1136, 16843009, 0
        %v1169 = vsel %vm1137, 16843009, 0
        %v1170 = vsel %vm1138, 16843009, 0
        %v1171 = vsel %vm1139, 16843009, 0
        %v1172 = vsel %vm1140, 16843009, 0
        %v1173 = vsel %vm1141, 16843009, 0
        %v1174 = vsel %vm1142, 16843009, 0
        %v1175 = vsel %vm1143, 16843009, 0
        %v1176 = vsel %vm1144, 16843009, 0
        %v1177 = vsel %vm1145, 16843009, 0
        %v1178 = vsel %vm1146, 16843009, 0
        %v1179 = vsel %vm1147, 16843009, 0
        %v1180 = vsel %vm1148, 16843009, 0
        %v1181 = vsel %vm1149, 16843009, 0
        %v1182 = vsel %vm1150, 16843009, 0
        %v1183 = vsel %vm1151, 16843009, 0
        %v1184 = vunpack.c.0.s8 %v1152
        %v1185 = vunpack.c.1.s8 %v1152
        %v1186 = vunpack.c.0.s8 %v1153
        %v1187 = vunpack.c.1.s8 %v1153
        %v1188 = vunpack.c.0.s8 %v1154
        %v1189 = vunpack.c.1.s8 %v1154
        %v1190 = vunpack.c.0.s8 %v1155
        %v1191 = vunpack.c.1.s8 %v1155
        %v1192 = vunpack.c.0.s8 %v1156
        %v1193 = vunpack.c.1.s8 %v1156
        %v1194 = vunpack.c.0.s8 %v1157
        %v1195 = vunpack.c.1.s8 %v1157
        %v1196 = vunpack.c.0.s8 %v1158
        %v1197 = vunpack.c.1.s8 %v1158
        %v1198 = vunpack.c.0.s8 %v1159
        %v1199 = vunpack.c.1.s8 %v1159
        %v1200 = vunpack.c.0.s8 %v1160
        %v1201 = vunpack.c.1.s8 %v1160
        %v1202 = vunpack.c.0.s8 %v1161
        %v1203 = vunpack.c.1.s8 %v1161
        %v1204 = vunpack.c.0.s8 %v1162
        %v1205 = vunpack.c.1.s8 %v1162
        %v1206 = vunpack.c.0.s8 %v1163
        %v1207 = vunpack.c.1.s8 %v1163
        %v1208 = vunpack.c.0.s8 %v1164
        %v1209 = vunpack.c.1.s8 %v1164
        %v1210 = vunpack.c.0.s8 %v1165
        %v1211 = vunpack.c.1.s8 %v1165
        %v1212 = vunpack.c.0.s8 %v1166
        %v1213 = vunpack.c.1.s8 %v1166
        %v1214 = vunpack.c.0.s8 %v1167
        %v1215 = vunpack.c.1.s8 %v1167
        %v1216 = vunpack.c.0.s8 %v1168
        %v1217 = vunpack.c.1.s8 %v1168
        %v1218 = vunpack.c.0.s8 %v1169
        %v1219 = vunpack.c.1.s8 %v1169
        %v1220 = vunpack.c.0.s8 %v1170
        %v1221 = vunpack.c.1.s8 %v1170
        %v1222 = vunpack.c.0.s8 %v1171
        %v1223 = vunpack.c.1.s8 %v1171
        %v1224 = vunpack.c.0.s8 %v1172
        %v1225 = vunpack.c.1.s8 %v1172
        %v1226 = vunpack.c.0.s8 %v1173
        %v1227 = vunpack.c.1.s8 %v1173
        %v1228 = vunpack.c.0.s8 %v1174
        %v1229 = vunpack.c.1.s8 %v1174
        %v1230 = vunpack.c.0.s8 %v1175
        %v1231 = vunpack.c.1.s8 %v1175
        %v1232 = vunpack.c.0.s8 %v1176
        %v1233 = vunpack.c.1.s8 %v1176
        %v1234 = vunpack.c.0.s8 %v1177
        %v1235 = vunpack.c.1.s8 %v1177
        %v1236 = vunpack.c.0.s8 %v1178
        %v1237 = vunpack.c.1.s8 %v1178
        %v1238 = vunpack.c.0.s8 %v1179
        %v1239 = vunpack.c.1.s8 %v1179
        %v1240 = vunpack.c.0.s8 %v1180
        %v1241 = vunpack.c.1.s8 %v1180
        %v1242 = vunpack.c.0.s8 %v1181
        %v1243 = vunpack.c.1.s8 %v1181
        %v1244 = vunpack.c.0.s8 %v1182
        %v1245 = vunpack.c.1.s8 %v1182
        %v1246 = vunpack.c.0.s8 %v1183
        %v1247 = vunpack.c.1.s8 %v1183
        %vm1248 = vcmp.ne.s32.totalorder %v1184, 0
        %vm1249 = vcmp.ne.s32.totalorder %v1185, 0
        %vm1250 = vcmp.ne.s32.totalorder %v1186, 0
        %vm1251 = vcmp.ne.s32.totalorder %v1187, 0
        %vm1252 = vcmp.ne.s32.totalorder %v1188, 0
        %vm1253 = vcmp.ne.s32.totalorder %v1189, 0
        %vm1254 = vcmp.ne.s32.totalorder %v1190, 0
        %vm1255 = vcmp.ne.s32.totalorder %v1191, 0
        %vm1256 = vcmp.ne.s32.totalorder %v1192, 0
        %vm1257 = vcmp.ne.s32.totalorder %v1193, 0
        %vm1258 = vcmp.ne.s32.totalorder %v1194, 0
        %vm1259 = vcmp.ne.s32.totalorder %v1195, 0
        %vm1260 = vcmp.ne.s32.totalorder %v1196, 0
        %vm1261 = vcmp.ne.s32.totalorder %v1197, 0
        %vm1262 = vcmp.ne.s32.totalorder %v1198, 0
        %vm1263 = vcmp.ne.s32.totalorder %v1199, 0
        %vm1264 = vcmp.ne.s32.totalorder %v1200, 0
        %vm1265 = vcmp.ne.s32.totalorder %v1201, 0
        %vm1266 = vcmp.ne.s32.totalorder %v1202, 0
        %vm1267 = vcmp.ne.s32.totalorder %v1203, 0
        %vm1268 = vcmp.ne.s32.totalorder %v1204, 0
        %vm1269 = vcmp.ne.s32.totalorder %v1205, 0
        %vm1270 = vcmp.ne.s32.totalorder %v1206, 0
        %vm1271 = vcmp.ne.s32.totalorder %v1207, 0
        %vm1272 = vcmp.ne.s32.totalorder %v1208, 0
        %vm1273 = vcmp.ne.s32.totalorder %v1209, 0
        %vm1274 = vcmp.ne.s32.totalorder %v1210, 0
        %vm1275 = vcmp.ne.s32.totalorder %v1211, 0
        %vm1276 = vcmp.ne.s32.totalorder %v1212, 0
        %vm1277 = vcmp.ne.s32.totalorder %v1213, 0
        %vm1278 = vcmp.ne.s32.totalorder %v1214, 0
        %vm1279 = vcmp.ne.s32.totalorder %v1215, 0
        %vm1280 = vcmp.ne.s32.totalorder %v1216, 0
        %vm1281 = vcmp.ne.s32.totalorder %v1217, 0
        %vm1282 = vcmp.ne.s32.totalorder %v1218, 0
        %vm1283 = vcmp.ne.s32.totalorder %v1219, 0
        %vm1284 = vcmp.ne.s32.totalorder %v1220, 0
        %vm1285 = vcmp.ne.s32.totalorder %v1221, 0
        %vm1286 = vcmp.ne.s32.totalorder %v1222, 0
        %vm1287 = vcmp.ne.s32.totalorder %v1223, 0
        %vm1288 = vcmp.ne.s32.totalorder %v1224, 0
        %vm1289 = vcmp.ne.s32.totalorder %v1225, 0
        %vm1290 = vcmp.ne.s32.totalorder %v1226, 0
        %vm1291 = vcmp.ne.s32.totalorder %v1227, 0
        %vm1292 = vcmp.ne.s32.totalorder %v1228, 0
        %vm1293 = vcmp.ne.s32.totalorder %v1229, 0
        %vm1294 = vcmp.ne.s32.totalorder %v1230, 0
        %vm1295 = vcmp.ne.s32.totalorder %v1231, 0
        %vm1296 = vcmp.ne.s32.totalorder %v1232, 0
        %vm1297 = vcmp.ne.s32.totalorder %v1233, 0
        %vm1298 = vcmp.ne.s32.totalorder %v1234, 0
        %vm1299 = vcmp.ne.s32.totalorder %v1235, 0
        %vm1300 = vcmp.ne.s32.totalorder %v1236, 0
        %vm1301 = vcmp.ne.s32.totalorder %v1237, 0
        %vm1302 = vcmp.ne.s32.totalorder %v1238, 0
        %vm1303 = vcmp.ne.s32.totalorder %v1239, 0
        %vm1304 = vcmp.ne.s32.totalorder %v1240, 0
        %vm1305 = vcmp.ne.s32.totalorder %v1241, 0
        %vm1306 = vcmp.ne.s32.totalorder %v1242, 0
        %vm1307 = vcmp.ne.s32.totalorder %v1243, 0
        %vm1308 = vcmp.ne.s32.totalorder %v1244, 0
        %vm1309 = vcmp.ne.s32.totalorder %v1245, 0
        %vm1310 = vcmp.ne.s32.totalorder %v1246, 0
        %vm1311 = vcmp.ne.s32.totalorder %v1247, 0
        %v1312 = vsel %vm1248, %v912, -1e+30
        %v1313 = vsel %vm1249, %v913, -1e+30
        %v1314 = vsel %vm1250, %v914, -1e+30
        %v1315 = vsel %vm1251, %v915, -1e+30
        %v1316 = vsel %vm1252, %v916, -1e+30
        %v1317 = vsel %vm1253, %v917, -1e+30
        %v1318 = vsel %vm1254, %v918, -1e+30
        %v1319 = vsel %vm1255, %v919, -1e+30
        %v1320 = vsel %vm1256, %v920, -1e+30
        %v1321 = vsel %vm1257, %v921, -1e+30
        %v1322 = vsel %vm1258, %v922, -1e+30
        %v1323 = vsel %vm1259, %v923, -1e+30
        %v1324 = vsel %vm1260, %v924, -1e+30
        %v1325 = vsel %vm1261, %v925, -1e+30
        %v1326 = vsel %vm1262, %v926, -1e+30
        %v1327 = vsel %vm1263, %v927, -1e+30
        %v1328 = vsel %vm1264, %v928, -1e+30
        %v1329 = vsel %vm1265, %v929, -1e+30
        %v1330 = vsel %vm1266, %v930, -1e+30
        %v1331 = vsel %vm1267, %v931, -1e+30
        %v1332 = vsel %vm1268, %v932, -1e+30
        %v1333 = vsel %vm1269, %v933, -1e+30
        %v1334 = vsel %vm1270, %v934, -1e+30
        %v1335 = vsel %vm1271, %v935, -1e+30
        %v1336 = vsel %vm1272, %v936, -1e+30
        %v1337 = vsel %vm1273, %v937, -1e+30
        %v1338 = vsel %vm1274, %v938, -1e+30
        %v1339 = vsel %vm1275, %v939, -1e+30
        %v1340 = vsel %vm1276, %v940, -1e+30
        %v1341 = vsel %vm1277, %v941, -1e+30
        %v1342 = vsel %vm1278, %v942, -1e+30
        %v1343 = vsel %vm1279, %v943, -1e+30
        %v1344 = vsel %vm1280, %v944, -1e+30
        %v1345 = vsel %vm1281, %v945, -1e+30
        %v1346 = vsel %vm1282, %v946, -1e+30
        %v1347 = vsel %vm1283, %v947, -1e+30
        %v1348 = vsel %vm1284, %v948, -1e+30
        %v1349 = vsel %vm1285, %v949, -1e+30
        %v1350 = vsel %vm1286, %v950, -1e+30
        %v1351 = vsel %vm1287, %v951, -1e+30
        %v1352 = vsel %vm1288, %v952, -1e+30
        %v1353 = vsel %vm1289, %v953, -1e+30
        %v1354 = vsel %vm1290, %v954, -1e+30
        %v1355 = vsel %vm1291, %v955, -1e+30
        %v1356 = vsel %vm1292, %v956, -1e+30
        %v1357 = vsel %vm1293, %v957, -1e+30
        %v1358 = vsel %vm1294, %v958, -1e+30
        %v1359 = vsel %vm1295, %v959, -1e+30
        %v1360 = vsel %vm1296, %v960, -1e+30
        %v1361 = vsel %vm1297, %v961, -1e+30
        %v1362 = vsel %vm1298, %v962, -1e+30
        %v1363 = vsel %vm1299, %v963, -1e+30
        %v1364 = vsel %vm1300, %v964, -1e+30
        %v1365 = vsel %vm1301, %v965, -1e+30
        %v1366 = vsel %vm1302, %v966, -1e+30
        %v1367 = vsel %vm1303, %v967, -1e+30
        %v1368 = vsel %vm1304, %v968, -1e+30
        %v1369 = vsel %vm1305, %v969, -1e+30
        %v1370 = vsel %vm1306, %v970, -1e+30
        %v1371 = vsel %vm1307, %v971, -1e+30
        %v1372 = vsel %vm1308, %v972, -1e+30
        %v1373 = vsel %vm1309, %v973, -1e+30
        %v1374 = vsel %vm1310, %v974, -1e+30
        %v1375 = vsel %vm1311, %v975, -1e+30
        %v1376 = vmax.f32 %v1312, %v1313
        %1377 = vmax.xlane.f32.xlu0 %v1376
        %v1378 = vpop.xlane.xlu0 %1377
        %v1379 = vmax.f32 %v1314, %v1315
        %1380 = vmax.xlane.f32.xlu0 %v1379
        %v1381 = vpop.xlane.xlu0 %1380
        %v1382 = vmax.f32 %v1316, %v1317
        %1383 = vmax.xlane.f32.xlu0 %v1382
        %v1384 = vpop.xlane.xlu0 %1383
        %v1385 = vmax.f32 %v1318, %v1319
        %1386 = vmax.xlane.f32.xlu0 %v1385
        %v1387 = vpop.xlane.xlu0 %1386
        %v1388 = vmax.f32 %v1320, %v1321
        %1389 = vmax.xlane.f32.xlu0 %v1388
        %v1390 = vpop.xlane.xlu0 %1389
        %v1391 = vmax.f32 %v1322, %v1323
        %1392 = vmax.xlane.f32.xlu0 %v1391
        %v1393 = vpop.xlane.xlu0 %1392
        %v1394 = vmax.f32 %v1324, %v1325
        %1395 = vmax.xlane.f32.xlu0 %v1394
        %v1396 = vpop.xlane.xlu0 %1395
        %v1397 = vmax.f32 %v1326, %v1327
        %1398 = vmax.xlane.f32.xlu0 %v1397
        %v1399 = vpop.xlane.xlu0 %1398
        %v1400 = vmax.f32 %v1328, %v1329
        %1401 = vmax.xlane.f32.xlu0 %v1400
        %v1402 = vpop.xlane.xlu0 %1401
        %v1403 = vmax.f32 %v1330, %v1331
        %1404 = vmax.xlane.f32.xlu0 %v1403
        %v1405 = vpop.xlane.xlu0 %1404
        %v1406 = vmax.f32 %v1332, %v1333
        %1407 = vmax.xlane.f32.xlu0 %v1406
        %v1408 = vpop.xlane.xlu0 %1407
        %v1409 = vmax.f32 %v1334, %v1335
        %1410 = vmax.xlane.f32.xlu0 %v1409
        %v1411 = vpop.xlane.xlu0 %1410
        %v1412 = vmax.f32 %v1336, %v1337
        %1413 = vmax.xlane.f32.xlu0 %v1412
        %v1414 = vpop.xlane.xlu0 %1413
        %v1415 = vmax.f32 %v1338, %v1339
        %1416 = vmax.xlane.f32.xlu0 %v1415
        %v1417 = vpop.xlane.xlu0 %1416
        %v1418 = vmax.f32 %v1340, %v1341
        %1419 = vmax.xlane.f32.xlu0 %v1418
        %v1420 = vpop.xlane.xlu0 %1419
        %v1421 = vmax.f32 %v1342, %v1343
        %1422 = vmax.xlane.f32.xlu0 %v1421
        %v1423 = vpop.xlane.xlu0 %1422
        %v1424 = vmax.f32 %v1344, %v1345
        %1425 = vmax.xlane.f32.xlu0 %v1424
        %v1426 = vpop.xlane.xlu0 %1425
        %v1427 = vmax.f32 %v1346, %v1347
        %1428 = vmax.xlane.f32.xlu0 %v1427
        %v1429 = vpop.xlane.xlu0 %1428
        %v1430 = vmax.f32 %v1348, %v1349
        %1431 = vmax.xlane.f32.xlu0 %v1430
        %v1432 = vpop.xlane.xlu0 %1431
        %v1433 = vmax.f32 %v1350, %v1351
        %1434 = vmax.xlane.f32.xlu0 %v1433
        %v1435 = vpop.xlane.xlu0 %1434
        %v1436 = vmax.f32 %v1352, %v1353
        %1437 = vmax.xlane.f32.xlu0 %v1436
        %v1438 = vpop.xlane.xlu0 %1437
        %v1439 = vmax.f32 %v1354, %v1355
        %1440 = vmax.xlane.f32.xlu0 %v1439
        %v1441 = vpop.xlane.xlu0 %1440
        %v1442 = vmax.f32 %v1356, %v1357
        %1443 = vmax.xlane.f32.xlu0 %v1442
        %v1444 = vpop.xlane.xlu0 %1443
        %v1445 = vmax.f32 %v1358, %v1359
        %1446 = vmax.xlane.f32.xlu0 %v1445
        %v1447 = vpop.xlane.xlu0 %1446
        %v1448 = vmax.f32 %v1360, %v1361
        %1449 = vmax.xlane.f32.xlu0 %v1448
        %v1450 = vpop.xlane.xlu0 %1449
        %v1451 = vmax.f32 %v1362, %v1363
        %1452 = vmax.xlane.f32.xlu0 %v1451
        %v1453 = vpop.xlane.xlu0 %1452
        %v1454 = vmax.f32 %v1364, %v1365
        %1455 = vmax.xlane.f32.xlu0 %v1454
        %v1456 = vpop.xlane.xlu0 %1455
        %v1457 = vmax.f32 %v1366, %v1367
        %1458 = vmax.xlane.f32.xlu0 %v1457
        %v1459 = vpop.xlane.xlu0 %1458
        %v1460 = vmax.f32 %v1368, %v1369
        %1461 = vmax.xlane.f32.xlu0 %v1460
        %v1462 = vpop.xlane.xlu0 %1461
        %v1463 = vmax.f32 %v1370, %v1371
        %1464 = vmax.xlane.f32.xlu0 %v1463
        %v1465 = vpop.xlane.xlu0 %1464
        %v1466 = vmax.f32 %v1372, %v1373
        %1467 = vmax.xlane.f32.xlu0 %v1466
        %v1468 = vpop.xlane.xlu0 %1467
        %v1469 = vmax.f32 %v1374, %v1375
        %1470 = vmax.xlane.f32.xlu0 %v1469
        %v1471 = vpop.xlane.xlu0 %1470
        %v1472 = vsub.f32 %v912, %v1378
        %v1473 = vsub.f32 %v913, %v1378
        %v1474 = vsub.f32 %v914, %v1381
        %v1475 = vsub.f32 %v915, %v1381
        %v1476 = vsub.f32 %v916, %v1384
        %v1477 = vsub.f32 %v917, %v1384
        %v1478 = vsub.f32 %v918, %v1387
        %v1479 = vsub.f32 %v919, %v1387
        %v1480 = vsub.f32 %v920, %v1390
        %v1481 = vsub.f32 %v921, %v1390
        %v1482 = vsub.f32 %v922, %v1393
        %v1483 = vsub.f32 %v923, %v1393
        %v1484 = vsub.f32 %v924, %v1396
        %v1485 = vsub.f32 %v925, %v1396
        %v1486 = vsub.f32 %v926, %v1399
        %v1487 = vsub.f32 %v927, %v1399
        %v1488 = vsub.f32 %v928, %v1402
        %v1489 = vsub.f32 %v929, %v1402
        %v1490 = vsub.f32 %v930, %v1405
        %v1491 = vsub.f32 %v931, %v1405
        %v1492 = vsub.f32 %v932, %v1408
        %v1493 = vsub.f32 %v933, %v1408
        %v1494 = vsub.f32 %v934, %v1411
        %v1495 = vsub.f32 %v935, %v1411
        %v1496 = vsub.f32 %v936, %v1414
        %v1497 = vsub.f32 %v937, %v1414
        %v1498 = vsub.f32 %v938, %v1417
        %v1499 = vsub.f32 %v939, %v1417
        %v1500 = vsub.f32 %v940, %v1420
        %v1501 = vsub.f32 %v941, %v1420
        %v1502 = vsub.f32 %v942, %v1423
        %v1503 = vsub.f32 %v943, %v1423
        %v1504 = vsub.f32 %v944, %v1426
        %v1505 = vsub.f32 %v945, %v1426
        %v1506 = vsub.f32 %v946, %v1429
        %v1507 = vsub.f32 %v947, %v1429
        %v1508 = vsub.f32 %v948, %v1432
        %v1509 = vsub.f32 %v949, %v1432
        %v1510 = vsub.f32 %v950, %v1435
        %v1511 = vsub.f32 %v951, %v1435
        %v1512 = vsub.f32 %v952, %v1438
        %v1513 = vsub.f32 %v953, %v1438
        %v1514 = vsub.f32 %v954, %v1441
        %v1515 = vsub.f32 %v955, %v1441
        %v1516 = vsub.f32 %v956, %v1444
        %v1517 = vsub.f32 %v957, %v1444
        %v1518 = vsub.f32 %v958, %v1447
        %v1519 = vsub.f32 %v959, %v1447
        %v1520 = vsub.f32 %v960, %v1450
        %v1521 = vsub.f32 %v961, %v1450
        %v1522 = vsub.f32 %v962, %v1453
        %v1523 = vsub.f32 %v963, %v1453
        %v1524 = vsub.f32 %v964, %v1456
        %v1525 = vsub.f32 %v965, %v1456
        %v1526 = vsub.f32 %v966, %v1459
        %v1527 = vsub.f32 %v967, %v1459
        %v1528 = vsub.f32 %v968, %v1462
        %v1529 = vsub.f32 %v969, %v1462
        %v1530 = vsub.f32 %v970, %v1465
        %v1531 = vsub.f32 %v971, %v1465
        %v1532 = vsub.f32 %v972, %v1468
        %v1533 = vsub.f32 %v973, %v1468
        %v1534 = vsub.f32 %v974, %v1471
        %v1535 = vsub.f32 %v975, %v1471
        %v1536 = vsel %vm1248, %v1472, -1e+30
        %v1537 = vsel %vm1249, %v1473, -1e+30
        %v1538 = vsel %vm1250, %v1474, -1e+30
        %v1539 = vsel %vm1251, %v1475, -1e+30
        %v1540 = vsel %vm1252, %v1476, -1e+30
        %v1541 = vsel %vm1253, %v1477, -1e+30
        %v1542 = vsel %vm1254, %v1478, -1e+30
        %v1543 = vsel %vm1255, %v1479, -1e+30
        %v1544 = vsel %vm1256, %v1480, -1e+30
        %v1545 = vsel %vm1257, %v1481, -1e+30
        %v1546 = vsel %vm1258, %v1482, -1e+30
        %v1547 = vsel %vm1259, %v1483, -1e+30
        %v1548 = vsel %vm1260, %v1484, -1e+30
        %v1549 = vsel %vm1261, %v1485, -1e+30
        %v1550 = vsel %vm1262, %v1486, -1e+30
        %v1551 = vsel %vm1263, %v1487, -1e+30
        %v1552 = vsel %vm1264, %v1488, -1e+30
        %v1553 = vsel %vm1265, %v1489, -1e+30
        %v1554 = vsel %vm1266, %v1490, -1e+30
        %v1555 = vsel %vm1267, %v1491, -1e+30
        %v1556 = vsel %vm1268, %v1492, -1e+30
        %v1557 = vsel %vm1269, %v1493, -1e+30
        %v1558 = vsel %vm1270, %v1494, -1e+30
        %v1559 = vsel %vm1271, %v1495, -1e+30
        %v1560 = vsel %vm1272, %v1496, -1e+30
        %v1561 = vsel %vm1273, %v1497, -1e+30
        %v1562 = vsel %vm1274, %v1498, -1e+30
        %v1563 = vsel %vm1275, %v1499, -1e+30
        %v1564 = vsel %vm1276, %v1500, -1e+30
        %v1565 = vsel %vm1277, %v1501, -1e+30
        %v1566 = vsel %vm1278, %v1502, -1e+30
        %v1567 = vsel %vm1279, %v1503, -1e+30
        %v1568 = vsel %vm1280, %v1504, -1e+30
        %v1569 = vsel %vm1281, %v1505, -1e+30
        %v1570 = vsel %vm1282, %v1506, -1e+30
        %v1571 = vsel %vm1283, %v1507, -1e+30
        %v1572 = vsel %vm1284, %v1508, -1e+30
        %v1573 = vsel %vm1285, %v1509, -1e+30
        %v1574 = vsel %vm1286, %v1510, -1e+30
        %v1575 = vsel %vm1287, %v1511, -1e+30
        %v1576 = vsel %vm1288, %v1512, -1e+30
        %v1577 = vsel %vm1289, %v1513, -1e+30
        %v1578 = vsel %vm1290, %v1514, -1e+30
        %v1579 = vsel %vm1291, %v1515, -1e+30
        %v1580 = vsel %vm1292, %v1516, -1e+30
        %v1581 = vsel %vm1293, %v1517, -1e+30
        %v1582 = vsel %vm1294, %v1518, -1e+30
        %v1583 = vsel %vm1295, %v1519, -1e+30
        %v1584 = vsel %vm1296, %v1520, -1e+30
        %v1585 = vsel %vm1297, %v1521, -1e+30
        %v1586 = vsel %vm1298, %v1522, -1e+30
        %v1587 = vsel %vm1299, %v1523, -1e+30
        %v1588 = vsel %vm1300, %v1524, -1e+30
        %v1589 = vsel %vm1301, %v1525, -1e+30
        %v1590 = vsel %vm1302, %v1526, -1e+30
        %v1591 = vsel %vm1303, %v1527, -1e+30
        %v1592 = vsel %vm1304, %v1528, -1e+30
        %v1593 = vsel %vm1305, %v1529, -1e+30
        %v1594 = vsel %vm1306, %v1530, -1e+30
        %v1595 = vsel %vm1307, %v1531, -1e+30
        %v1596 = vsel %vm1308, %v1532, -1e+30
        %v1597 = vsel %vm1309, %v1533, -1e+30
        %v1598 = vsel %vm1310, %v1534, -1e+30
        %v1599 = vsel %vm1311, %v1535, -1e+30
        %v1600 = vmul.f32 %v1536, 1.442695
        %v1601 = vpow.pop %v1600
        %v1602 = vmul.f32 %v1537, 1.442695
        %v1603 = vpow.pop %v1602
        %v1604 = vmul.f32 %v1538, 1.442695
        %v1605 = vpow.pop %v1604
        %v1606 = vmul.f32 %v1539, 1.442695
        %v1607 = vpow.pop %v1606
        %v1608 = vmul.f32 %v1540, 1.442695
        %v1609 = vpow.pop %v1608
        %v1610 = vmul.f32 %v1541, 1.442695
        %v1611 = vpow.pop %v1610
        %v1612 = vmul.f32 %v1542, 1.442695
        %v1613 = vpow.pop %v1612
        %v1614 = vmul.f32 %v1543, 1.442695
        %v1615 = vpow.pop %v1614
        %v1616 = vmul.f32 %v1544, 1.442695
        %v1617 = vpow.pop %v1616
        %v1618 = vmul.f32 %v1545, 1.442695
        %v1619 = vpow.pop %v1618
        %v1620 = vmul.f32 %v1546, 1.442695
        %v1621 = vpow.pop %v1620
        %v1622 = vmul.f32 %v1547, 1.442695
        %v1623 = vpow.pop %v1622
        %v1624 = vmul.f32 %v1548, 1.442695
        %v1625 = vpow.pop %v1624
        %v1626 = vmul.f32 %v1549, 1.442695
        %v1627 = vpow.pop %v1626
        %v1628 = vmul.f32 %v1550, 1.442695
        %v1629 = vpow.pop %v1628
        %v1630 = vmul.f32 %v1551, 1.442695
        %v1631 = vpow.pop %v1630
        %v1632 = vmul.f32 %v1552, 1.442695
        %v1633 = vpow.pop %v1632
        %v1634 = vmul.f32 %v1553, 1.442695
        %v1635 = vpow.pop %v1634
        %v1636 = vmul.f32 %v1554, 1.442695
        %v1637 = vpow.pop %v1636
        %v1638 = vmul.f32 %v1555, 1.442695
        %v1639 = vpow.pop %v1638
        %v1640 = vmul.f32 %v1556, 1.442695
        %v1641 = vpow.pop %v1640
        %v1642 = vmul.f32 %v1557, 1.442695
        %v1643 = vpow.pop %v1642
        %v1644 = vmul.f32 %v1558, 1.442695
        %v1645 = vpow.pop %v1644
        %v1646 = vmul.f32 %v1559, 1.442695
        %v1647 = vpow.pop %v1646
        %v1648 = vmul.f32 %v1560, 1.442695
        %v1649 = vpow.pop %v1648
        %v1650 = vmul.f32 %v1561, 1.442695
        %v1651 = vpow.pop %v1650
        %v1652 = vmul.f32 %v1562, 1.442695
        %v1653 = vpow.pop %v1652
        %v1654 = vmul.f32 %v1563, 1.442695
        %v1655 = vpow.pop %v1654
        %v1656 = vmul.f32 %v1564, 1.442695
        %v1657 = vpow.pop %v1656
        %v1658 = vmul.f32 %v1565, 1.442695
        %v1659 = vpow.pop %v1658
        %v1660 = vmul.f32 %v1566, 1.442695
        %v1661 = vpow.pop %v1660
        %v1662 = vmul.f32 %v1567, 1.442695
        %v1663 = vpow.pop %v1662
        %v1664 = vmul.f32 %v1568, 1.442695
        %v1665 = vpow.pop %v1664
        %v1666 = vmul.f32 %v1569, 1.442695
        %v1667 = vpow.pop %v1666
        %v1668 = vmul.f32 %v1570, 1.442695
        %v1669 = vpow.pop %v1668
        %v1670 = vmul.f32 %v1571, 1.442695
        %v1671 = vpow.pop %v1670
        %v1672 = vmul.f32 %v1572, 1.442695
        %v1673 = vpow.pop %v1672
        %v1674 = vmul.f32 %v1573, 1.442695
        %v1675 = vpow.pop %v1674
        %v1676 = vmul.f32 %v1574, 1.442695
        %v1677 = vpow.pop %v1676
        %v1678 = vmul.f32 %v1575, 1.442695
        %v1679 = vpow.pop %v1678
        %v1680 = vmul.f32 %v1576, 1.442695
        %v1681 = vpow.pop %v1680
        %v1682 = vmul.f32 %v1577, 1.442695
        %v1683 = vpow.pop %v1682
        %v1684 = vmul.f32 %v1578, 1.442695
        %v1685 = vpow.pop %v1684
        %v1686 = vmul.f32 %v1579, 1.442695
        %v1687 = vpow.pop %v1686
        %v1688 = vmul.f32 %v1580, 1.442695
        %v1689 = vpow.pop %v1688
        %v1690 = vmul.f32 %v1581, 1.442695
        %v1691 = vpow.pop %v1690
        %v1692 = vmul.f32 %v1582, 1.442695
        %v1693 = vpow.pop %v1692
        %v1694 = vmul.f32 %v1583, 1.442695
        %v1695 = vpow.pop %v1694
        %v1696 = vmul.f32 %v1584, 1.442695
        %v1697 = vpow.pop %v1696
        %v1698 = vmul.f32 %v1585, 1.442695
        %v1699 = vpow.pop %v1698
        %v1700 = vmul.f32 %v1586, 1.442695
        %v1701 = vpow.pop %v1700
        %v1702 = vmul.f32 %v1587, 1.442695
        %v1703 = vpow.pop %v1702
        %v1704 = vmul.f32 %v1588, 1.442695
        %v1705 = vpow.pop %v1704
        %v1706 = vmul.f32 %v1589, 1.442695
        %v1707 = vpow.pop %v1706
        %v1708 = vmul.f32 %v1590, 1.442695
        %v1709 = vpow.pop %v1708
        %v1710 = vmul.f32 %v1591, 1.442695
        %v1711 = vpow.pop %v1710
        %v1712 = vmul.f32 %v1592, 1.442695
        %v1713 = vpow.pop %v1712
        %v1714 = vmul.f32 %v1593, 1.442695
        %v1715 = vpow.pop %v1714
        %v1716 = vmul.f32 %v1594, 1.442695
        %v1717 = vpow.pop %v1716
        %v1718 = vmul.f32 %v1595, 1.442695
        %v1719 = vpow.pop %v1718
        %v1720 = vmul.f32 %v1596, 1.442695
        %v1721 = vpow.pop %v1720
        %v1722 = vmul.f32 %v1597, 1.442695
        %v1723 = vpow.pop %v1722
        %v1724 = vmul.f32 %v1598, 1.442695
        %v1725 = vpow.pop %v1724
        %v1726 = vmul.f32 %v1599, 1.442695
        %v1727 = vpow.pop %v1726
        %v1728 = vadd.f32 %v1601, %v1603
        %1729 = vadd.xlane.f32.xlu0 %v1728
        %v1730 = vpop.xlane.xlu0 %1729
        %v1731 = vadd.f32 %v1605, %v1607
        %1732 = vadd.xlane.f32.xlu0 %v1731
        %v1733 = vpop.xlane.xlu0 %1732
        %v1734 = vadd.f32 %v1609, %v1611
        %1735 = vadd.xlane.f32.xlu0 %v1734
        %v1736 = vpop.xlane.xlu0 %1735
        %v1737 = vadd.f32 %v1613, %v1615
        %1738 = vadd.xlane.f32.xlu0 %v1737
        %v1739 = vpop.xlane.xlu0 %1738
        %v1740 = vadd.f32 %v1617, %v1619
        %1741 = vadd.xlane.f32.xlu0 %v1740
        %v1742 = vpop.xlane.xlu0 %1741
        %v1743 = vadd.f32 %v1621, %v1623
        %1744 = vadd.xlane.f32.xlu0 %v1743
        %v1745 = vpop.xlane.xlu0 %1744
        %v1746 = vadd.f32 %v1625, %v1627
        %1747 = vadd.xlane.f32.xlu0 %v1746
        %v1748 = vpop.xlane.xlu0 %1747
        %v1749 = vadd.f32 %v1629, %v1631
        %1750 = vadd.xlane.f32.xlu0 %v1749
        %v1751 = vpop.xlane.xlu0 %1750
        %v1752 = vadd.f32 %v1633, %v1635
        %1753 = vadd.xlane.f32.xlu0 %v1752
        %v1754 = vpop.xlane.xlu0 %1753
        %v1755 = vadd.f32 %v1637, %v1639
        %1756 = vadd.xlane.f32.xlu0 %v1755
        %v1757 = vpop.xlane.xlu0 %1756
        %v1758 = vadd.f32 %v1641, %v1643
        %1759 = vadd.xlane.f32.xlu0 %v1758
        %v1760 = vpop.xlane.xlu0 %1759
        %v1761 = vadd.f32 %v1645, %v1647
        %1762 = vadd.xlane.f32.xlu0 %v1761
        %v1763 = vpop.xlane.xlu0 %1762
        %v1764 = vadd.f32 %v1649, %v1651
        %1765 = vadd.xlane.f32.xlu0 %v1764
        %v1766 = vpop.xlane.xlu0 %1765
        %v1767 = vadd.f32 %v1653, %v1655
        %1768 = vadd.xlane.f32.xlu0 %v1767
        %v1769 = vpop.xlane.xlu0 %1768
        %v1770 = vadd.f32 %v1657, %v1659
        %1771 = vadd.xlane.f32.xlu0 %v1770
        %v1772 = vpop.xlane.xlu0 %1771
        %v1773 = vadd.f32 %v1661, %v1663
        %1774 = vadd.xlane.f32.xlu0 %v1773
        %v1775 = vpop.xlane.xlu0 %1774
        %v1776 = vadd.f32 %v1665, %v1667
        %1777 = vadd.xlane.f32.xlu0 %v1776
        %v1778 = vpop.xlane.xlu0 %1777
        %v1779 = vadd.f32 %v1669, %v1671
        %1780 = vadd.xlane.f32.xlu0 %v1779
        %v1781 = vpop.xlane.xlu0 %1780
        %v1782 = vadd.f32 %v1673, %v1675
        %1783 = vadd.xlane.f32.xlu0 %v1782
        %v1784 = vpop.xlane.xlu0 %1783
        %v1785 = vadd.f32 %v1677, %v1679
        %1786 = vadd.xlane.f32.xlu0 %v1785
        %v1787 = vpop.xlane.xlu0 %1786
        %v1788 = vadd.f32 %v1681, %v1683
        %1789 = vadd.xlane.f32.xlu0 %v1788
        %v1790 = vpop.xlane.xlu0 %1789
        %v1791 = vadd.f32 %v1685, %v1687
        %1792 = vadd.xlane.f32.xlu0 %v1791
        %v1793 = vpop.xlane.xlu0 %1792
        %v1794 = vadd.f32 %v1689, %v1691
        %1795 = vadd.xlane.f32.xlu0 %v1794
        %v1796 = vpop.xlane.xlu0 %1795
        %v1797 = vadd.f32 %v1693, %v1695
        %1798 = vadd.xlane.f32.xlu0 %v1797
        %v1799 = vpop.xlane.xlu0 %1798
        %v1800 = vadd.f32 %v1697, %v1699
        %1801 = vadd.xlane.f32.xlu0 %v1800
        %v1802 = vpop.xlane.xlu0 %1801
        %v1803 = vadd.f32 %v1701, %v1703
        %1804 = vadd.xlane.f32.xlu0 %v1803
        %v1805 = vpop.xlane.xlu0 %1804
        %v1806 = vadd.f32 %v1705, %v1707
        %1807 = vadd.xlane.f32.xlu0 %v1806
        %v1808 = vpop.xlane.xlu0 %1807
        %v1809 = vadd.f32 %v1709, %v1711
        %1810 = vadd.xlane.f32.xlu0 %v1809
        %v1811 = vpop.xlane.xlu0 %1810
        %v1812 = vadd.f32 %v1713, %v1715
        %1813 = vadd.xlane.f32.xlu0 %v1812
        %v1814 = vpop.xlane.xlu0 %1813
        %v1815 = vadd.f32 %v1717, %v1719
        %1816 = vadd.xlane.f32.xlu0 %v1815
        %v1817 = vpop.xlane.xlu0 %1816
        %v1818 = vadd.f32 %v1721, %v1723
        %1819 = vadd.xlane.f32.xlu0 %v1818
        %v1820 = vpop.xlane.xlu0 %1819
        %v1821 = vadd.f32 %v1725, %v1727
        %1822 = vadd.xlane.f32.xlu0 %v1821
        %v1823 = vpop.xlane.xlu0 %1822
        %vm1824 = vcmp.gt.f32.partialorder %v1730, 0.0
        %vm1825 = vcmp.gt.f32.partialorder %v1733, 0.0
        %vm1826 = vcmp.gt.f32.partialorder %v1736, 0.0
        %vm1827 = vcmp.gt.f32.partialorder %v1739, 0.0
        %vm1828 = vcmp.gt.f32.partialorder %v1742, 0.0
        %vm1829 = vcmp.gt.f32.partialorder %v1745, 0.0
        %vm1830 = vcmp.gt.f32.partialorder %v1748, 0.0
        %vm1831 = vcmp.gt.f32.partialorder %v1751, 0.0
        %vm1832 = vcmp.gt.f32.partialorder %v1754, 0.0
        %vm1833 = vcmp.gt.f32.partialorder %v1757, 0.0
        %vm1834 = vcmp.gt.f32.partialorder %v1760, 0.0
        %vm1835 = vcmp.gt.f32.partialorder %v1763, 0.0
        %vm1836 = vcmp.gt.f32.partialorder %v1766, 0.0
        %vm1837 = vcmp.gt.f32.partialorder %v1769, 0.0
        %vm1838 = vcmp.gt.f32.partialorder %v1772, 0.0
        %vm1839 = vcmp.gt.f32.partialorder %v1775, 0.0
        %vm1840 = vcmp.gt.f32.partialorder %v1778, 0.0
        %vm1841 = vcmp.gt.f32.partialorder %v1781, 0.0
        %vm1842 = vcmp.gt.f32.partialorder %v1784, 0.0
        %vm1843 = vcmp.gt.f32.partialorder %v1787, 0.0
        %vm1844 = vcmp.gt.f32.partialorder %v1790, 0.0
        %vm1845 = vcmp.gt.f32.partialorder %v1793, 0.0
        %vm1846 = vcmp.gt.f32.partialorder %v1796, 0.0
        %vm1847 = vcmp.gt.f32.partialorder %v1799, 0.0
        %vm1848 = vcmp.gt.f32.partialorder %v1802, 0.0
        %vm1849 = vcmp.gt.f32.partialorder %v1805, 0.0
        %vm1850 = vcmp.gt.f32.partialorder %v1808, 0.0
        %vm1851 = vcmp.gt.f32.partialorder %v1811, 0.0
        %vm1852 = vcmp.gt.f32.partialorder %v1814, 0.0
        %vm1853 = vcmp.gt.f32.partialorder %v1817, 0.0
        %vm1854 = vcmp.gt.f32.partialorder %v1820, 0.0
        %vm1855 = vcmp.gt.f32.partialorder %v1823, 0.0
        %v1856 = vsel %vm1824, %v1730, 1.0
        %v1857 = vsel %vm1825, %v1733, 1.0
        %v1858 = vsel %vm1826, %v1736, 1.0
        %v1859 = vsel %vm1827, %v1739, 1.0
        %v1860 = vsel %vm1828, %v1742, 1.0
        %v1861 = vsel %vm1829, %v1745, 1.0
        %v1862 = vsel %vm1830, %v1748, 1.0
        %v1863 = vsel %vm1831, %v1751, 1.0
        %v1864 = vsel %vm1832, %v1754, 1.0
        %v1865 = vsel %vm1833, %v1757, 1.0
        %v1866 = vsel %vm1834, %v1760, 1.0
        %v1867 = vsel %vm1835, %v1763, 1.0
        %v1868 = vsel %vm1836, %v1766, 1.0
        %v1869 = vsel %vm1837, %v1769, 1.0
        %v1870 = vsel %vm1838, %v1772, 1.0
        %v1871 = vsel %vm1839, %v1775, 1.0
        %v1872 = vsel %vm1840, %v1778, 1.0
        %v1873 = vsel %vm1841, %v1781, 1.0
        %v1874 = vsel %vm1842, %v1784, 1.0
        %v1875 = vsel %vm1843, %v1787, 1.0
        %v1876 = vsel %vm1844, %v1790, 1.0
        %v1877 = vsel %vm1845, %v1793, 1.0
        %v1878 = vsel %vm1846, %v1796, 1.0
        %v1879 = vsel %vm1847, %v1799, 1.0
        %v1880 = vsel %vm1848, %v1802, 1.0
        %v1881 = vsel %vm1849, %v1805, 1.0
        %v1882 = vsel %vm1850, %v1808, 1.0
        %v1883 = vsel %vm1851, %v1811, 1.0
        %v1884 = vsel %vm1852, %v1814, 1.0
        %v1885 = vsel %vm1853, %v1817, 1.0
        %v1886 = vsel %vm1854, %v1820, 1.0
        %v1887 = vsel %vm1855, %v1823, 1.0
        %v1888 = vrcp.pop %v1856
        %v1889 = vrcp.pop %v1857
        %v1890 = vrcp.pop %v1858
        %v1891 = vrcp.pop %v1859
        %v1892 = vrcp.pop %v1860
        %v1893 = vrcp.pop %v1861
        %v1894 = vrcp.pop %v1862
        %v1895 = vrcp.pop %v1863
        %v1896 = vrcp.pop %v1864
        %v1897 = vrcp.pop %v1865
        %v1898 = vrcp.pop %v1866
        %v1899 = vrcp.pop %v1867
        %v1900 = vrcp.pop %v1868
        %v1901 = vrcp.pop %v1869
        %v1902 = vrcp.pop %v1870
        %v1903 = vrcp.pop %v1871
        %v1904 = vrcp.pop %v1872
        %v1905 = vrcp.pop %v1873
        %v1906 = vrcp.pop %v1874
        %v1907 = vrcp.pop %v1875
        %v1908 = vrcp.pop %v1876
        %v1909 = vrcp.pop %v1877
        %v1910 = vrcp.pop %v1878
        %v1911 = vrcp.pop %v1879
        %v1912 = vrcp.pop %v1880
        %v1913 = vrcp.pop %v1881
        %v1914 = vrcp.pop %v1882
        %v1915 = vrcp.pop %v1883
        %v1916 = vrcp.pop %v1884
        %v1917 = vrcp.pop %v1885
        %v1918 = vrcp.pop %v1886
        %v1919 = vrcp.pop %v1887
        %v1920 = vmul.f32 %v1601, %v1888
        %v1921 = vmul.f32 %v1603, %v1888
        %v1922 = vmul.f32 %v1605, %v1889
        %v1923 = vmul.f32 %v1607, %v1889
        %v1924 = vmul.f32 %v1609, %v1890
        %v1925 = vmul.f32 %v1611, %v1890
        %v1926 = vmul.f32 %v1613, %v1891
        %v1927 = vmul.f32 %v1615, %v1891
        %v1928 = vmul.f32 %v1617, %v1892
        %v1929 = vmul.f32 %v1619, %v1892
        %v1930 = vmul.f32 %v1621, %v1893
        %v1931 = vmul.f32 %v1623, %v1893
        %v1932 = vmul.f32 %v1625, %v1894
        %v1933 = vmul.f32 %v1627, %v1894
        %v1934 = vmul.f32 %v1629, %v1895
        %v1935 = vmul.f32 %v1631, %v1895
        %v1936 = vmul.f32 %v1633, %v1896
        %v1937 = vmul.f32 %v1635, %v1896
        %v1938 = vmul.f32 %v1637, %v1897
        %v1939 = vmul.f32 %v1639, %v1897
        %v1940 = vmul.f32 %v1641, %v1898
        %v1941 = vmul.f32 %v1643, %v1898
        %v1942 = vmul.f32 %v1645, %v1899
        %v1943 = vmul.f32 %v1647, %v1899
        %v1944 = vmul.f32 %v1649, %v1900
        %v1945 = vmul.f32 %v1651, %v1900
        %v1946 = vmul.f32 %v1653, %v1901
        %v1947 = vmul.f32 %v1655, %v1901
        %v1948 = vmul.f32 %v1657, %v1902
        %v1949 = vmul.f32 %v1659, %v1902
        %v1950 = vmul.f32 %v1661, %v1903
        %v1951 = vmul.f32 %v1663, %v1903
        %v1952 = vmul.f32 %v1665, %v1904
        %v1953 = vmul.f32 %v1667, %v1904
        %v1954 = vmul.f32 %v1669, %v1905
        %v1955 = vmul.f32 %v1671, %v1905
        %v1956 = vmul.f32 %v1673, %v1906
        %v1957 = vmul.f32 %v1675, %v1906
        %v1958 = vmul.f32 %v1677, %v1907
        %v1959 = vmul.f32 %v1679, %v1907
        %v1960 = vmul.f32 %v1681, %v1908
        %v1961 = vmul.f32 %v1683, %v1908
        %v1962 = vmul.f32 %v1685, %v1909
        %v1963 = vmul.f32 %v1687, %v1909
        %v1964 = vmul.f32 %v1689, %v1910
        %v1965 = vmul.f32 %v1691, %v1910
        %v1966 = vmul.f32 %v1693, %v1911
        %v1967 = vmul.f32 %v1695, %v1911
        %v1968 = vmul.f32 %v1697, %v1912
        %v1969 = vmul.f32 %v1699, %v1912
        %v1970 = vmul.f32 %v1701, %v1913
        %v1971 = vmul.f32 %v1703, %v1913
        %v1972 = vmul.f32 %v1705, %v1914
        %v1973 = vmul.f32 %v1707, %v1914
        %v1974 = vmul.f32 %v1709, %v1915
        %v1975 = vmul.f32 %v1711, %v1915
        %v1976 = vmul.f32 %v1713, %v1916
        %v1977 = vmul.f32 %v1715, %v1916
        %v1978 = vmul.f32 %v1717, %v1917
        %v1979 = vmul.f32 %v1719, %v1917
        %v1980 = vmul.f32 %v1721, %v1918
        %v1981 = vmul.f32 %v1723, %v1918
        %v1982 = vmul.f32 %v1725, %v1919
        %v1983 = vmul.f32 %v1727, %v1919
        %1984 = vst [vmem:[#allocation3] sm:$0xff] %v1920
        %1985 = vst [vmem:[#allocation3 + $0x8] sm:$0xff] %v1921
        %1986 = vst [vmem:[#allocation3 + $0x10] sm:$0xff] %v1922
        %1987 = vst [vmem:[#allocation3 + $0x18] sm:$0xff] %v1923
        %1988 = vst [vmem:[#allocation3 + $0x20] sm:$0xff] %v1924
        %1989 = vst [vmem:[#allocation3 + $0x28] sm:$0xff] %v1925
        %1990 = vst [vmem:[#allocation3 + $0x30] sm:$0xff] %v1926
        %1991 = vst [vmem:[#allocation3 + $0x38] sm:$0xff] %v1927
        %1992 = vst [vmem:[#allocation3 + $0x40] sm:$0xff] %v1928
        %1993 = vst [vmem:[#allocation3 + $0x48] sm:$0xff] %v1929
        %1994 = vst [vmem:[#allocation3 + $0x50] sm:$0xff] %v1930
        %1995 = vst [vmem:[#allocation3 + $0x58] sm:$0xff] %v1931
        %1996 = vst [vmem:[#allocation3 + $0x60] sm:$0xff] %v1932
        %1997 = vst [vmem:[#allocation3 + $0x68] sm:$0xff] %v1933
        %1998 = vst [vmem:[#allocation3 + $0x70] sm:$0xff] %v1934
        %1999 = vst [vmem:[#allocation3 + $0x78] sm:$0xff] %v1935
        %2000 = vst [vmem:[#allocation3 + $0x80] sm:$0xff] %v1936
        %2001 = vst [vmem:[#allocation3 + $0x88] sm:$0xff] %v1937
        %2002 = vst [vmem:[#allocation3 + $0x90] sm:$0xff] %v1938
        %2003 = vst [vmem:[#allocation3 + $0x98] sm:$0xff] %v1939
        %2004 = vst [vmem:[#allocation3 + $0xa0] sm:$0xff] %v1940
        %2005 = vst [vmem:[#allocation3 + $0xa8] sm:$0xff] %v1941
        %2006 = vst [vmem:[#allocation3 + $0xb0] sm:$0xff] %v1942
        %2007 = vst [vmem:[#allocation3 + $0xb8] sm:$0xff] %v1943
        %2008 = vst [vmem:[#allocation3 + $0xc0] sm:$0xff] %v1944
        %2009 = vst [vmem:[#allocation3 + $0xc8] sm:$0xff] %v1945
        %2010 = vst [vmem:[#allocation3 + $0xd0] sm:$0xff] %v1946
        %2011 = vst [vmem:[#allocation3 + $0xd8] sm:$0xff] %v1947
        %2012 = vst [vmem:[#allocation3 + $0xe0] sm:$0xff] %v1948
        %2013 = vst [vmem:[#allocation3 + $0xe8] sm:$0xff] %v1949
        %2014 = vst [vmem:[#allocation3 + $0xf0] sm:$0xff] %v1950
        %2015 = vst [vmem:[#allocation3 + $0xf8] sm:$0xff] %v1951
        %2016 = vst [vmem:[#allocation3 + $0x100] sm:$0xff] %v1952
        %2017 = vst [vmem:[#allocation3 + $0x108] sm:$0xff] %v1953
        %2018 = vst [vmem:[#allocation3 + $0x110] sm:$0xff] %v1954
        %2019 = vst [vmem:[#allocation3 + $0x118] sm:$0xff] %v1955
        %2020 = vst [vmem:[#allocation3 + $0x120] sm:$0xff] %v1956
        %2021 = vst [vmem:[#allocation3 + $0x128] sm:$0xff] %v1957
        %2022 = vst [vmem:[#allocation3 + $0x130] sm:$0xff] %v1958
        %2023 = vst [vmem:[#allocation3 + $0x138] sm:$0xff] %v1959
        %2024 = vst [vmem:[#allocation3 + $0x140] sm:$0xff] %v1960
        %2025 = vst [vmem:[#allocation3 + $0x148] sm:$0xff] %v1961
        %2026 = vst [vmem:[#allocation3 + $0x150] sm:$0xff] %v1962
        %2027 = vst [vmem:[#allocation3 + $0x158] sm:$0xff] %v1963
        %2028 = vst [vmem:[#allocation3 + $0x160] sm:$0xff] %v1964
        %2029 = vst [vmem:[#allocation3 + $0x168] sm:$0xff] %v1965
        %2030 = vst [vmem:[#allocation3 + $0x170] sm:$0xff] %v1966
        %2031 = vst [vmem:[#allocation3 + $0x178] sm:$0xff] %v1967
        %2032 = vst [vmem:[#allocation3 + $0x180] sm:$0xff] %v1968
        %2033 = vst [vmem:[#allocation3 + $0x188] sm:$0xff] %v1969
        %2034 = vst [vmem:[#allocation3 + $0x190] sm:$0xff] %v1970
        %2035 = vst [vmem:[#allocation3 + $0x198] sm:$0xff] %v1971
        %2036 = vst [vmem:[#allocation3 + $0x1a0] sm:$0xff] %v1972
        %2037 = vst [vmem:[#allocation3 + $0x1a8] sm:$0xff] %v1973
        %2038 = vst [vmem:[#allocation3 + $0x1b0] sm:$0xff] %v1974
        %2039 = vst [vmem:[#allocation3 + $0x1b8] sm:$0xff] %v1975
        %2040 = vst [vmem:[#allocation3 + $0x1c0] sm:$0xff] %v1976
        %2041 = vst [vmem:[#allocation3 + $0x1c8] sm:$0xff] %v1977
        %2042 = vst [vmem:[#allocation3 + $0x1d0] sm:$0xff] %v1978
        %2043 = vst [vmem:[#allocation3 + $0x1d8] sm:$0xff] %v1979
        %2044 = vst [vmem:[#allocation3 + $0x1e0] sm:$0xff] %v1980
        %2045 = vst [vmem:[#allocation3 + $0x1e8] sm:$0xff] %v1981
        %2046 = vst [vmem:[#allocation3 + $0x1f0] sm:$0xff] %v1982
        %2047 = vst [vmem:[#allocation3 + $0x1f8] sm:$0xff] %v1983
        %2048 = vst [vmem:[#allocation2] sm:$0xff] %v202
        %2049 = vst [vmem:[#allocation2 + $0x8] sm:$0xff] %v203
        %2050 = vst [vmem:[#allocation2 + $0x10] sm:$0xff] %v204
        %2051 = vst [vmem:[#allocation2 + $0x18] sm:$0xff] %v205
        %2052 = vst [vmem:[#allocation2 + $0x20] sm:$0xff] %v206
        %2053 = vst [vmem:[#allocation2 + $0x28] sm:$0xff] %v207
        %2054 = vst [vmem:[#allocation2 + $0x30] sm:$0xff] %v208
        %2055 = vst [vmem:[#allocation2 + $0x38] sm:$0xff] %v209
        %2056 = vst [vmem:[#allocation2 + $0x40] sm:$0xff] %v210
        %2057 = vst [vmem:[#allocation2 + $0x48] sm:$0xff] %v211
        %2058 = vst [vmem:[#allocation2 + $0x50] sm:$0xff] %v212
        %2059 = vst [vmem:[#allocation2 + $0x58] sm:$0xff] %v213
        %2060 = vst [vmem:[#allocation2 + $0x60] sm:$0xff] %v214
        %2061 = vst [vmem:[#allocation2 + $0x68] sm:$0xff] %v215
        %2062 = vst [vmem:[#allocation2 + $0x70] sm:$0xff] %v216
        %2063 = vst [vmem:[#allocation2 + $0x78] sm:$0xff] %v217
        %2064 = vst [vmem:[#allocation2 + $0x80] sm:$0xff] %v218
        %2065 = vst [vmem:[#allocation2 + $0x88] sm:$0xff] %v219
        %2066 = vst [vmem:[#allocation2 + $0x90] sm:$0xff] %v220
        %2067 = vst [vmem:[#allocation2 + $0x98] sm:$0xff] %v221
        %2068 = vst [vmem:[#allocation2 + $0xa0] sm:$0xff] %v222
        %2069 = vst [vmem:[#allocation2 + $0xa8] sm:$0xff] %v223
        %2070 = vst [vmem:[#allocation2 + $0xb0] sm:$0xff] %v224
        %2071 = vst [vmem:[#allocation2 + $0xb8] sm:$0xff] %v225
        %2072 = vst [vmem:[#allocation2 + $0xc0] sm:$0xff] %v226
        %2073 = vst [vmem:[#allocation2 + $0xc8] sm:$0xff] %v227
        %2074 = vst [vmem:[#allocation2 + $0xd0] sm:$0xff] %v228
        %2075 = vst [vmem:[#allocation2 + $0xd8] sm:$0xff] %v229
        %2076 = vst [vmem:[#allocation2 + $0xe0] sm:$0xff] %v230
        %2077 = vst [vmem:[#allocation2 + $0xe8] sm:$0xff] %v231
        %2078 = vst [vmem:[#allocation2 + $0xf0] sm:$0xff] %v232
        %2079 = vst [vmem:[#allocation2 + $0xf8] sm:$0xff] %v233
        %v2080 = vlaneseq
        %v2081 = vshrl.u32 %v2080, 7
        %v2082 = vadd.s32 %v2081, 8
        %v2083 = vadd.s32 %v2081, 16
        %v2084 = vadd.s32 %v2081, 24
        %v2085 = vadd.s32 %v2081, 32
        %v2086 = vadd.s32 %v2081, 40
        %v2087 = vadd.s32 %v2081, 48
        %v2088 = vadd.s32 %v2081, 56
        %v2089 = vadd.s32 %v2081, 64
        %v2090 = vadd.s32 %v2081, 72
        %v2091 = vadd.s32 %v2081, 80
        %v2092 = vadd.s32 %v2081, 88
        %v2093 = vadd.s32 %v2081, 96
        %v2094 = vadd.s32 %v2081, 104
        %v2095 = vadd.s32 %v2081, 112
        %v2096 = vadd.s32 %v2081, 120
        %v2097 = vlaneseq
        %v2098 = vand.u32 %v2097, 127
        %vm2099 = vcmp.gt.s32.totalorder %v2081, %v2098
        %vm2100 = vcmp.gt.s32.totalorder %v2082, %v2098
        %vm2101 = vcmp.gt.s32.totalorder %v2083, %v2098
        %vm2102 = vcmp.gt.s32.totalorder %v2084, %v2098
        %vm2103 = vcmp.gt.s32.totalorder %v2085, %v2098
        %vm2104 = vcmp.gt.s32.totalorder %v2086, %v2098
        %vm2105 = vcmp.gt.s32.totalorder %v2087, %v2098
        %vm2106 = vcmp.gt.s32.totalorder %v2088, %v2098
        %vm2107 = vcmp.gt.s32.totalorder %v2089, %v2098
        %vm2108 = vcmp.gt.s32.totalorder %v2090, %v2098
        %vm2109 = vcmp.gt.s32.totalorder %v2091, %v2098
        %vm2110 = vcmp.gt.s32.totalorder %v2092, %v2098
        %vm2111 = vcmp.gt.s32.totalorder %v2093, %v2098
        %vm2112 = vcmp.gt.s32.totalorder %v2094, %v2098
        %vm2113 = vcmp.gt.s32.totalorder %v2095, %v2098
        %vm2114 = vcmp.gt.s32.totalorder %v2096, %v2098
        %v2115 = vsel %vm2099, 1, 0
        %v2116 = vsel %vm2100, 1, 0
        %v2117 = vsel %vm2101, 1, 0
        %v2118 = vsel %vm2102, 1, 0
        %v2119 = vsel %vm2103, 1, 0
        %v2120 = vsel %vm2104, 1, 0
        %v2121 = vsel %vm2105, 1, 0
        %v2122 = vsel %vm2106, 1, 0
        %v2123 = vsel %vm2107, 1, 0
        %v2124 = vsel %vm2108, 1, 0
        %v2125 = vsel %vm2109, 1, 0
        %v2126 = vsel %vm2110, 1, 0
        %v2127 = vsel %vm2111, 1, 0
        %v2128 = vsel %vm2112, 1, 0
        %v2129 = vsel %vm2113, 1, 0
        %v2130 = vsel %vm2114, 1, 0
        %v2131 = vcvt.s32.f32 %v2115
        %v2132 = vcvt.s32.f32 %v2116
        %v2133 = vcvt.s32.f32 %v2117
        %v2134 = vcvt.s32.f32 %v2118
        %v2135 = vcvt.s32.f32 %v2119
        %v2136 = vcvt.s32.f32 %v2120
        %v2137 = vcvt.s32.f32 %v2121
        %v2138 = vcvt.s32.f32 %v2122
        %v2139 = vcvt.s32.f32 %v2123
        %v2140 = vcvt.s32.f32 %v2124
        %v2141 = vcvt.s32.f32 %v2125
        %v2142 = vcvt.s32.f32 %v2126
        %v2143 = vcvt.s32.f32 %v2127
        %v2144 = vcvt.s32.f32 %v2128
        %v2145 = vcvt.s32.f32 %v2129
        %v2146 = vcvt.s32.f32 %v2130
        loop: start=0, step=1, limit=2
        $region41: #{tpu_custom_call.1} parent=31 // loop_pre_header
          _
        $region42: #{tpu_custom_call.1} parent=31 // loop_header
          %s2148 = sphi 0, %s2152
          %p2149 = scmp.ge.s32.totalorder %s2148, 2
        $region43: #{tpu_custom_call.1} parent=31 // loop_header_branch
          %2151 = sbr.rel (%p2149) target = $region47
        $region44: #{tpu_custom_call.1} parent=31 // loop_body
          %s2153 = smul.u32 %s2148, 128
          %s2154 = scalar_lea.vmem [#allocation2], %s2153
          %v2155 = vld [vmem:[%s2154] sm:$0xff]
          %v2156 = vld [vmem:[%s2154 + $0x8] sm:$0xff]
          %v2157 = vld [vmem:[%s2154 + $0x10] sm:$0xff]
          %v2158 = vld [vmem:[%s2154 + $0x18] sm:$0xff]
          %v2159 = vld [vmem:[%s2154 + $0x20] sm:$0xff]
          %v2160 = vld [vmem:[%s2154 + $0x28] sm:$0xff]
          %v2161 = vld [vmem:[%s2154 + $0x30] sm:$0xff]
          %v2162 = vld [vmem:[%s2154 + $0x38] sm:$0xff]
          %v2163 = vld [vmem:[%s2154 + $0x40] sm:$0xff]
          %v2164 = vld [vmem:[%s2154 + $0x48] sm:$0xff]
          %v2165 = vld [vmem:[%s2154 + $0x50] sm:$0xff]
          %v2166 = vld [vmem:[%s2154 + $0x58] sm:$0xff]
          %v2167 = vld [vmem:[%s2154 + $0x60] sm:$0xff]
          %v2168 = vld [vmem:[%s2154 + $0x68] sm:$0xff]
          %v2169 = vld [vmem:[%s2154 + $0x70] sm:$0xff]
          %v2170 = vld [vmem:[%s2154 + $0x78] sm:$0xff]
          loop: start=0, step=1, limit=2
          $region48: #{tpu_custom_call.1} parent=44 // loop_pre_header
            _
          $region49: #{tpu_custom_call.1} parent=44 // loop_header
            %s2172 = sphi 0, %s2176
            %p2173 = scmp.ge.s32.totalorder %s2172, 2
            %v2177 = vphi 0.0, %v2352
            %v2178 = vphi 0.0, %v2353
            %v2179 = vphi 0.0, %v2354
            %v2180 = vphi 0.0, %v2355
            %v2181 = vphi 0.0, %v2356
            %v2182 = vphi 0.0, %v2357
            %v2183 = vphi 0.0, %v2358
            %v2184 = vphi 0.0, %v2359
            %v2185 = vphi 0.0, %v2360
            %v2186 = vphi 0.0, %v2361
            %v2187 = vphi 0.0, %v2362
            %v2188 = vphi 0.0, %v2363
            %v2189 = vphi 0.0, %v2364
            %v2190 = vphi 0.0, %v2365
            %v2191 = vphi 0.0, %v2366
            %v2192 = vphi 0.0, %v2367
          $region50: #{tpu_custom_call.1} parent=44 // loop_header_branch
            %2175 = sbr.rel (%p2173) target = $region54
          $region51: #{tpu_custom_call.1} parent=44 // loop_body
            %s2193 = smul.u32 %s2172, 128
            %s2194 = sshra.s32 %s2193, 7
            %s2195 = sand.u32 %s2193, 127
            %s2196 = sshra.s32 %s2153, 3
            %s2197 = sand.u32 %s2153, 7
            %s2198 = smul.u32 %s2196, 2
            %s2199 = sadd.s32 %s2194, %s2198
            %s2200 = smul.addr %s2199, 8
            %s2201 = scalar_lea.vmem [#allocation3], %s2200
            %v2202 = vld [vmem:[%s2201] sm:$0xff]
            %v2203 = vld [vmem:[%s2201 + $0x10] sm:$0xff]
            %v2204 = vld [vmem:[%s2201 + $0x20] sm:$0xff]
            %v2205 = vld [vmem:[%s2201 + $0x30] sm:$0xff]
            %v2206 = vld [vmem:[%s2201 + $0x40] sm:$0xff]
            %v2207 = vld [vmem:[%s2201 + $0x50] sm:$0xff]
            %v2208 = vld [vmem:[%s2201 + $0x60] sm:$0xff]
            %v2209 = vld [vmem:[%s2201 + $0x70] sm:$0xff]
            %v2210 = vld [vmem:[%s2201 + $0x80] sm:$0xff]
            %v2211 = vld [vmem:[%s2201 + $0x90] sm:$0xff]
            %v2212 = vld [vmem:[%s2201 + $0xa0] sm:$0xff]
            %v2213 = vld [vmem:[%s2201 + $0xb0] sm:$0xff]
            %v2214 = vld [vmem:[%s2201 + $0xc0] sm:$0xff]
            %v2215 = vld [vmem:[%s2201 + $0xd0] sm:$0xff]
            %v2216 = vld [vmem:[%s2201 + $0xe0] sm:$0xff]
            %v2217 = vld [vmem:[%s2201 + $0xf0] sm:$0xff]
            %p2218 = scmp.eq.s32.totalorder %s2172, %s2148
            %s2219 = scalar_select %p2218, 1, 0
            %s2220 = scvt.s32.f32 %s2219
            %v2221 = vstv %s2220
            %v2222 = vmul.f32 %v2221, %v2131
            %v2223 = vmul.f32 %v2221, %v2132
            %v2224 = vmul.f32 %v2221, %v2133
            %v2225 = vmul.f32 %v2221, %v2134
            %v2226 = vmul.f32 %v2221, %v2135
            %v2227 = vmul.f32 %v2221, %v2136
            %v2228 = vmul.f32 %v2221, %v2137
            %v2229 = vmul.f32 %v2221, %v2138
            %v2230 = vmul.f32 %v2221, %v2139
            %v2231 = vmul.f32 %v2221, %v2140
            %v2232 = vmul.f32 %v2221, %v2141
            %v2233 = vmul.f32 %v2221, %v2142
            %v2234 = vmul.f32 %v2221, %v2143
            %v2235 = vmul.f32 %v2221, %v2144
            %v2236 = vmul.f32 %v2221, %v2145
            %v2237 = vmul.f32 %v2221, %v2146
            %v2238 = vsub.f32 1.0, %v2222
            %v2239 = vsub.f32 1.0, %v2223
            %v2240 = vsub.f32 1.0, %v2224
            %v2241 = vsub.f32 1.0, %v2225
            %v2242 = vsub.f32 1.0, %v2226
            %v2243 = vsub.f32 1.0, %v2227
            %v2244 = vsub.f32 1.0, %v2228
            %v2245 = vsub.f32 1.0, %v2229
            %v2246 = vsub.f32 1.0, %v2230
            %v2247 = vsub.f32 1.0, %v2231
            %v2248 = vsub.f32 1.0, %v2232
            %v2249 = vsub.f32 1.0, %v2233
            %v2250 = vsub.f32 1.0, %v2234
            %v2251 = vsub.f32 1.0, %v2235
            %v2252 = vsub.f32 1.0, %v2236
            %v2253 = vsub.f32 1.0, %v2237
            %v2254 = vmul.f32 %v2202, %v2238
            %v2255 = vmul.f32 %v2203, %v2239
            %v2256 = vmul.f32 %v2204, %v2240
            %v2257 = vmul.f32 %v2205, %v2241
            %v2258 = vmul.f32 %v2206, %v2242
            %v2259 = vmul.f32 %v2207, %v2243
            %v2260 = vmul.f32 %v2208, %v2244
            %v2261 = vmul.f32 %v2209, %v2245
            %v2262 = vmul.f32 %v2210, %v2246
            %v2263 = vmul.f32 %v2211, %v2247
            %v2264 = vmul.f32 %v2212, %v2248
            %v2265 = vmul.f32 %v2213, %v2249
            %v2266 = vmul.f32 %v2214, %v2250
            %v2267 = vmul.f32 %v2215, %v2251
            %v2268 = vmul.f32 %v2216, %v2252
            %v2269 = vmul.f32 %v2217, %v2253
            %v2270 = vpack.c.bf16 %v2255, %v2254
            %v2271 = vpack.c.bf16 %v2257, %v2256
            %v2272 = vpack.c.bf16 %v2259, %v2258
            %v2273 = vpack.c.bf16 %v2261, %v2260
            %v2274 = vpack.c.bf16 %v2263, %v2262
            %v2275 = vpack.c.bf16 %v2265, %v2264
            %v2276 = vpack.c.bf16 %v2267, %v2266
            %v2277 = vpack.c.bf16 %v2269, %v2268
            %s2278 = scalar_lea.vmem [#allocation2], %s2193
            %v2279 = vld [vmem:[%s2278] sm:$0xff]
            %v2280 = vld [vmem:[%s2278 + $0x8] sm:$0xff]
            %v2281 = vld [vmem:[%s2278 + $0x10] sm:$0xff]
            %v2282 = vld [vmem:[%s2278 + $0x18] sm:$0xff]
            %v2283 = vld [vmem:[%s2278 + $0x20] sm:$0xff]
            %v2284 = vld [vmem:[%s2278 + $0x28] sm:$0xff]
            %v2285 = vld [vmem:[%s2278 + $0x30] sm:$0xff]
            %v2286 = vld [vmem:[%s2278 + $0x38] sm:$0xff]
            %v2287 = vld [vmem:[%s2278 + $0x40] sm:$0xff]
            %v2288 = vld [vmem:[%s2278 + $0x48] sm:$0xff]
            %v2289 = vld [vmem:[%s2278 + $0x50] sm:$0xff]
            %v2290 = vld [vmem:[%s2278 + $0x58] sm:$0xff]
            %v2291 = vld [vmem:[%s2278 + $0x60] sm:$0xff]
            %v2292 = vld [vmem:[%s2278 + $0x68] sm:$0xff]
            %v2293 = vld [vmem:[%s2278 + $0x70] sm:$0xff]
            %v2294 = vld [vmem:[%s2278 + $0x78] sm:$0xff]
            %v2295 = vpack.c.bf16 %v2280, %v2279
            %v2296 = vpack.c.bf16 %v2282, %v2281
            %v2297 = vpack.c.bf16 %v2284, %v2283
            %v2298 = vpack.c.bf16 %v2286, %v2285
            %v2299 = vpack.c.bf16 %v2288, %v2287
            %v2300 = vpack.c.bf16 %v2290, %v2289
            %v2301 = vpack.c.bf16 %v2292, %v2291
            %v2302 = vpack.c.bf16 %v2294, %v2293
            %2303 = vmatpush.bf16.msra.mxu0 %v2302
            %2304 = vmatpush.bf16.msra.mxu0 %v2301
            %2305 = vmatpush.bf16.msra.mxu0 %v2300
            %2306 = vmatpush.bf16.msra.mxu0 %v2299
            %2307 = vmatpush.bf16.msra.mxu0 %v2298
            %2308 = vmatpush.bf16.msra.mxu0 %v2297
            %2309 = vmatpush.bf16.msra.mxu0 %v2296
            %2310 = vmatpush.bf16.msra.mxu0 %v2295
            %2311 = vmatmul.bf16.gmra.mxu0 %v2270
            %v2312 = vpop.f32.mrf.mxu0
            %v2313 = vadd.f32 0.0, %v2312
            %v2314 = vpop.f32.mrf.mxu0
            %v2315 = vadd.f32 0.0, %v2314
            %2316 = vmatmul.bf16.gmra.mxu0 %v2271
            %v2317 = vpop.f32.mrf.mxu0
            %v2318 = vadd.f32 0.0, %v2317
            %v2319 = vpop.f32.mrf.mxu0
            %v2320 = vadd.f32 0.0, %v2319
            %2321 = vmatmul.bf16.gmra.mxu0 %v2272
            %v2322 = vpop.f32.mrf.mxu0
            %v2323 = vadd.f32 0.0, %v2322
            %v2324 = vpop.f32.mrf.mxu0
            %v2325 = vadd.f32 0.0, %v2324
            %2326 = vmatmul.bf16.gmra.mxu0 %v2273
            %v2327 = vpop.f32.mrf.mxu0
            %v2328 = vadd.f32 0.0, %v2327
            %v2329 = vpop.f32.mrf.mxu0
            %v2330 = vadd.f32 0.0, %v2329
            %2331 = vmatmul.bf16.gmra.mxu0 %v2274
            %v2332 = vpop.f32.mrf.mxu0
            %v2333 = vadd.f32 0.0, %v2332
            %v2334 = vpop.f32.mrf.mxu0
            %v2335 = vadd.f32 0.0, %v2334
            %2336 = vmatmul.bf16.gmra.mxu0 %v2275
            %v2337 = vpop.f32.mrf.mxu0
            %v2338 = vadd.f32 0.0, %v2337
            %v2339 = vpop.f32.mrf.mxu0
            %v2340 = vadd.f32 0.0, %v2339
            %2341 = vmatmul.bf16.gmra.mxu0 %v2276
            %v2342 = vpop.f32.mrf.mxu0
            %v2343 = vadd.f32 0.0, %v2342
            %v2344 = vpop.f32.mrf.mxu0
            %v2345 = vadd.f32 0.0, %v2344
            %2346 = vmatmul.bf16.gmra.mxu0 %v2277
            %v2347 = vpop.f32.mrf.mxu0
            %v2348 = vadd.f32 0.0, %v2347
            %v2349 = vpop.f32.mrf.mxu0
            %v2350 = vadd.f32 0.0, %v2349
            %2351 = vdwg.mxu0
            %v2352 = vadd.f32 %v2177, %v2313
            %v2353 = vadd.f32 %v2178, %v2315
            %v2354 = vadd.f32 %v2179, %v2318
            %v2355 = vadd.f32 %v2180, %v2320
            %v2356 = vadd.f32 %v2181, %v2323
            %v2357 = vadd.f32 %v2182, %v2325
            %v2358 = vadd.f32 %v2183, %v2328
            %v2359 = vadd.f32 %v2184, %v2330
            %v2360 = vadd.f32 %v2185, %v2333
            %v2361 = vadd.f32 %v2186, %v2335
            %v2362 = vadd.f32 %v2187, %v2338
            %v2363 = vadd.f32 %v2188, %v2340
            %v2364 = vadd.f32 %v2189, %v2343
            %v2365 = vadd.f32 %v2190, %v2345
            %v2366 = vadd.f32 %v2191, %v2348
            %v2367 = vadd.f32 %v2192, %v2350
          $region52: #{tpu_custom_call.1} parent=44 // loop_footer
            %s2176 = sadd.s32 1, %s2172
          $region53: #{tpu_custom_call.1} parent=44 // loop_footer_branch
            %2171 = sbr.rel target = $region49
          $region54: #{tpu_custom_call.1} parent=44 // loop_exit
            _
          %v2368 = vadd.f32 %v2155, %v2177
          %v2369 = vadd.f32 %v2156, %v2178
          %v2370 = vadd.f32 %v2157, %v2179
          %v2371 = vadd.f32 %v2158, %v2180
          %v2372 = vadd.f32 %v2159, %v2181
          %v2373 = vadd.f32 %v2160, %v2182
          %v2374 = vadd.f32 %v2161, %v2183
          %v2375 = vadd.f32 %v2162, %v2184
          %v2376 = vadd.f32 %v2163, %v2185
          %v2377 = vadd.f32 %v2164, %v2186
          %v2378 = vadd.f32 %v2165, %v2187
          %v2379 = vadd.f32 %v2166, %v2188
          %v2380 = vadd.f32 %v2167, %v2189
          %v2381 = vadd.f32 %v2168, %v2190
          %v2382 = vadd.f32 %v2169, %v2191
          %v2383 = vadd.f32 %v2170, %v2192
          %s2384 = sshra.s32 %s2153, 7
          %s2385 = sand.u32 %s2153, 127
          %s2386 = sshra.s32 %s2153, 3
          %s2387 = sand.u32 %s2153, 7
          %s2388 = smul.u32 %s2386, 2
          %s2389 = sadd.s32 %s2384, %s2388
          %s2390 = smul.addr %s2389, 8
          %s2391 = scalar_lea.vmem [#allocation3], %s2390
          %v2392 = vld [vmem:[%s2391] sm:$0xff]
          %v2393 = vld [vmem:[%s2391 + $0x10] sm:$0xff]
          %v2394 = vld [vmem:[%s2391 + $0x20] sm:$0xff]
          %v2395 = vld [vmem:[%s2391 + $0x30] sm:$0xff]
          %v2396 = vld [vmem:[%s2391 + $0x40] sm:$0xff]
          %v2397 = vld [vmem:[%s2391 + $0x50] sm:$0xff]
          %v2398 = vld [vmem:[%s2391 + $0x60] sm:$0xff]
          %v2399 = vld [vmem:[%s2391 + $0x70] sm:$0xff]
          %v2400 = vld [vmem:[%s2391 + $0x80] sm:$0xff]
          %v2401 = vld [vmem:[%s2391 + $0x90] sm:$0xff]
          %v2402 = vld [vmem:[%s2391 + $0xa0] sm:$0xff]
          %v2403 = vld [vmem:[%s2391 + $0xb0] sm:$0xff]
          %v2404 = vld [vmem:[%s2391 + $0xc0] sm:$0xff]
          %v2405 = vld [vmem:[%s2391 + $0xd0] sm:$0xff]
          %v2406 = vld [vmem:[%s2391 + $0xe0] sm:$0xff]
          %v2407 = vld [vmem:[%s2391 + $0xf0] sm:$0xff]
          %v2408 = vmul.f32 %v2392, %v2131
          %v2409 = vmul.f32 %v2393, %v2132
          %v2410 = vmul.f32 %v2394, %v2133
          %v2411 = vmul.f32 %v2395, %v2134
          %v2412 = vmul.f32 %v2396, %v2135
          %v2413 = vmul.f32 %v2397, %v2136
          %v2414 = vmul.f32 %v2398, %v2137
          %v2415 = vmul.f32 %v2399, %v2138
          %v2416 = vmul.f32 %v2400, %v2139
          %v2417 = vmul.f32 %v2401, %v2140
          %v2418 = vmul.f32 %v2402, %v2141
          %v2419 = vmul.f32 %v2403, %v2142
          %v2420 = vmul.f32 %v2404, %v2143
          %v2421 = vmul.f32 %v2405, %v2144
          %v2422 = vmul.f32 %v2406, %v2145
          %v2423 = vmul.f32 %v2407, %v2146
          %v2424 = vpack.c.bf16 %v2409, %v2408
          %v2425 = vpack.c.bf16 %v2411, %v2410
          %v2426 = vpack.c.bf16 %v2413, %v2412
          %v2427 = vpack.c.bf16 %v2415, %v2414
          %v2428 = vpack.c.bf16 %v2417, %v2416
          %v2429 = vpack.c.bf16 %v2419, %v2418
          %v2430 = vpack.c.bf16 %v2421, %v2420
          %v2431 = vpack.c.bf16 %v2423, %v2422
          %v2432 = vpack.c.bf16 %v2369, %v2368
          %v2433 = vpack.c.bf16 %v2371, %v2370
          %v2434 = vpack.c.bf16 %v2373, %v2372
          %v2435 = vpack.c.bf16 %v2375, %v2374
          %v2436 = vpack.c.bf16 %v2377, %v2376
          %v2437 = vpack.c.bf16 %v2379, %v2378
          %v2438 = vpack.c.bf16 %v2381, %v2380
          %v2439 = vpack.c.bf16 %v2383, %v2382
          %2440 = vmatpush.bf16.msra.mxu0 %v2439
          %2441 = vmatpush.bf16.msra.mxu0 %v2438
          %2442 = vmatpush.bf16.msra.mxu0 %v2437
          %2443 = vmatpush.bf16.msra.mxu0 %v2436
          %2444 = vmatpush.bf16.msra.mxu0 %v2435
          %2445 = vmatpush.bf16.msra.mxu0 %v2434
          %2446 = vmatpush.bf16.msra.mxu0 %v2433
          %2447 = vmatpush.bf16.msra.mxu0 %v2432
          %2448 = vmatmul.bf16.gmra.mxu0 %v2424
          %v2449 = vpop.f32.mrf.mxu0
          %v2450 = vadd.f32 0.0, %v2449
          %v2451 = vpop.f32.mrf.mxu0
          %v2452 = vadd.f32 0.0, %v2451
          %2453 = vmatmul.bf16.gmra.mxu0 %v2425
          %v2454 = vpop.f32.mrf.mxu0
          %v2455 = vadd.f32 0.0, %v2454
          %v2456 = vpop.f32.mrf.mxu0
          %v2457 = vadd.f32 0.0, %v2456
          %2458 = vmatmul.bf16.gmra.mxu0 %v2426
          %v2459 = vpop.f32.mrf.mxu0
          %v2460 = vadd.f32 0.0, %v2459
          %v2461 = vpop.f32.mrf.mxu0
          %v2462 = vadd.f32 0.0, %v2461
          %2463 = vmatmul.bf16.gmra.mxu0 %v2427
          %v2464 = vpop.f32.mrf.mxu0
          %v2465 = vadd.f32 0.0, %v2464
          %v2466 = vpop.f32.mrf.mxu0
          %v2467 = vadd.f32 0.0, %v2466
          %2468 = vmatmul.bf16.gmra.mxu0 %v2428
          %v2469 = vpop.f32.mrf.mxu0
          %v2470 = vadd.f32 0.0, %v2469
          %v2471 = vpop.f32.mrf.mxu0
          %v2472 = vadd.f32 0.0, %v2471
          %2473 = vmatmul.bf16.gmra.mxu0 %v2429
          %v2474 = vpop.f32.mrf.mxu0
          %v2475 = vadd.f32 0.0, %v2474
          %v2476 = vpop.f32.mrf.mxu0
          %v2477 = vadd.f32 0.0, %v2476
          %2478 = vmatmul.bf16.gmra.mxu0 %v2430
          %v2479 = vpop.f32.mrf.mxu0
          %v2480 = vadd.f32 0.0, %v2479
          %v2481 = vpop.f32.mrf.mxu0
          %v2482 = vadd.f32 0.0, %v2481
          %2483 = vmatmul.bf16.gmra.mxu0 %v2431
          %v2484 = vpop.f32.mrf.mxu0
          %v2485 = vadd.f32 0.0, %v2484
          %v2486 = vpop.f32.mrf.mxu0
          %v2487 = vadd.f32 0.0, %v2486
          %2488 = vdwg.mxu0
          %v2489 = vadd.f32 %v2368, %v2450
          %v2490 = vadd.f32 %v2369, %v2452
          %v2491 = vadd.f32 %v2370, %v2455
          %v2492 = vadd.f32 %v2371, %v2457
          %v2493 = vadd.f32 %v2372, %v2460
          %v2494 = vadd.f32 %v2373, %v2462
          %v2495 = vadd.f32 %v2374, %v2465
          %v2496 = vadd.f32 %v2375, %v2467
          %v2497 = vadd.f32 %v2376, %v2470
          %v2498 = vadd.f32 %v2377, %v2472
          %v2499 = vadd.f32 %v2378, %v2475
          %v2500 = vadd.f32 %v2379, %v2477
          %v2501 = vadd.f32 %v2380, %v2480
          %v2502 = vadd.f32 %v2381, %v2482
          %v2503 = vadd.f32 %v2382, %v2485
          %v2504 = vadd.f32 %v2383, %v2487
          %2505 = vmatpush.bf16.msra.mxu0 %v2431
          %2506 = vmatpush.bf16.msra.mxu0 %v2430
          %2507 = vmatpush.bf16.msra.mxu0 %v2429
          %2508 = vmatpush.bf16.msra.mxu0 %v2428
          %2509 = vmatpush.bf16.msra.mxu0 %v2427
          %2510 = vmatpush.bf16.msra.mxu0 %v2426
          %2511 = vmatpush.bf16.msra.mxu0 %v2425
          %2512 = vmatpush.bf16.msra.mxu0 %v2424
          %2513 = vmatmul.bf16.gmra.mxu0 %v2424
          %v2514 = vpop.f32.mrf.mxu0
          %v2515 = vadd.f32 0.0, %v2514
          %v2516 = vpop.f32.mrf.mxu0
          %v2517 = vadd.f32 0.0, %v2516
          %2518 = vmatmul.bf16.gmra.mxu0 %v2425
          %v2519 = vpop.f32.mrf.mxu0
          %v2520 = vadd.f32 0.0, %v2519
          %v2521 = vpop.f32.mrf.mxu0
          %v2522 = vadd.f32 0.0, %v2521
          %2523 = vmatmul.bf16.gmra.mxu0 %v2426
          %v2524 = vpop.f32.mrf.mxu0
          %v2525 = vadd.f32 0.0, %v2524
          %v2526 = vpop.f32.mrf.mxu0
          %v2527 = vadd.f32 0.0, %v2526
          %2528 = vmatmul.bf16.gmra.mxu0 %v2427
          %v2529 = vpop.f32.mrf.mxu0
          %v2530 = vadd.f32 0.0, %v2529
          %v2531 = vpop.f32.mrf.mxu0
          %v2532 = vadd.f32 0.0, %v2531
          %2533 = vmatmul.bf16.gmra.mxu0 %v2428
          %v2534 = vpop.f32.mrf.mxu0
          %v2535 = vadd.f32 0.0, %v2534
          %v2536 = vpop.f32.mrf.mxu0
          %v2537 = vadd.f32 0.0, %v2536
          %2538 = vmatmul.bf16.gmra.mxu0 %v2429
          %v2539 = vpop.f32.mrf.mxu0
          %v2540 = vadd.f32 0.0, %v2539
          %v2541 = vpop.f32.mrf.mxu0
          %v2542 = vadd.f32 0.0, %v2541
          %2543 = vmatmul.bf16.gmra.mxu0 %v2430
          %v2544 = vpop.f32.mrf.mxu0
          %v2545 = vadd.f32 0.0, %v2544
          %v2546 = vpop.f32.mrf.mxu0
          %v2547 = vadd.f32 0.0, %v2546
          %2548 = vmatmul.bf16.gmra.mxu0 %v2431
          %v2549 = vpop.f32.mrf.mxu0
          %v2550 = vadd.f32 0.0, %v2549
          %v2551 = vpop.f32.mrf.mxu0
          %v2552 = vadd.f32 0.0, %v2551
          %2553 = vdwg.mxu0
          %v2554 = vpack.c.bf16 %v2517, %v2515
          %v2555 = vpack.c.bf16 %v2522, %v2520
          %v2556 = vpack.c.bf16 %v2527, %v2525
          %v2557 = vpack.c.bf16 %v2532, %v2530
          %v2558 = vpack.c.bf16 %v2537, %v2535
          %v2559 = vpack.c.bf16 %v2542, %v2540
          %v2560 = vpack.c.bf16 %v2547, %v2545
          %v2561 = vpack.c.bf16 %v2552, %v2550
          %v2562 = vpack.c.bf16 %v2490, %v2489
          %v2563 = vpack.c.bf16 %v2492, %v2491
          %v2564 = vpack.c.bf16 %v2494, %v2493
          %v2565 = vpack.c.bf16 %v2496, %v2495
          %v2566 = vpack.c.bf16 %v2498, %v2497
          %v2567 = vpack.c.bf16 %v2500, %v2499
          %v2568 = vpack.c.bf16 %v2502, %v2501
          %v2569 = vpack.c.bf16 %v2504, %v2503
          %2570 = vmatpush.bf16.msra.mxu0 %v2569
          %2571 = vmatpush.bf16.msra.mxu0 %v2568
          %2572 = vmatpush.bf16.msra.mxu0 %v2567
          %2573 = vmatpush.bf16.msra.mxu0 %v2566
          %2574 = vmatpush.bf16.msra.mxu0 %v2565
          %2575 = vmatpush.bf16.msra.mxu0 %v2564
          %2576 = vmatpush.bf16.msra.mxu0 %v2563
          %2577 = vmatpush.bf16.msra.mxu0 %v2562
          %2578 = vmatmul.bf16.gmra.mxu0 %v2554
          %v2579 = vpop.f32.mrf.mxu0
          %v2580 = vadd.f32 0.0, %v2579
          %v2581 = vpop.f32.mrf.mxu0
          %v2582 = vadd.f32 0.0, %v2581
          %2583 = vmatmul.bf16.gmra.mxu0 %v2555
          %v2584 = vpop.f32.mrf.mxu0
          %v2585 = vadd.f32 0.0, %v2584
          %v2586 = vpop.f32.mrf.mxu0
          %v2587 = vadd.f32 0.0, %v2586
          %2588 = vmatmul.bf16.gmra.mxu0 %v2556
          %v2589 = vpop.f32.mrf.mxu0
          %v2590 = vadd.f32 0.0, %v2589
          %v2591 = vpop.f32.mrf.mxu0
          %v2592 = vadd.f32 0.0, %v2591
          %2593 = vmatmul.bf16.gmra.mxu0 %v2557
          %v2594 = vpop.f32.mrf.mxu0
          %v2595 = vadd.f32 0.0, %v2594
          %v2596 = vpop.f32.mrf.mxu0
          %v2597 = vadd.f32 0.0, %v2596
          %2598 = vmatmul.bf16.gmra.mxu0 %v2558
          %v2599 = vpop.f32.mrf.mxu0
          %v2600 = vadd.f32 0.0, %v2599
          %v2601 = vpop.f32.mrf.mxu0
          %v2602 = vadd.f32 0.0, %v2601
          %2603 = vmatmul.bf16.gmra.mxu0 %v2559
          %v2604 = vpop.f32.mrf.mxu0
          %v2605 = vadd.f32 0.0, %v2604
          %v2606 = vpop.f32.mrf.mxu0
          %v2607 = vadd.f32 0.0, %v2606
          %2608 = vmatmul.bf16.gmra.mxu0 %v2560
          %v2609 = vpop.f32.mrf.mxu0
          %v2610 = vadd.f32 0.0, %v2609
          %v2611 = vpop.f32.mrf.mxu0
          %v2612 = vadd.f32 0.0, %v2611
          %2613 = vmatmul.bf16.gmra.mxu0 %v2561
          %v2614 = vpop.f32.mrf.mxu0
          %v2615 = vadd.f32 0.0, %v2614
          %v2616 = vpop.f32.mrf.mxu0
          %v2617 = vadd.f32 0.0, %v2616
          %2618 = vdwg.mxu0
          %v2619 = vadd.f32 %v2489, %v2580
          %v2620 = vadd.f32 %v2490, %v2582
          %v2621 = vadd.f32 %v2491, %v2585
          %v2622 = vadd.f32 %v2492, %v2587
          %v2623 = vadd.f32 %v2493, %v2590
          %v2624 = vadd.f32 %v2494, %v2592
          %v2625 = vadd.f32 %v2495, %v2595
          %v2626 = vadd.f32 %v2496, %v2597
          %v2627 = vadd.f32 %v2497, %v2600
          %v2628 = vadd.f32 %v2498, %v2602
          %v2629 = vadd.f32 %v2499, %v2605
          %v2630 = vadd.f32 %v2500, %v2607
          %v2631 = vadd.f32 %v2501, %v2610
          %v2632 = vadd.f32 %v2502, %v2612
          %v2633 = vadd.f32 %v2503, %v2615
          %v2634 = vadd.f32 %v2504, %v2617
          %2635 = vmatpush.bf16.msra.mxu0 %v2561
          %2636 = vmatpush.bf16.msra.mxu0 %v2560
          %2637 = vmatpush.bf16.msra.mxu0 %v2559
          %2638 = vmatpush.bf16.msra.mxu0 %v2558
          %2639 = vmatpush.bf16.msra.mxu0 %v2557
          %2640 = vmatpush.bf16.msra.mxu0 %v2556
          %2641 = vmatpush.bf16.msra.mxu0 %v2555
          %2642 = vmatpush.bf16.msra.mxu0 %v2554
          %2643 = vmatmul.bf16.gmra.mxu0 %v2554
          %v2644 = vpop.f32.mrf.mxu0
          %v2645 = vadd.f32 0.0, %v2644
          %v2646 = vpop.f32.mrf.mxu0
          %v2647 = vadd.f32 0.0, %v2646
          %2648 = vmatmul.bf16.gmra.mxu0 %v2555
          %v2649 = vpop.f32.mrf.mxu0
          %v2650 = vadd.f32 0.0, %v2649
          %v2651 = vpop.f32.mrf.mxu0
          %v2652 = vadd.f32 0.0, %v2651
          %2653 = vmatmul.bf16.gmra.mxu0 %v2556
          %v2654 = vpop.f32.mrf.mxu0
          %v2655 = vadd.f32 0.0, %v2654
          %v2656 = vpop.f32.mrf.mxu0
          %v2657 = vadd.f32 0.0, %v2656
          %2658 = vmatmul.bf16.gmra.mxu0 %v2557
          %v2659 = vpop.f32.mrf.mxu0
          %v2660 = vadd.f32 0.0, %v2659
          %v2661 = vpop.f32.mrf.mxu0
          %v2662 = vadd.f32 0.0, %v2661
          %2663 = vmatmul.bf16.gmra.mxu0 %v2558
          %v2664 = vpop.f32.mrf.mxu0
          %v2665 = vadd.f32 0.0, %v2664
          %v2666 = vpop.f32.mrf.mxu0
          %v2667 = vadd.f32 0.0, %v2666
          %2668 = vmatmul.bf16.gmra.mxu0 %v2559
          %v2669 = vpop.f32.mrf.mxu0
          %v2670 = vadd.f32 0.0, %v2669
          %v2671 = vpop.f32.mrf.mxu0
          %v2672 = vadd.f32 0.0, %v2671
          %2673 = vmatmul.bf16.gmra.mxu0 %v2560
          %v2674 = vpop.f32.mrf.mxu0
          %v2675 = vadd.f32 0.0, %v2674
          %v2676 = vpop.f32.mrf.mxu0
          %v2677 = vadd.f32 0.0, %v2676
          %2678 = vmatmul.bf16.gmra.mxu0 %v2561
          %v2679 = vpop.f32.mrf.mxu0
          %v2680 = vadd.f32 0.0, %v2679
          %v2681 = vpop.f32.mrf.mxu0
          %v2682 = vadd.f32 0.0, %v2681
          %2683 = vdwg.mxu0
          %v2684 = vpack.c.bf16 %v2647, %v2645
          %v2685 = vpack.c.bf16 %v2652, %v2650
          %v2686 = vpack.c.bf16 %v2657, %v2655
          %v2687 = vpack.c.bf16 %v2662, %v2660
          %v2688 = vpack.c.bf16 %v2667, %v2665
          %v2689 = vpack.c.bf16 %v2672, %v2670
          %v2690 = vpack.c.bf16 %v2677, %v2675
          %v2691 = vpack.c.bf16 %v2682, %v2680
          %v2692 = vpack.c.bf16 %v2620, %v2619
          %v2693 = vpack.c.bf16 %v2622, %v2621
          %v2694 = vpack.c.bf16 %v2624, %v2623
          %v2695 = vpack.c.bf16 %v2626, %v2625
          %v2696 = vpack.c.bf16 %v2628, %v2627
          %v2697 = vpack.c.bf16 %v2630, %v2629
          %v2698 = vpack.c.bf16 %v2632, %v2631
          %v2699 = vpack.c.bf16 %v2634, %v2633
          %2700 = vmatpush.bf16.msra.mxu0 %v2699
          %2701 = vmatpush.bf16.msra.mxu0 %v2698
          %2702 = vmatpush.bf16.msra.mxu0 %v2697
          %2703 = vmatpush.bf16.msra.mxu0 %v2696
          %2704 = vmatpush.bf16.msra.mxu0 %v2695
          %2705 = vmatpush.bf16.msra.mxu0 %v2694
          %2706 = vmatpush.bf16.msra.mxu0 %v2693
          %2707 = vmatpush.bf16.msra.mxu0 %v2692
          %2708 = vmatmul.bf16.gmra.mxu0 %v2684
          %v2709 = vpop.f32.mrf.mxu0
          %v2710 = vadd.f32 0.0, %v2709
          %v2711 = vpop.f32.mrf.mxu0
          %v2712 = vadd.f32 0.0, %v2711
          %2713 = vmatmul.bf16.gmra.mxu0 %v2685
          %v2714 = vpop.f32.mrf.mxu0
          %v2715 = vadd.f32 0.0, %v2714
          %v2716 = vpop.f32.mrf.mxu0
          %v2717 = vadd.f32 0.0, %v2716
          %2718 = vmatmul.bf16.gmra.mxu0 %v2686
          %v2719 = vpop.f32.mrf.mxu0
          %v2720 = vadd.f32 0.0, %v2719
          %v2721 = vpop.f32.mrf.mxu0
          %v2722 = vadd.f32 0.0, %v2721
          %2723 = vmatmul.bf16.gmra.mxu0 %v2687
          %v2724 = vpop.f32.mrf.mxu0
          %v2725 = vadd.f32 0.0, %v2724
          %v2726 = vpop.f32.mrf.mxu0
          %v2727 = vadd.f32 0.0, %v2726
          %2728 = vmatmul.bf16.gmra.mxu0 %v2688
          %v2729 = vpop.f32.mrf.mxu0
          %v2730 = vadd.f32 0.0, %v2729
          %v2731 = vpop.f32.mrf.mxu0
          %v2732 = vadd.f32 0.0, %v2731
          %2733 = vmatmul.bf16.gmra.mxu0 %v2689
          %v2734 = vpop.f32.mrf.mxu0
          %v2735 = vadd.f32 0.0, %v2734
          %v2736 = vpop.f32.mrf.mxu0
          %v2737 = vadd.f32 0.0, %v2736
          %2738 = vmatmul.bf16.gmra.mxu0 %v2690
          %v2739 = vpop.f32.mrf.mxu0
          %v2740 = vadd.f32 0.0, %v2739
          %v2741 = vpop.f32.mrf.mxu0
          %v2742 = vadd.f32 0.0, %v2741
          %2743 = vmatmul.bf16.gmra.mxu0 %v2691
          %v2744 = vpop.f32.mrf.mxu0
          %v2745 = vadd.f32 0.0, %v2744
          %v2746 = vpop.f32.mrf.mxu0
          %v2747 = vadd.f32 0.0, %v2746
          %2748 = vdwg.mxu0
          %v2749 = vadd.f32 %v2619, %v2710
          %v2750 = vadd.f32 %v2620, %v2712
          %v2751 = vadd.f32 %v2621, %v2715
          %v2752 = vadd.f32 %v2622, %v2717
          %v2753 = vadd.f32 %v2623, %v2720
          %v2754 = vadd.f32 %v2624, %v2722
          %v2755 = vadd.f32 %v2625, %v2725
          %v2756 = vadd.f32 %v2626, %v2727
          %v2757 = vadd.f32 %v2627, %v2730
          %v2758 = vadd.f32 %v2628, %v2732
          %v2759 = vadd.f32 %v2629, %v2735
          %v2760 = vadd.f32 %v2630, %v2737
          %v2761 = vadd.f32 %v2631, %v2740
          %v2762 = vadd.f32 %v2632, %v2742
          %v2763 = vadd.f32 %v2633, %v2745
          %v2764 = vadd.f32 %v2634, %v2747
          %2765 = vmatpush.bf16.msra.mxu0 %v2691
          %2766 = vmatpush.bf16.msra.mxu0 %v2690
          %2767 = vmatpush.bf16.msra.mxu0 %v2689
          %2768 = vmatpush.bf16.msra.mxu0 %v2688
          %2769 = vmatpush.bf16.msra.mxu0 %v2687
          %2770 = vmatpush.bf16.msra.mxu0 %v2686
          %2771 = vmatpush.bf16.msra.mxu0 %v2685
          %2772 = vmatpush.bf16.msra.mxu0 %v2684
          %2773 = vmatmul.bf16.gmra.mxu0 %v2684
          %v2774 = vpop.f32.mrf.mxu0
          %v2775 = vadd.f32 0.0, %v2774
          %v2776 = vpop.f32.mrf.mxu0
          %v2777 = vadd.f32 0.0, %v2776
          %2778 = vmatmul.bf16.gmra.mxu0 %v2685
          %v2779 = vpop.f32.mrf.mxu0
          %v2780 = vadd.f32 0.0, %v2779
          %v2781 = vpop.f32.mrf.mxu0
          %v2782 = vadd.f32 0.0, %v2781
          %2783 = vmatmul.bf16.gmra.mxu0 %v2686
          %v2784 = vpop.f32.mrf.mxu0
          %v2785 = vadd.f32 0.0, %v2784
          %v2786 = vpop.f32.mrf.mxu0
          %v2787 = vadd.f32 0.0, %v2786
          %2788 = vmatmul.bf16.gmra.mxu0 %v2687
          %v2789 = vpop.f32.mrf.mxu0
          %v2790 = vadd.f32 0.0, %v2789
          %v2791 = vpop.f32.mrf.mxu0
          %v2792 = vadd.f32 0.0, %v2791
          %2793 = vmatmul.bf16.gmra.mxu0 %v2688
          %v2794 = vpop.f32.mrf.mxu0
          %v2795 = vadd.f32 0.0, %v2794
          %v2796 = vpop.f32.mrf.mxu0
          %v2797 = vadd.f32 0.0, %v2796
          %2798 = vmatmul.bf16.gmra.mxu0 %v2689
          %v2799 = vpop.f32.mrf.mxu0
          %v2800 = vadd.f32 0.0, %v2799
          %v2801 = vpop.f32.mrf.mxu0
          %v2802 = vadd.f32 0.0, %v2801
          %2803 = vmatmul.bf16.gmra.mxu0 %v2690
          %v2804 = vpop.f32.mrf.mxu0
          %v2805 = vadd.f32 0.0, %v2804
          %v2806 = vpop.f32.mrf.mxu0
          %v2807 = vadd.f32 0.0, %v2806
          %2808 = vmatmul.bf16.gmra.mxu0 %v2691
          %v2809 = vpop.f32.mrf.mxu0
          %v2810 = vadd.f32 0.0, %v2809
          %v2811 = vpop.f32.mrf.mxu0
          %v2812 = vadd.f32 0.0, %v2811
          %2813 = vdwg.mxu0
          %v2814 = vpack.c.bf16 %v2777, %v2775
          %v2815 = vpack.c.bf16 %v2782, %v2780
          %v2816 = vpack.c.bf16 %v2787, %v2785
          %v2817 = vpack.c.bf16 %v2792, %v2790
          %v2818 = vpack.c.bf16 %v2797, %v2795
          %v2819 = vpack.c.bf16 %v2802, %v2800
          %v2820 = vpack.c.bf16 %v2807, %v2805
          %v2821 = vpack.c.bf16 %v2812, %v2810
          %v2822 = vpack.c.bf16 %v2750, %v2749
          %v2823 = vpack.c.bf16 %v2752, %v2751
          %v2824 = vpack.c.bf16 %v2754, %v2753
          %v2825 = vpack.c.bf16 %v2756, %v2755
          %v2826 = vpack.c.bf16 %v2758, %v2757
          %v2827 = vpack.c.bf16 %v2760, %v2759
          %v2828 = vpack.c.bf16 %v2762, %v2761
          %v2829 = vpack.c.bf16 %v2764, %v2763
          %2830 = vmatpush.bf16.msra.mxu0 %v2829
          %2831 = vmatpush.bf16.msra.mxu0 %v2828
          %2832 = vmatpush.bf16.msra.mxu0 %v2827
          %2833 = vmatpush.bf16.msra.mxu0 %v2826
          %2834 = vmatpush.bf16.msra.mxu0 %v2825
          %2835 = vmatpush.bf16.msra.mxu0 %v2824
          %2836 = vmatpush.bf16.msra.mxu0 %v2823
          %2837 = vmatpush.bf16.msra.mxu0 %v2822
          %2838 = vmatmul.bf16.gmra.mxu0 %v2814
          %v2839 = vpop.f32.mrf.mxu0
          %v2840 = vadd.f32 0.0, %v2839
          %v2841 = vpop.f32.mrf.mxu0
          %v2842 = vadd.f32 0.0, %v2841
          %2843 = vmatmul.bf16.gmra.mxu0 %v2815
          %v2844 = vpop.f32.mrf.mxu0
          %v2845 = vadd.f32 0.0, %v2844
          %v2846 = vpop.f32.mrf.mxu0
          %v2847 = vadd.f32 0.0, %v2846
          %2848 = vmatmul.bf16.gmra.mxu0 %v2816
          %v2849 = vpop.f32.mrf.mxu0
          %v2850 = vadd.f32 0.0, %v2849
          %v2851 = vpop.f32.mrf.mxu0
          %v2852 = vadd.f32 0.0, %v2851
          %2853 = vmatmul.bf16.gmra.mxu0 %v2817
          %v2854 = vpop.f32.mrf.mxu0
          %v2855 = vadd.f32 0.0, %v2854
          %v2856 = vpop.f32.mrf.mxu0
          %v2857 = vadd.f32 0.0, %v2856
          %2858 = vmatmul.bf16.gmra.mxu0 %v2818
          %v2859 = vpop.f32.mrf.mxu0
          %v2860 = vadd.f32 0.0, %v2859
          %v2861 = vpop.f32.mrf.mxu0
          %v2862 = vadd.f32 0.0, %v2861
          %2863 = vmatmul.bf16.gmra.mxu0 %v2819
          %v2864 = vpop.f32.mrf.mxu0
          %v2865 = vadd.f32 0.0, %v2864
          %v2866 = vpop.f32.mrf.mxu0
          %v2867 = vadd.f32 0.0, %v2866
          %2868 = vmatmul.bf16.gmra.mxu0 %v2820
          %v2869 = vpop.f32.mrf.mxu0
          %v2870 = vadd.f32 0.0, %v2869
          %v2871 = vpop.f32.mrf.mxu0
          %v2872 = vadd.f32 0.0, %v2871
          %2873 = vmatmul.bf16.gmra.mxu0 %v2821
          %v2874 = vpop.f32.mrf.mxu0
          %v2875 = vadd.f32 0.0, %v2874
          %v2876 = vpop.f32.mrf.mxu0
          %v2877 = vadd.f32 0.0, %v2876
          %2878 = vdwg.mxu0
          %v2879 = vadd.f32 %v2749, %v2840
          %v2880 = vadd.f32 %v2750, %v2842
          %v2881 = vadd.f32 %v2751, %v2845
          %v2882 = vadd.f32 %v2752, %v2847
          %v2883 = vadd.f32 %v2753, %v2850
          %v2884 = vadd.f32 %v2754, %v2852
          %v2885 = vadd.f32 %v2755, %v2855
          %v2886 = vadd.f32 %v2756, %v2857
          %v2887 = vadd.f32 %v2757, %v2860
          %v2888 = vadd.f32 %v2758, %v2862
          %v2889 = vadd.f32 %v2759, %v2865
          %v2890 = vadd.f32 %v2760, %v2867
          %v2891 = vadd.f32 %v2761, %v2870
          %v2892 = vadd.f32 %v2762, %v2872
          %v2893 = vadd.f32 %v2763, %v2875
          %v2894 = vadd.f32 %v2764, %v2877
          %2895 = vmatpush.bf16.msra.mxu0 %v2821
          %2896 = vmatpush.bf16.msra.mxu0 %v2820
          %2897 = vmatpush.bf16.msra.mxu0 %v2819
          %2898 = vmatpush.bf16.msra.mxu0 %v2818
          %2899 = vmatpush.bf16.msra.mxu0 %v2817
          %2900 = vmatpush.bf16.msra.mxu0 %v2816
          %2901 = vmatpush.bf16.msra.mxu0 %v2815
          %2902 = vmatpush.bf16.msra.mxu0 %v2814
          %2903 = vmatmul.bf16.gmra.mxu0 %v2814
          %v2904 = vpop.f32.mrf.mxu0
          %v2905 = vadd.f32 0.0, %v2904
          %v2906 = vpop.f32.mrf.mxu0
          %v2907 = vadd.f32 0.0, %v2906
          %2908 = vmatmul.bf16.gmra.mxu0 %v2815
          %v2909 = vpop.f32.mrf.mxu0
          %v2910 = vadd.f32 0.0, %v2909
          %v2911 = vpop.f32.mrf.mxu0
          %v2912 = vadd.f32 0.0, %v2911
          %2913 = vmatmul.bf16.gmra.mxu0 %v2816
          %v2914 = vpop.f32.mrf.mxu0
          %v2915 = vadd.f32 0.0, %v2914
          %v2916 = vpop.f32.mrf.mxu0
          %v2917 = vadd.f32 0.0, %v2916
          %2918 = vmatmul.bf16.gmra.mxu0 %v2817
          %v2919 = vpop.f32.mrf.mxu0
          %v2920 = vadd.f32 0.0, %v2919
          %v2921 = vpop.f32.mrf.mxu0
          %v2922 = vadd.f32 0.0, %v2921
          %2923 = vmatmul.bf16.gmra.mxu0 %v2818
          %v2924 = vpop.f32.mrf.mxu0
          %v2925 = vadd.f32 0.0, %v2924
          %v2926 = vpop.f32.mrf.mxu0
          %v2927 = vadd.f32 0.0, %v2926
          %2928 = vmatmul.bf16.gmra.mxu0 %v2819
          %v2929 = vpop.f32.mrf.mxu0
          %v2930 = vadd.f32 0.0, %v2929
          %v2931 = vpop.f32.mrf.mxu0
          %v2932 = vadd.f32 0.0, %v2931
          %2933 = vmatmul.bf16.gmra.mxu0 %v2820
          %v2934 = vpop.f32.mrf.mxu0
          %v2935 = vadd.f32 0.0, %v2934
          %v2936 = vpop.f32.mrf.mxu0
          %v2937 = vadd.f32 0.0, %v2936
          %2938 = vmatmul.bf16.gmra.mxu0 %v2821
          %v2939 = vpop.f32.mrf.mxu0
          %v2940 = vadd.f32 0.0, %v2939
          %v2941 = vpop.f32.mrf.mxu0
          %v2942 = vadd.f32 0.0, %v2941
          %2943 = vdwg.mxu0
          %v2944 = vpack.c.bf16 %v2907, %v2905
          %v2945 = vpack.c.bf16 %v2912, %v2910
          %v2946 = vpack.c.bf16 %v2917, %v2915
          %v2947 = vpack.c.bf16 %v2922, %v2920
          %v2948 = vpack.c.bf16 %v2927, %v2925
          %v2949 = vpack.c.bf16 %v2932, %v2930
          %v2950 = vpack.c.bf16 %v2937, %v2935
          %v2951 = vpack.c.bf16 %v2942, %v2940
          %v2952 = vpack.c.bf16 %v2880, %v2879
          %v2953 = vpack.c.bf16 %v2882, %v2881
          %v2954 = vpack.c.bf16 %v2884, %v2883
          %v2955 = vpack.c.bf16 %v2886, %v2885
          %v2956 = vpack.c.bf16 %v2888, %v2887
          %v2957 = vpack.c.bf16 %v2890, %v2889
          %v2958 = vpack.c.bf16 %v2892, %v2891
          %v2959 = vpack.c.bf16 %v2894, %v2893
          %2960 = vmatpush.bf16.msra.mxu0 %v2959
          %2961 = vmatpush.bf16.msra.mxu0 %v2958
          %2962 = vmatpush.bf16.msra.mxu0 %v2957
          %2963 = vmatpush.bf16.msra.mxu0 %v2956
          %2964 = vmatpush.bf16.msra.mxu0 %v2955
          %2965 = vmatpush.bf16.msra.mxu0 %v2954
          %2966 = vmatpush.bf16.msra.mxu0 %v2953
          %2967 = vmatpush.bf16.msra.mxu0 %v2952
          %2968 = vmatmul.bf16.gmra.mxu0 %v2944
          %v2969 = vpop.f32.mrf.mxu0
          %v2970 = vadd.f32 0.0, %v2969
          %v2971 = vpop.f32.mrf.mxu0
          %v2972 = vadd.f32 0.0, %v2971
          %2973 = vmatmul.bf16.gmra.mxu0 %v2945
          %v2974 = vpop.f32.mrf.mxu0
          %v2975 = vadd.f32 0.0, %v2974
          %v2976 = vpop.f32.mrf.mxu0
          %v2977 = vadd.f32 0.0, %v2976
          %2978 = vmatmul.bf16.gmra.mxu0 %v2946
          %v2979 = vpop.f32.mrf.mxu0
          %v2980 = vadd.f32 0.0, %v2979
          %v2981 = vpop.f32.mrf.mxu0
          %v2982 = vadd.f32 0.0, %v2981
          %2983 = vmatmul.bf16.gmra.mxu0 %v2947
          %v2984 = vpop.f32.mrf.mxu0
          %v2985 = vadd.f32 0.0, %v2984
          %v2986 = vpop.f32.mrf.mxu0
          %v2987 = vadd.f32 0.0, %v2986
          %2988 = vmatmul.bf16.gmra.mxu0 %v2948
          %v2989 = vpop.f32.mrf.mxu0
          %v2990 = vadd.f32 0.0, %v2989
          %v2991 = vpop.f32.mrf.mxu0
          %v2992 = vadd.f32 0.0, %v2991
          %2993 = vmatmul.bf16.gmra.mxu0 %v2949
          %v2994 = vpop.f32.mrf.mxu0
          %v2995 = vadd.f32 0.0, %v2994
          %v2996 = vpop.f32.mrf.mxu0
          %v2997 = vadd.f32 0.0, %v2996
          %2998 = vmatmul.bf16.gmra.mxu0 %v2950
          %v2999 = vpop.f32.mrf.mxu0
          %v3000 = vadd.f32 0.0, %v2999
          %v3001 = vpop.f32.mrf.mxu0
          %v3002 = vadd.f32 0.0, %v3001
          %3003 = vmatmul.bf16.gmra.mxu0 %v2951
          %v3004 = vpop.f32.mrf.mxu0
          %v3005 = vadd.f32 0.0, %v3004
          %v3006 = vpop.f32.mrf.mxu0
          %v3007 = vadd.f32 0.0, %v3006
          %3008 = vdwg.mxu0
          %v3009 = vadd.f32 %v2879, %v2970
          %v3010 = vadd.f32 %v2880, %v2972
          %v3011 = vadd.f32 %v2881, %v2975
          %v3012 = vadd.f32 %v2882, %v2977
          %v3013 = vadd.f32 %v2883, %v2980
          %v3014 = vadd.f32 %v2884, %v2982
          %v3015 = vadd.f32 %v2885, %v2985
          %v3016 = vadd.f32 %v2886, %v2987
          %v3017 = vadd.f32 %v2887, %v2990
          %v3018 = vadd.f32 %v2888, %v2992
          %v3019 = vadd.f32 %v2889, %v2995
          %v3020 = vadd.f32 %v2890, %v2997
          %v3021 = vadd.f32 %v2891, %v3000
          %v3022 = vadd.f32 %v2892, %v3002
          %v3023 = vadd.f32 %v2893, %v3005
          %v3024 = vadd.f32 %v2894, %v3007
          %3025 = vmatpush.bf16.msra.mxu0 %v2951
          %3026 = vmatpush.bf16.msra.mxu0 %v2950
          %3027 = vmatpush.bf16.msra.mxu0 %v2949
          %3028 = vmatpush.bf16.msra.mxu0 %v2948
          %3029 = vmatpush.bf16.msra.mxu0 %v2947
          %3030 = vmatpush.bf16.msra.mxu0 %v2946
          %3031 = vmatpush.bf16.msra.mxu0 %v2945
          %3032 = vmatpush.bf16.msra.mxu0 %v2944
          %3033 = vmatmul.bf16.gmra.mxu0 %v2944
          %v3034 = vpop.f32.mrf.mxu0
          %v3035 = vadd.f32 0.0, %v3034
          %v3036 = vpop.f32.mrf.mxu0
          %v3037 = vadd.f32 0.0, %v3036
          %3038 = vmatmul.bf16.gmra.mxu0 %v2945
          %v3039 = vpop.f32.mrf.mxu0
          %v3040 = vadd.f32 0.0, %v3039
          %v3041 = vpop.f32.mrf.mxu0
          %v3042 = vadd.f32 0.0, %v3041
          %3043 = vmatmul.bf16.gmra.mxu0 %v2946
          %v3044 = vpop.f32.mrf.mxu0
          %v3045 = vadd.f32 0.0, %v3044
          %v3046 = vpop.f32.mrf.mxu0
          %v3047 = vadd.f32 0.0, %v3046
          %3048 = vmatmul.bf16.gmra.mxu0 %v2947
          %v3049 = vpop.f32.mrf.mxu0
          %v3050 = vadd.f32 0.0, %v3049
          %v3051 = vpop.f32.mrf.mxu0
          %v3052 = vadd.f32 0.0, %v3051
          %3053 = vmatmul.bf16.gmra.mxu0 %v2948
          %v3054 = vpop.f32.mrf.mxu0
          %v3055 = vadd.f32 0.0, %v3054
          %v3056 = vpop.f32.mrf.mxu0
          %v3057 = vadd.f32 0.0, %v3056
          %3058 = vmatmul.bf16.gmra.mxu0 %v2949
          %v3059 = vpop.f32.mrf.mxu0
          %v3060 = vadd.f32 0.0, %v3059
          %v3061 = vpop.f32.mrf.mxu0
          %v3062 = vadd.f32 0.0, %v3061
          %3063 = vmatmul.bf16.gmra.mxu0 %v2950
          %v3064 = vpop.f32.mrf.mxu0
          %v3065 = vadd.f32 0.0, %v3064
          %v3066 = vpop.f32.mrf.mxu0
          %v3067 = vadd.f32 0.0, %v3066
          %3068 = vmatmul.bf16.gmra.mxu0 %v2951
          %v3069 = vpop.f32.mrf.mxu0
          %v3070 = vadd.f32 0.0, %v3069
          %v3071 = vpop.f32.mrf.mxu0
          %v3072 = vadd.f32 0.0, %v3071
          %3073 = vdwg.mxu0
          %v3074 = vpack.c.bf16 %v3037, %v3035
          %v3075 = vpack.c.bf16 %v3042, %v3040
          %v3076 = vpack.c.bf16 %v3047, %v3045
          %v3077 = vpack.c.bf16 %v3052, %v3050
          %v3078 = vpack.c.bf16 %v3057, %v3055
          %v3079 = vpack.c.bf16 %v3062, %v3060
          %v3080 = vpack.c.bf16 %v3067, %v3065
          %v3081 = vpack.c.bf16 %v3072, %v3070
          %v3082 = vpack.c.bf16 %v3010, %v3009
          %v3083 = vpack.c.bf16 %v3012, %v3011
          %v3084 = vpack.c.bf16 %v3014, %v3013
          %v3085 = vpack.c.bf16 %v3016, %v3015
          %v3086 = vpack.c.bf16 %v3018, %v3017
          %v3087 = vpack.c.bf16 %v3020, %v3019
          %v3088 = vpack.c.bf16 %v3022, %v3021
          %v3089 = vpack.c.bf16 %v3024, %v3023
          %3090 = vmatpush.bf16.msra.mxu0 %v3089
          %3091 = vmatpush.bf16.msra.mxu0 %v3088
          %3092 = vmatpush.bf16.msra.mxu0 %v3087
          %3093 = vmatpush.bf16.msra.mxu0 %v3086
          %3094 = vmatpush.bf16.msra.mxu0 %v3085
          %3095 = vmatpush.bf16.msra.mxu0 %v3084
          %3096 = vmatpush.bf16.msra.mxu0 %v3083
          %3097 = vmatpush.bf16.msra.mxu0 %v3082
          %3098 = vmatmul.bf16.gmra.mxu0 %v3074
          %v3099 = vpop.f32.mrf.mxu0
          %v3100 = vadd.f32 0.0, %v3099
          %v3101 = vpop.f32.mrf.mxu0
          %v3102 = vadd.f32 0.0, %v3101
          %3103 = vmatmul.bf16.gmra.mxu0 %v3075
          %v3104 = vpop.f32.mrf.mxu0
          %v3105 = vadd.f32 0.0, %v3104
          %v3106 = vpop.f32.mrf.mxu0
          %v3107 = vadd.f32 0.0, %v3106
          %3108 = vmatmul.bf16.gmra.mxu0 %v3076
          %v3109 = vpop.f32.mrf.mxu0
          %v3110 = vadd.f32 0.0, %v3109
          %v3111 = vpop.f32.mrf.mxu0
          %v3112 = vadd.f32 0.0, %v3111
          %3113 = vmatmul.bf16.gmra.mxu0 %v3077
          %v3114 = vpop.f32.mrf.mxu0
          %v3115 = vadd.f32 0.0, %v3114
          %v3116 = vpop.f32.mrf.mxu0
          %v3117 = vadd.f32 0.0, %v3116
          %3118 = vmatmul.bf16.gmra.mxu0 %v3078
          %v3119 = vpop.f32.mrf.mxu0
          %v3120 = vadd.f32 0.0, %v3119
          %v3121 = vpop.f32.mrf.mxu0
          %v3122 = vadd.f32 0.0, %v3121
          %3123 = vmatmul.bf16.gmra.mxu0 %v3079
          %v3124 = vpop.f32.mrf.mxu0
          %v3125 = vadd.f32 0.0, %v3124
          %v3126 = vpop.f32.mrf.mxu0
          %v3127 = vadd.f32 0.0, %v3126
          %3128 = vmatmul.bf16.gmra.mxu0 %v3080
          %v3129 = vpop.f32.mrf.mxu0
          %v3130 = vadd.f32 0.0, %v3129
          %v3131 = vpop.f32.mrf.mxu0
          %v3132 = vadd.f32 0.0, %v3131
          %3133 = vmatmul.bf16.gmra.mxu0 %v3081
          %v3134 = vpop.f32.mrf.mxu0
          %v3135 = vadd.f32 0.0, %v3134
          %v3136 = vpop.f32.mrf.mxu0
          %v3137 = vadd.f32 0.0, %v3136
          %3138 = vdwg.mxu0
          %v3139 = vadd.f32 %v3009, %v3100
          %v3140 = vadd.f32 %v3010, %v3102
          %v3141 = vadd.f32 %v3011, %v3105
          %v3142 = vadd.f32 %v3012, %v3107
          %v3143 = vadd.f32 %v3013, %v3110
          %v3144 = vadd.f32 %v3014, %v3112
          %v3145 = vadd.f32 %v3015, %v3115
          %v3146 = vadd.f32 %v3016, %v3117
          %v3147 = vadd.f32 %v3017, %v3120
          %v3148 = vadd.f32 %v3018, %v3122
          %v3149 = vadd.f32 %v3019, %v3125
          %v3150 = vadd.f32 %v3020, %v3127
          %v3151 = vadd.f32 %v3021, %v3130
          %v3152 = vadd.f32 %v3022, %v3132
          %v3153 = vadd.f32 %v3023, %v3135
          %v3154 = vadd.f32 %v3024, %v3137
          %3155 = vmatpush.bf16.msra.mxu0 %v3081
          %3156 = vmatpush.bf16.msra.mxu0 %v3080
          %3157 = vmatpush.bf16.msra.mxu0 %v3079
          %3158 = vmatpush.bf16.msra.mxu0 %v3078
          %3159 = vmatpush.bf16.msra.mxu0 %v3077
          %3160 = vmatpush.bf16.msra.mxu0 %v3076
          %3161 = vmatpush.bf16.msra.mxu0 %v3075
          %3162 = vmatpush.bf16.msra.mxu0 %v3074
          %3163 = vmatmul.bf16.gmra.mxu0 %v3074
          %v3164 = vpop.f32.mrf.mxu0
          %v3165 = vadd.f32 0.0, %v3164
          %v3166 = vpop.f32.mrf.mxu0
          %v3167 = vadd.f32 0.0, %v3166
          %3168 = vmatmul.bf16.gmra.mxu0 %v3075
          %v3169 = vpop.f32.mrf.mxu0
          %v3170 = vadd.f32 0.0, %v3169
          %v3171 = vpop.f32.mrf.mxu0
          %v3172 = vadd.f32 0.0, %v3171
          %3173 = vmatmul.bf16.gmra.mxu0 %v3076
          %v3174 = vpop.f32.mrf.mxu0
          %v3175 = vadd.f32 0.0, %v3174
          %v3176 = vpop.f32.mrf.mxu0
          %v3177 = vadd.f32 0.0, %v3176
          %3178 = vmatmul.bf16.gmra.mxu0 %v3077
          %v3179 = vpop.f32.mrf.mxu0
          %v3180 = vadd.f32 0.0, %v3179
          %v3181 = vpop.f32.mrf.mxu0
          %v3182 = vadd.f32 0.0, %v3181
          %3183 = vmatmul.bf16.gmra.mxu0 %v3078
          %v3184 = vpop.f32.mrf.mxu0
          %v3185 = vadd.f32 0.0, %v3184
          %v3186 = vpop.f32.mrf.mxu0
          %v3187 = vadd.f32 0.0, %v3186
          %3188 = vmatmul.bf16.gmra.mxu0 %v3079
          %v3189 = vpop.f32.mrf.mxu0
          %v3190 = vadd.f32 0.0, %v3189
          %v3191 = vpop.f32.mrf.mxu0
          %v3192 = vadd.f32 0.0, %v3191
          %3193 = vmatmul.bf16.gmra.mxu0 %v3080
          %v3194 = vpop.f32.mrf.mxu0
          %v3195 = vadd.f32 0.0, %v3194
          %v3196 = vpop.f32.mrf.mxu0
          %v3197 = vadd.f32 0.0, %v3196
          %3198 = vmatmul.bf16.gmra.mxu0 %v3081
          %v3199 = vpop.f32.mrf.mxu0
          %v3200 = vadd.f32 0.0, %v3199
          %v3201 = vpop.f32.mrf.mxu0
          %v3202 = vadd.f32 0.0, %v3201
          %3203 = vdwg.mxu0
          %v3204 = vpack.c.bf16 %v3167, %v3165
          %v3205 = vpack.c.bf16 %v3172, %v3170
          %v3206 = vpack.c.bf16 %v3177, %v3175
          %v3207 = vpack.c.bf16 %v3182, %v3180
          %v3208 = vpack.c.bf16 %v3187, %v3185
          %v3209 = vpack.c.bf16 %v3192, %v3190
          %v3210 = vpack.c.bf16 %v3197, %v3195
          %v3211 = vpack.c.bf16 %v3202, %v3200
          %v3212 = vpack.c.bf16 %v3140, %v3139
          %v3213 = vpack.c.bf16 %v3142, %v3141
          %v3214 = vpack.c.bf16 %v3144, %v3143
          %v3215 = vpack.c.bf16 %v3146, %v3145
          %v3216 = vpack.c.bf16 %v3148, %v3147
          %v3217 = vpack.c.bf16 %v3150, %v3149
          %v3218 = vpack.c.bf16 %v3152, %v3151
          %v3219 = vpack.c.bf16 %v3154, %v3153
          %3220 = vmatpush.bf16.msra.mxu0 %v3219
          %3221 = vmatpush.bf16.msra.mxu0 %v3218
          %3222 = vmatpush.bf16.msra.mxu0 %v3217
          %3223 = vmatpush.bf16.msra.mxu0 %v3216
          %3224 = vmatpush.bf16.msra.mxu0 %v3215
          %3225 = vmatpush.bf16.msra.mxu0 %v3214
          %3226 = vmatpush.bf16.msra.mxu0 %v3213
          %3227 = vmatpush.bf16.msra.mxu0 %v3212
          %3228 = vmatmul.bf16.gmra.mxu0 %v3204
          %v3229 = vpop.f32.mrf.mxu0
          %v3230 = vadd.f32 0.0, %v3229
          %v3231 = vpop.f32.mrf.mxu0
          %v3232 = vadd.f32 0.0, %v3231
          %3233 = vmatmul.bf16.gmra.mxu0 %v3205
          %v3234 = vpop.f32.mrf.mxu0
          %v3235 = vadd.f32 0.0, %v3234
          %v3236 = vpop.f32.mrf.mxu0
          %v3237 = vadd.f32 0.0, %v3236
          %3238 = vmatmul.bf16.gmra.mxu0 %v3206
          %v3239 = vpop.f32.mrf.mxu0
          %v3240 = vadd.f32 0.0, %v3239
          %v3241 = vpop.f32.mrf.mxu0
          %v3242 = vadd.f32 0.0, %v3241
          %3243 = vmatmul.bf16.gmra.mxu0 %v3207
          %v3244 = vpop.f32.mrf.mxu0
          %v3245 = vadd.f32 0.0, %v3244
          %v3246 = vpop.f32.mrf.mxu0
          %v3247 = vadd.f32 0.0, %v3246
          %3248 = vmatmul.bf16.gmra.mxu0 %v3208
          %v3249 = vpop.f32.mrf.mxu0
          %v3250 = vadd.f32 0.0, %v3249
          %v3251 = vpop.f32.mrf.mxu0
          %v3252 = vadd.f32 0.0, %v3251
          %3253 = vmatmul.bf16.gmra.mxu0 %v3209
          %v3254 = vpop.f32.mrf.mxu0
          %v3255 = vadd.f32 0.0, %v3254
          %v3256 = vpop.f32.mrf.mxu0
          %v3257 = vadd.f32 0.0, %v3256
          %3258 = vmatmul.bf16.gmra.mxu0 %v3210
          %v3259 = vpop.f32.mrf.mxu0
          %v3260 = vadd.f32 0.0, %v3259
          %v3261 = vpop.f32.mrf.mxu0
          %v3262 = vadd.f32 0.0, %v3261
          %3263 = vmatmul.bf16.gmra.mxu0 %v3211
          %v3264 = vpop.f32.mrf.mxu0
          %v3265 = vadd.f32 0.0, %v3264
          %v3266 = vpop.f32.mrf.mxu0
          %v3267 = vadd.f32 0.0, %v3266
          %3268 = vdwg.mxu0
          %v3269 = vadd.f32 %v3139, %v3230
          %v3270 = vadd.f32 %v3140, %v3232
          %v3271 = vadd.f32 %v3141, %v3235
          %v3272 = vadd.f32 %v3142, %v3237
          %v3273 = vadd.f32 %v3143, %v3240
          %v3274 = vadd.f32 %v3144, %v3242
          %v3275 = vadd.f32 %v3145, %v3245
          %v3276 = vadd.f32 %v3146, %v3247
          %v3277 = vadd.f32 %v3147, %v3250
          %v3278 = vadd.f32 %v3148, %v3252
          %v3279 = vadd.f32 %v3149, %v3255
          %v3280 = vadd.f32 %v3150, %v3257
          %v3281 = vadd.f32 %v3151, %v3260
          %v3282 = vadd.f32 %v3152, %v3262
          %v3283 = vadd.f32 %v3153, %v3265
          %v3284 = vadd.f32 %v3154, %v3267
          %3285 = vst [vmem:[%s2154] sm:$0xff] %v3269
          %3286 = vst [vmem:[%s2154 + $0x8] sm:$0xff] %v3270
          %3287 = vst [vmem:[%s2154 + $0x10] sm:$0xff] %v3271
          %3288 = vst [vmem:[%s2154 + $0x18] sm:$0xff] %v3272
          %3289 = vst [vmem:[%s2154 + $0x20] sm:$0xff] %v3273
          %3290 = vst [vmem:[%s2154 + $0x28] sm:$0xff] %v3274
          %3291 = vst [vmem:[%s2154 + $0x30] sm:$0xff] %v3275
          %3292 = vst [vmem:[%s2154 + $0x38] sm:$0xff] %v3276
          %3293 = vst [vmem:[%s2154 + $0x40] sm:$0xff] %v3277
          %3294 = vst [vmem:[%s2154 + $0x48] sm:$0xff] %v3278
          %3295 = vst [vmem:[%s2154 + $0x50] sm:$0xff] %v3279
          %3296 = vst [vmem:[%s2154 + $0x58] sm:$0xff] %v3280
          %3297 = vst [vmem:[%s2154 + $0x60] sm:$0xff] %v3281
          %3298 = vst [vmem:[%s2154 + $0x68] sm:$0xff] %v3282
          %3299 = vst [vmem:[%s2154 + $0x70] sm:$0xff] %v3283
          %3300 = vst [vmem:[%s2154 + $0x78] sm:$0xff] %v3284
        $region45: #{tpu_custom_call.1} parent=31 // loop_footer
          %s2152 = sadd.s32 1, %s2148
        $region46: #{tpu_custom_call.1} parent=31 // loop_footer_branch
          %2147 = sbr.rel target = $region42
        $region47: #{tpu_custom_call.1} parent=31 // loop_exit
          _
        %v3301 = vld [vmem:[#allocation2] sm:$0xff]
        %v3302 = vld [vmem:[#allocation2 + $0x8] sm:$0xff]
        %v3303 = vld [vmem:[#allocation2 + $0x10] sm:$0xff]
        %v3304 = vld [vmem:[#allocation2 + $0x18] sm:$0xff]
        %v3305 = vld [vmem:[#allocation2 + $0x20] sm:$0xff]
        %v3306 = vld [vmem:[#allocation2 + $0x28] sm:$0xff]
        %v3307 = vld [vmem:[#allocation2 + $0x30] sm:$0xff]
        %v3308 = vld [vmem:[#allocation2 + $0x38] sm:$0xff]
        %v3309 = vld [vmem:[#allocation2 + $0x40] sm:$0xff]
        %v3310 = vld [vmem:[#allocation2 + $0x48] sm:$0xff]
        %v3311 = vld [vmem:[#allocation2 + $0x50] sm:$0xff]
        %v3312 = vld [vmem:[#allocation2 + $0x58] sm:$0xff]
        %v3313 = vld [vmem:[#allocation2 + $0x60] sm:$0xff]
        %v3314 = vld [vmem:[#allocation2 + $0x68] sm:$0xff]
        %v3315 = vld [vmem:[#allocation2 + $0x70] sm:$0xff]
        %v3316 = vld [vmem:[#allocation2 + $0x78] sm:$0xff]
        %v3317 = vld [vmem:[#allocation2 + $0x80] sm:$0xff]
        %v3318 = vld [vmem:[#allocation2 + $0x88] sm:$0xff]
        %v3319 = vld [vmem:[#allocation2 + $0x90] sm:$0xff]
        %v3320 = vld [vmem:[#allocation2 + $0x98] sm:$0xff]
        %v3321 = vld [vmem:[#allocation2 + $0xa0] sm:$0xff]
        %v3322 = vld [vmem:[#allocation2 + $0xa8] sm:$0xff]
        %v3323 = vld [vmem:[#allocation2 + $0xb0] sm:$0xff]
        %v3324 = vld [vmem:[#allocation2 + $0xb8] sm:$0xff]
        %v3325 = vld [vmem:[#allocation2 + $0xc0] sm:$0xff]
        %v3326 = vld [vmem:[#allocation2 + $0xc8] sm:$0xff]
        %v3327 = vld [vmem:[#allocation2 + $0xd0] sm:$0xff]
        %v3328 = vld [vmem:[#allocation2 + $0xd8] sm:$0xff]
        %v3329 = vld [vmem:[#allocation2 + $0xe0] sm:$0xff]
        %v3330 = vld [vmem:[#allocation2 + $0xe8] sm:$0xff]
        %v3331 = vld [vmem:[#allocation2 + $0xf0] sm:$0xff]
        %v3332 = vld [vmem:[#allocation2 + $0xf8] sm:$0xff]
        %3333 = vst [vmem:[%s195] sm:$0xff] %v3301
        %3334 = vst [vmem:[%s195 + $0x8] sm:$0xff] %v3302
        %3335 = vst [vmem:[%s195 + $0x10] sm:$0xff] %v3303
        %3336 = vst [vmem:[%s195 + $0x18] sm:$0xff] %v3304
        %3337 = vst [vmem:[%s195 + $0x20] sm:$0xff] %v3305
        %3338 = vst [vmem:[%s195 + $0x28] sm:$0xff] %v3306
        %3339 = vst [vmem:[%s195 + $0x30] sm:$0xff] %v3307
        %3340 = vst [vmem:[%s195 + $0x38] sm:$0xff] %v3308
        %3341 = vst [vmem:[%s195 + $0x40] sm:$0xff] %v3309
        %3342 = vst [vmem:[%s195 + $0x48] sm:$0xff] %v3310
        %3343 = vst [vmem:[%s195 + $0x50] sm:$0xff] %v3311
        %3344 = vst [vmem:[%s195 + $0x58] sm:$0xff] %v3312
        %3345 = vst [vmem:[%s195 + $0x60] sm:$0xff] %v3313
        %3346 = vst [vmem:[%s195 + $0x68] sm:$0xff] %v3314
        %3347 = vst [vmem:[%s195 + $0x70] sm:$0xff] %v3315
        %3348 = vst [vmem:[%s195 + $0x78] sm:$0xff] %v3316
        %3349 = vst [vmem:[%s195 + $0x80] sm:$0xff] %v3317
        %3350 = vst [vmem:[%s195 + $0x88] sm:$0xff] %v3318
        %3351 = vst [vmem:[%s195 + $0x90] sm:$0xff] %v3319
        %3352 = vst [vmem:[%s195 + $0x98] sm:$0xff] %v3320
        %3353 = vst [vmem:[%s195 + $0xa0] sm:$0xff] %v3321
        %3354 = vst [vmem:[%s195 + $0xa8] sm:$0xff] %v3322
        %3355 = vst [vmem:[%s195 + $0xb0] sm:$0xff] %v3323
        %3356 = vst [vmem:[%s195 + $0xb8] sm:$0xff] %v3324
        %3357 = vst [vmem:[%s195 + $0xc0] sm:$0xff] %v3325
        %3358 = vst [vmem:[%s195 + $0xc8] sm:$0xff] %v3326
        %3359 = vst [vmem:[%s195 + $0xd0] sm:$0xff] %v3327
        %3360 = vst [vmem:[%s195 + $0xd8] sm:$0xff] %v3328
        %3361 = vst [vmem:[%s195 + $0xe0] sm:$0xff] %v3329
        %3362 = vst [vmem:[%s195 + $0xe8] sm:$0xff] %v3330
        %3363 = vst [vmem:[%s195 + $0xf0] sm:$0xff] %v3331
        %3364 = vst [vmem:[%s195 + $0xf8] sm:$0xff] %v3332
        %s3365 = sand.u32 %s95, 1
        %s3366 = scalar_lea.sflag [#allocation6], %s3365
        %s3367 = sand.u32 %s95, 1
        %s3368 = smul.addr %s3367, 256
        %s3369 = scalar_lea.vmem [#allocation9], %s3368
        // Predicated region
        $region55: #{tpu_custom_call.1} parent=31 // pred_check
          %p3370 = pneg %p105
        $region56: #{tpu_custom_call.1} parent=31 // pred_check_branch
          %3372 = sbr.rel (%p3370) target = $region58
        $region57: #{tpu_custom_call.1} parent=31 // pred_region
          %3374 = vsyncadd %s3366, 0
          %s3375 = smul.addr %s19, 32
          %s3376 = smul.addr %s3375, 8
          %s3377 = scalar_lea.hbm %s3, %s3376
          %s3378 = sshll.u32 %s3369, 4
          %s3379 = int_to_ptr.vmem [resolvable:$true] %s3378
          %s3380 = sshll.u32 %s3377, 4
          %s3381 = int_to_ptr.hbm [resolvable:$true] %s3380
          %3386 = dma.vmem_to_hbm [thread:$0]  %s3379, 4096, %s3381, %s3366, 128, 128, 8
        $region58: #{tpu_custom_call.1} parent=31 // pred_fallthru
          _
      $region32: #{tpu_custom_call.1} parent=5 // pred_fallthru
        _
      %p3387 = scmp.le.s32.totalorder 2, %s14
      // Predicated region
      $region59: #{tpu_custom_call.1} parent=5 // pred_check
        %p3388 = pneg %p3387
      $region60: #{tpu_custom_call.1} parent=5 // pred_check_branch
        %3390 = sbr.rel (%p3388) target = $region62
      $region61: #{tpu_custom_call.1} parent=5 // pred_region
        %s3391 = ssub.s32 %s14, 2
        // Predicated region
        $region63: #{tpu_custom_call.1} parent=61 // pred_check
          %p3392 = pneg %p111
        $region64: #{tpu_custom_call.1} parent=61 // pred_check_branch
          %3394 = sbr.rel (%p3392) target = $region66
        $region65: #{tpu_custom_call.1} parent=61 // pred_region
          %s3395 = sand.u32 %s96, 1
          %s3396 = scalar_lea.sflag [#allocation6], %s3395
          %s3397 = sand.u32 %s96, 1
          %s3398 = smul.addr %s3397, 256
          %s3399 = scalar_lea.vmem [#allocation9], %s3398
          %3401 = dma.done %s3396, 4096
        $region66: #{tpu_custom_call.1} parent=61 // pred_fallthru
          _
      $region62: #{tpu_custom_call.1} parent=5 // pred_fallthru
        _
    $region6: #{tpu_custom_call.1} parent=1 // loop_footer
      %s18 = sadd.s32 1, %s14
    $region7: #{tpu_custom_call.1} parent=1 // loop_footer_branch
      %13 = sbr.rel target = $region3
    $region8: #{tpu_custom_call.1} parent=1 // loop_exit
      _
    %3402 = vsyncpa [#allocation5], 1
    %s3403 = scalar_lea.sflag [#allocation5], 1
    %3404 = vsyncpa %s3403, 1
    %3405 = vsyncpa [#allocation8], 1
    %3406 = vsyncpa [#allocation6], 1
    %s3407 = scalar_lea.sflag [#allocation6], 1
    %3408 = vsyncpa %s3407, 1

</llo_original>
